<compile_context>
chip_gen: v7x
topology: tpu7x:2x2x1
jax: 0.10.0
libtpu: 0.0.40
codegen_flags: <defaults>
</compile_context>

<pallas_src>
import functools

import numpy as np

import jax
import jax.numpy as jnp
from jax import lax
from jax.experimental import pallas as pl
from jax.experimental.pallas import tpu as pltpu


def _gelu_exact(x):
    # PyTorch nn.GELU() default: exact erf-based GELU.
    return 0.5 * x * (1.0 + lax.erf(x * 0.7071067811865476))


def _tap_masks(H, W, K):
    """(K*K, H*W) float32 0/1 validity masks for each depthwise-conv tap (host-side constants)."""
    pad = K // 2
    hh, ww = np.meshgrid(np.arange(H), np.arange(W), indexing="ij")
    rows = []
    for kh in range(K):
        for kw in range(K):
            dh, dw = kh - pad, kw - pad
            valid = ((hh + dh >= 0) & (hh + dh < H) &
                     (ww + dw >= 0) & (ww + dw < W))
            rows.append(valid.reshape(-1))
    return jnp.asarray(np.stack(rows, axis=0).astype(np.float32))


def block_kernel(x_ref, dww_ref, mask_ref, dwb_ref, g_ref, be_ref,
                 w1t_ref, b1_ref, w2t_ref, b2_ref, o_ref, *, eps, H, W, K):
    # x_ref   : (1, C, HW)   one batch element, channels-first, flattened spatial on lanes
    # dww_ref : (C, K*K)     depthwise weights, one lane column per tap
    # mask_ref: (K*K, HW)    precomputed 0/1 boundary masks per tap
    # dwb_ref/g_ref/be_ref/b2_ref: (C, 1)    b1_ref: (Ch, 1)
    # w1t_ref : (Ch, C)      w2t_ref: (C, Ch)
    # o_ref   : (1, C, HW)
    C = x_ref.shape[1]
    HW = x_ref.shape[2]
    pad = K // 2

    x = x_ref[0]  # (C, HW), lane-dense f32

    # ---- depthwise KxK conv: one lane rotation (XLU) + masked FMA (VPU) per tap ----
    acc = jnp.zeros((C, HW), jnp.float32)
    tap = 0
    for kh in range(K):
        for kw in range(K):
            s = (kh - pad) * W + (kw - pad)          # flattened spatial shift of this tap
            wvec = dww_ref[:, tap:tap + 1]           # (C, 1) per-channel weight
            if s == 0:
                acc = acc + x * wvec                 # center tap: no shift, no mask
            else:
                shifted = pltpu.roll(x, shift=(-s) % HW, axis=1)   # XLU lane rotate
                m = mask_ref[tap:tap + 1, :]         # (1, HW) 0/1 boundary mask
                acc = acc + shifted * m * wvec
            tap += 1
    acc = acc + dwb_ref[...]                         # (C,1) bias broadcast along lanes

    # ---- LayerNorm over channels (sublane axis), single pass: var = E[x^2] - mean^2 ----
    inv_c = 1.0 / C
    mean = jnp.sum(acc, axis=0, keepdims=True) * inv_c            # (1, HW)
    mean_sq = jnp.sum(acc * acc, axis=0, keepdims=True) * inv_c   # (1, HW)
    var = jnp.maximum(mean_sq - mean * mean, 0.0)
    xn = (acc - mean) * lax.rsqrt(var + eps)
    xn = xn * g_ref[...] + be_ref[...]                            # per-channel affine

    # ---- pointwise convs as channels-first matmuls (MXU); N = lane-dense H*W axis ----
    h1 = jnp.dot(w1t_ref[...], xn, preferred_element_type=jnp.float32) + b1_ref[...]
    h1 = _gelu_exact(h1)                                          # (Ch, HW)
    h2 = jnp.dot(w2t_ref[...], h1, preferred_element_type=jnp.float32) + b2_ref[...]

    o_ref[0] = h2.astype(o_ref.dtype)                             # lane-dense store


def convnext_block(x_nchw, params, *, kernel_size=7, eps=1e-6):
    """x_nchw: (B, C, H, W) float32 (PyTorch layout). Returns (B, C, H, W)."""
    dww, dwb, gamma, beta, w1, b1, w2, b2 = params
    B, C, H, W = x_nchw.shape
    K = kernel_size
    HW = H * W
    Ch = w1.shape[1]

    # NCHW with flattened spatial IS the kernel's native layout: reshapes below are free
    # (contiguous views), so no transpose / pad HBM passes around the kernel.
    x2 = x_nchw.reshape(B, C, HW)

    dww2 = dww.reshape(C, K * K)          # (C, K, K) -> one lane column per tap
    mask = _tap_masks(H, W, K)            # (K*K, HW) constants
    dwbc = dwb.reshape(C, 1)
    gc = gamma.reshape(C, 1)
    bc = beta.reshape(C, 1)
    w1t = jnp.transpose(w1)               # (Ch, C)   tiny weight transpose (host side)
    b1c = b1.reshape(Ch, 1)
    w2t = jnp.transpose(w2)               # (C, Ch)
    b2c = b2.reshape(C, 1)

    kern = functools.partial(block_kernel, eps=eps, H=H, W=W, K=K)

    out2 = pl.pallas_call(
        kern,
        out_shape=jax.ShapeDtypeStruct((B, C, HW), jnp.float32),
        grid_spec=pltpu.PrefetchScalarGridSpec(
            num_scalar_prefetch=0,
            grid=(B,),
            in_specs=[
                pl.BlockSpec((1, C, HW), lambda b: (b, 0, 0)),
                pl.BlockSpec((C, K * K), lambda b: (0, 0)),
                pl.BlockSpec((K * K, HW), lambda b: (0, 0)),
                pl.BlockSpec((C, 1), lambda b: (0, 0)),
                pl.BlockSpec((C, 1), lambda b: (0, 0)),
                pl.BlockSpec((C, 1), lambda b: (0, 0)),
                pl.BlockSpec((Ch, C), lambda b: (0, 0)),
                pl.BlockSpec((Ch, 1), lambda b: (0, 0)),
                pl.BlockSpec((C, Ch), lambda b: (0, 0)),
                pl.BlockSpec((C, 1), lambda b: (0, 0)),
            ],
            out_specs=pl.BlockSpec((1, C, HW), lambda b: (b, 0, 0)),
        ),
        compiler_params=pltpu.CompilerParams(
            dimension_semantics=("parallel",),
            vmem_limit_bytes=32 * 1024 * 1024),
    )(x2, dww2, mask, dwbc, gc, bc, w1t, b1c, w2t, b2c)

    return out2.reshape(B, C, H, W)


def reference_block(x_nchw, params, *, kernel_size=7, eps=1e-6):
    """Pure-JAX reference with the PyTorch module's semantics (for a correctness check)."""
    dww, dwb, gamma, beta, w1, b1, w2, b2 = params
    B, C, H, W = x_nchw.shape
    K = kernel_size
    pad = K // 2
    x = jnp.transpose(x_nchw, (0, 2, 3, 1))                        # NHWC
    xp = jnp.pad(x, ((0, 0), (pad, pad), (pad, pad), (0, 0)))
    acc = jnp.zeros((B, H, W, C), jnp.float32)
    for kh in range(K):
        for kw in range(K):
            acc = acc + xp[:, kh:kh + H, kw:kw + W, :] * dww[:, kh, kw]
    acc = acc + dwb
    mean = jnp.mean(acc, axis=-1, keepdims=True)
    var = jnp.mean((acc - mean) ** 2, axis=-1, keepdims=True)
    xn = (acc - mean) * lax.rsqrt(var + eps)
    xn = xn * gamma + beta
    h1 = _gelu_exact(jnp.einsum("bhwc,cd->bhwd", xn, w1) + b1)
    h2 = jnp.einsum("bhwd,dc->bhwc", h1, w2) + b2
    return jnp.transpose(h2, (0, 3, 1, 2))


def make_params(key, dim, kernel_size=7, scale=0.5):
    hidden = int(scale * dim)
    ks = jax.random.split(key, 8)
    dww = 0.05 * jax.random.normal(ks[0], (dim, kernel_size, kernel_size), jnp.float32)
    dwb = 0.01 * jax.random.normal(ks[1], (dim,), jnp.float32)
    gamma = 1.0 + 0.1 * jax.random.normal(ks[2], (dim,), jnp.float32)
    beta = 0.01 * jax.random.normal(ks[3], (dim,), jnp.float32)
    w1 = 0.1 * jax.random.normal(ks[4], (dim, hidden), jnp.float32)
    b1 = 0.01 * jax.random.normal(ks[5], (hidden,), jnp.float32)
    w2 = 0.1 * jax.random.normal(ks[6], (hidden, dim), jnp.float32)
    b2 = 0.01 * jax.random.normal(ks[7], (dim,), jnp.float32)
    return (dww, dwb, gamma, beta, w1, b1, w2, b2)


if __name__ == "__main__":
    B, dim, H, W = 2, 32, 16, 16
    K = 7

    key = jax.random.PRNGKey(0)
    kx, kp = jax.random.split(key)
    x = jax.random.normal(kx, (B, dim, H, W), jnp.float32)   # NCHW, like PyTorch
    params = make_params(kp, dim, kernel_size=K, scale=0.5)

    out = jax.block_until_ready(convnext_block(x, params, kernel_size=K, eps=1e-6))
    ref = jax.block_until_ready(reference_block(x, params, kernel_size=K, eps=1e-6))

    assert out.shape == (B, dim, H, W)
    assert jnp.allclose(out, ref, atol=1e-4, rtol=1e-4), "mismatch vs reference"

    print("KERNEL_OK")
</pallas_src>

<mosaic_0001>
module attributes {stable_mosaic.version = 11 : i64} {
  func.func @block_kernel(%arg0: i32, %arg1: memref<1x32x256xf32, #tpu.memory_space<vmem>>, %arg2: memref<32x49xf32, #tpu.memory_space<vmem>>, %arg3: memref<49x256xf32, #tpu.memory_space<vmem>>, %arg4: memref<32x1xf32, #tpu.memory_space<vmem>>, %arg5: memref<32x1xf32, #tpu.memory_space<vmem>>, %arg6: memref<32x1xf32, #tpu.memory_space<vmem>>, %arg7: memref<16x32xf32, #tpu.memory_space<vmem>>, %arg8: memref<16x1xf32, #tpu.memory_space<vmem>>, %arg9: memref<32x16xf32, #tpu.memory_space<vmem>>, %arg10: memref<32x1xf32, #tpu.memory_space<vmem>>, %arg11: memref<1x32x256xf32, #tpu.memory_space<vmem>>) attributes {dimension_semantics = [#tpu.dimension_semantics<parallel>], iteration_bounds = array<i64: 2>, scalar_prefetch = 0 : i64, scratch_operands = 0 : i64, tpu.core_type = #tpu.core_type<tc>, window_params = [{transform_indices = @transform_0, window_bounds = array<i64: 1, 32, 256>}, {pipeline_mode = #tpu.pipeline_mode<synchronous>, transform_indices = @transform_1, window_bounds = array<i64: 32, 49>}, {pipeline_mode = #tpu.pipeline_mode<synchronous>, transform_indices = @transform_2, window_bounds = array<i64: 49, 256>}, {pipeline_mode = #tpu.pipeline_mode<synchronous>, transform_indices = @transform_3, window_bounds = array<i64: 32, 1>}, {pipeline_mode = #tpu.pipeline_mode<synchronous>, transform_indices = @transform_4, window_bounds = array<i64: 32, 1>}, {pipeline_mode = #tpu.pipeline_mode<synchronous>, transform_indices = @transform_5, window_bounds = array<i64: 32, 1>}, {pipeline_mode = #tpu.pipeline_mode<synchronous>, transform_indices = @transform_6, window_bounds = array<i64: 16, 32>}, {pipeline_mode = #tpu.pipeline_mode<synchronous>, transform_indices = @transform_7, window_bounds = array<i64: 16, 1>}, {pipeline_mode = #tpu.pipeline_mode<synchronous>, transform_indices = @transform_8, window_bounds = array<i64: 32, 16>}, {pipeline_mode = #tpu.pipeline_mode<synchronous>, transform_indices = @transform_9, window_bounds = array<i64: 32, 1>}, {transform_indices = @transform_10, window_bounds = array<i64: 1, 32, 256>}]} {
    %c0 = arith.constant 0 : index
    %c0_0 = arith.constant 0 : index
    %c0_1 = arith.constant 0 : index
    %0 = vector.load %arg1[%c0, %c0_0, %c0_1] : memref<1x32x256xf32, #tpu.memory_space<vmem>>, vector<1x32x256xf32>
    %1 = vector.shape_cast %0 : vector<1x32x256xf32> to vector<32x256xf32>
    %cst = arith.constant 0.000000e+00 : f32
    %2 = vector.broadcast %cst : f32 to vector<32x256xf32>
    %c0_2 = arith.constant 0 : index
    %c0_3 = arith.constant 0 : index
    %3 = vector.load %arg2[%c0_2, %c0_3] : memref<32x49xf32, #tpu.memory_space<vmem>>, vector<32x1xf32>
    %c51_i32 = arith.constant 51 : i32
    %4 = tpu.dynamic_rotate %1 by %c51_i32 dim 1 : vector<32x256xf32>, i32 -> vector<32x256xf32>
    %c0_4 = arith.constant 0 : index
    %c0_5 = arith.constant 0 : index
    %5 = vector.load %arg3[%c0_4, %c0_5] : memref<49x256xf32, #tpu.memory_space<vmem>>, vector<1x256xf32>
    %6 = vector.broadcast %5 : vector<1x256xf32> to vector<32x256xf32>
    %7 = arith.mulf %4, %6 : vector<32x256xf32>
    %8 = vector.broadcast %3 : vector<32x1xf32> to vector<32x256xf32>
    %9 = arith.mulf %7, %8 : vector<32x256xf32>
    %10 = arith.addf %2, %9 : vector<32x256xf32>
    %c0_6 = arith.constant 0 : index
    %c1 = arith.constant 1 : index
    %11 = vector.load %arg2[%c0_6, %c1] : memref<32x49xf32, #tpu.memory_space<vmem>>, vector<32x1xf32>
    %c50_i32 = arith.constant 50 : i32
    %12 = tpu.dynamic_rotate %1 by %c50_i32 dim 1 : vector<32x256xf32>, i32 -> vector<32x256xf32>
    %c1_7 = arith.constant 1 : index
    %c0_8 = arith.constant 0 : index
    %13 = vector.load %arg3[%c1_7, %c0_8] : memref<49x256xf32, #tpu.memory_space<vmem>>, vector<1x256xf32>
    %14 = vector.broadcast %13 : vector<1x256xf32> to vector<32x256xf32>
    %15 = arith.mulf %12, %14 : vector<32x256xf32>
    %16 = vector.broadcast %11 : vector<32x1xf32> to vector<32x256xf32>
    %17 = arith.mulf %15, %16 : vector<32x256xf32>
    %18 = arith.addf %10, %17 : vector<32x256xf32>
    %c0_9 = arith.constant 0 : index
    %c2 = arith.constant 2 : index
    %19 = vector.load %arg2[%c0_9, %c2] : memref<32x49xf32, #tpu.memory_space<vmem>>, vector<32x1xf32>
    %c49_i32 = arith.constant 49 : i32
    %20 = tpu.dynamic_rotate %1 by %c49_i32 dim 1 : vector<32x256xf32>, i32 -> vector<32x256xf32>
    %c2_10 = arith.constant 2 : index
    %c0_11 = arith.constant 0 : index
    %21 = vector.load %arg3[%c2_10, %c0_11] : memref<49x256xf32, #tpu.memory_space<vmem>>, vector<1x256xf32>
    %22 = vector.broadcast %21 : vector<1x256xf32> to vector<32x256xf32>
    %23 = arith.mulf %20, %22 : vector<32x256xf32>
    %24 = vector.broadcast %19 : vector<32x1xf32> to vector<32x256xf32>
    %25 = arith.mulf %23, %24 : vector<32x256xf32>
    %26 = arith.addf %18, %25 : vector<32x256xf32>
    %c0_12 = arith.constant 0 : index
    %c3 = arith.constant 3 : index
    %27 = vector.load %arg2[%c0_12, %c3] : memref<32x49xf32, #tpu.memory_space<vmem>>, vector<32x1xf32>
    %c48_i32 = arith.constant 48 : i32
    %28 = tpu.dynamic_rotate %1 by %c48_i32 dim 1 : vector<32x256xf32>, i32 -> vector<32x256xf32>
    %c3_13 = arith.constant 3 : index
    %c0_14 = arith.constant 0 : index
    %29 = vector.load %arg3[%c3_13, %c0_14] : memref<49x256xf32, #tpu.memory_space<vmem>>, vector<1x256xf32>
    %30 = vector.broadcast %29 : vector<1x256xf32> to vector<32x256xf32>
    %31 = arith.mulf %28, %30 : vector<32x256xf32>
    %32 = vector.broadcast %27 : vector<32x1xf32> to vector<32x256xf32>
    %33 = arith.mulf %31, %32 : vector<32x256xf32>
    %34 = arith.addf %26, %33 : vector<32x256xf32>
    %c0_15 = arith.constant 0 : index
    %c4 = arith.constant 4 : index
    %35 = vector.load %arg2[%c0_15, %c4] : memref<32x49xf32, #tpu.memory_space<vmem>>, vector<32x1xf32>
    %c47_i32 = arith.constant 47 : i32
    %36 = tpu.dynamic_rotate %1 by %c47_i32 dim 1 : vector<32x256xf32>, i32 -> vector<32x256xf32>
    %c4_16 = arith.constant 4 : index
    %c0_17 = arith.constant 0 : index
    %37 = vector.load %arg3[%c4_16, %c0_17] : memref<49x256xf32, #tpu.memory_space<vmem>>, vector<1x256xf32>
    %38 = vector.broadcast %37 : vector<1x256xf32> to vector<32x256xf32>
    %39 = arith.mulf %36, %38 : vector<32x256xf32>
    %40 = vector.broadcast %35 : vector<32x1xf32> to vector<32x256xf32>
    %41 = arith.mulf %39, %40 : vector<32x256xf32>
    %42 = arith.addf %34, %41 : vector<32x256xf32>
    %c0_18 = arith.constant 0 : index
    %c5 = arith.constant 5 : index
    %43 = vector.load %arg2[%c0_18, %c5] : memref<32x49xf32, #tpu.memory_space<vmem>>, vector<32x1xf32>
    %c46_i32 = arith.constant 46 : i32
    %44 = tpu.dynamic_rotate %1 by %c46_i32 dim 1 : vector<32x256xf32>, i32 -> vector<32x256xf32>
    %c5_19 = arith.constant 5 : index
    %c0_20 = arith.constant 0 : index
    %45 = vector.load %arg3[%c5_19, %c0_20] : memref<49x256xf32, #tpu.memory_space<vmem>>, vector<1x256xf32>
    %46 = vector.broadcast %45 : vector<1x256xf32> to vector<32x256xf32>
    %47 = arith.mulf %44, %46 : vector<32x256xf32>
    %48 = vector.broadcast %43 : vector<32x1xf32> to vector<32x256xf32>
    %49 = arith.mulf %47, %48 : vector<32x256xf32>
    %50 = arith.addf %42, %49 : vector<32x256xf32>
    %c0_21 = arith.constant 0 : index
    %c6 = arith.constant 6 : index
    %51 = vector.load %arg2[%c0_21, %c6] : memref<32x49xf32, #tpu.memory_space<vmem>>, vector<32x1xf32>
    %c45_i32 = arith.constant 45 : i32
    %52 = tpu.dynamic_rotate %1 by %c45_i32 dim 1 : vector<32x256xf32>, i32 -> vector<32x256xf32>
    %c6_22 = arith.constant 6 : index
    %c0_23 = arith.constant 0 : index
    %53 = vector.load %arg3[%c6_22, %c0_23] : memref<49x256xf32, #tpu.memory_space<vmem>>, vector<1x256xf32>
    %54 = vector.broadcast %53 : vector<1x256xf32> to vector<32x256xf32>
    %55 = arith.mulf %52, %54 : vector<32x256xf32>
    %56 = vector.broadcast %51 : vector<32x1xf32> to vector<32x256xf32>
    %57 = arith.mulf %55, %56 : vector<32x256xf32>
    %58 = arith.addf %50, %57 : vector<32x256xf32>
    %c0_24 = arith.constant 0 : index
    %c7 = arith.constant 7 : index
    %59 = vector.load %arg2[%c0_24, %c7] : memref<32x49xf32, #tpu.memory_space<vmem>>, vector<32x1xf32>
    %c35_i32 = arith.constant 35 : i32
    %60 = tpu.dynamic_rotate %1 by %c35_i32 dim 1 : vector<32x256xf32>, i32 -> vector<32x256xf32>
    %c7_25 = arith.constant 7 : index
    %c0_26 = arith.constant 0 : index
    %61 = vector.load %arg3[%c7_25, %c0_26] : memref<49x256xf32, #tpu.memory_space<vmem>>, vector<1x256xf32>
    %62 = vector.broadcast %61 : vector<1x256xf32> to vector<32x256xf32>
    %63 = arith.mulf %60, %62 : vector<32x256xf32>
    %64 = vector.broadcast %59 : vector<32x1xf32> to vector<32x256xf32>
    %65 = arith.mulf %63, %64 : vector<32x256xf32>
    %66 = arith.addf %58, %65 : vector<32x256xf32>
    %c0_27 = arith.constant 0 : index
    %c8 = arith.constant 8 : index
    %67 = vector.load %arg2[%c0_27, %c8] : memref<32x49xf32, #tpu.memory_space<vmem>>, vector<32x1xf32>
    %c34_i32 = arith.constant 34 : i32
    %68 = tpu.dynamic_rotate %1 by %c34_i32 dim 1 : vector<32x256xf32>, i32 -> vector<32x256xf32>
    %c8_28 = arith.constant 8 : index
    %c0_29 = arith.constant 0 : index
    %69 = vector.load %arg3[%c8_28, %c0_29] : memref<49x256xf32, #tpu.memory_space<vmem>>, vector<1x256xf32>
    %70 = vector.broadcast %69 : vector<1x256xf32> to vector<32x256xf32>
    %71 = arith.mulf %68, %70 : vector<32x256xf32>
    %72 = vector.broadcast %67 : vector<32x1xf32> to vector<32x256xf32>
    %73 = arith.mulf %71, %72 : vector<32x256xf32>
    %74 = arith.addf %66, %73 : vector<32x256xf32>
    %c0_30 = arith.constant 0 : index
    %c9 = arith.constant 9 : index
    %75 = vector.load %arg2[%c0_30, %c9] : memref<32x49xf32, #tpu.memory_space<vmem>>, vector<32x1xf32>
    %c33_i32 = arith.constant 33 : i32
    %76 = tpu.dynamic_rotate %1 by %c33_i32 dim 1 : vector<32x256xf32>, i32 -> vector<32x256xf32>
    %c9_31 = arith.constant 9 : index
    %c0_32 = arith.constant 0 : index
    %77 = vector.load %arg3[%c9_31, %c0_32] : memref<49x256xf32, #tpu.memory_space<vmem>>, vector<1x256xf32>
    %78 = vector.broadcast %77 : vector<1x256xf32> to vector<32x256xf32>
    %79 = arith.mulf %76, %78 : vector<32x256xf32>
    %80 = vector.broadcast %75 : vector<32x1xf32> to vector<32x256xf32>
    %81 = arith.mulf %79, %80 : vector<32x256xf32>
    %82 = arith.addf %74, %81 : vector<32x256xf32>
    %c0_33 = arith.constant 0 : index
    %c10 = arith.constant 10 : index
    %83 = vector.load %arg2[%c0_33, %c10] : memref<32x49xf32, #tpu.memory_space<vmem>>, vector<32x1xf32>
    %c32_i32 = arith.constant 32 : i32
    %84 = tpu.dynamic_rotate %1 by %c32_i32 dim 1 : vector<32x256xf32>, i32 -> vector<32x256xf32>
    %c10_34 = arith.constant 10 : index
    %c0_35 = arith.constant 0 : index
    %85 = vector.load %arg3[%c10_34, %c0_35] : memref<49x256xf32, #tpu.memory_space<vmem>>, vector<1x256xf32>
    %86 = vector.broadcast %85 : vector<1x256xf32> to vector<32x256xf32>
    %87 = arith.mulf %84, %86 : vector<32x256xf32>
    %88 = vector.broadcast %83 : vector<32x1xf32> to vector<32x256xf32>
    %89 = arith.mulf %87, %88 : vector<32x256xf32>
    %90 = arith.addf %82, %89 : vector<32x256xf32>
    %c0_36 = arith.constant 0 : index
    %c11 = arith.constant 11 : index
    %91 = vector.load %arg2[%c0_36, %c11] : memref<32x49xf32, #tpu.memory_space<vmem>>, vector<32x1xf32>
    %c31_i32 = arith.constant 31 : i32
    %92 = tpu.dynamic_rotate %1 by %c31_i32 dim 1 : vector<32x256xf32>, i32 -> vector<32x256xf32>
    %c11_37 = arith.constant 11 : index
    %c0_38 = arith.constant 0 : index
    %93 = vector.load %arg3[%c11_37, %c0_38] : memref<49x256xf32, #tpu.memory_space<vmem>>, vector<1x256xf32>
    %94 = vector.broadcast %93 : vector<1x256xf32> to vector<32x256xf32>
    %95 = arith.mulf %92, %94 : vector<32x256xf32>
    %96 = vector.broadcast %91 : vector<32x1xf32> to vector<32x256xf32>
    %97 = arith.mulf %95, %96 : vector<32x256xf32>
    %98 = arith.addf %90, %97 : vector<32x256xf32>
    %c0_39 = arith.constant 0 : index
    %c12 = arith.constant 12 : index
    %99 = vector.load %arg2[%c0_39, %c12] : memref<32x49xf32, #tpu.memory_space<vmem>>, vector<32x1xf32>
    %c30_i32 = arith.constant 30 : i32
    %100 = tpu.dynamic_rotate %1 by %c30_i32 dim 1 : vector<32x256xf32>, i32 -> vector<32x256xf32>
    %c12_40 = arith.constant 12 : index
    %c0_41 = arith.constant 0 : index
    %101 = vector.load %arg3[%c12_40, %c0_41] : memref<49x256xf32, #tpu.memory_space<vmem>>, vector<1x256xf32>
    %102 = vector.broadcast %101 : vector<1x256xf32> to vector<32x256xf32>
    %103 = arith.mulf %100, %102 : vector<32x256xf32>
    %104 = vector.broadcast %99 : vector<32x1xf32> to vector<32x256xf32>
    %105 = arith.mulf %103, %104 : vector<32x256xf32>
    %106 = arith.addf %98, %105 : vector<32x256xf32>
    %c0_42 = arith.constant 0 : index
    %c13 = arith.constant 13 : index
    %107 = vector.load %arg2[%c0_42, %c13] : memref<32x49xf32, #tpu.memory_space<vmem>>, vector<32x1xf32>
    %c29_i32 = arith.constant 29 : i32
    %108 = tpu.dynamic_rotate %1 by %c29_i32 dim 1 : vector<32x256xf32>, i32 -> vector<32x256xf32>
    %c13_43 = arith.constant 13 : index
    %c0_44 = arith.constant 0 : index
    %109 = vector.load %arg3[%c13_43, %c0_44] : memref<49x256xf32, #tpu.memory_space<vmem>>, vector<1x256xf32>
    %110 = vector.broadcast %109 : vector<1x256xf32> to vector<32x256xf32>
    %111 = arith.mulf %108, %110 : vector<32x256xf32>
    %112 = vector.broadcast %107 : vector<32x1xf32> to vector<32x256xf32>
    %113 = arith.mulf %111, %112 : vector<32x256xf32>
    %114 = arith.addf %106, %113 : vector<32x256xf32>
    %c0_45 = arith.constant 0 : index
    %c14 = arith.constant 14 : index
    %115 = vector.load %arg2[%c0_45, %c14] : memref<32x49xf32, #tpu.memory_space<vmem>>, vector<32x1xf32>
    %c19_i32 = arith.constant 19 : i32
    %116 = tpu.dynamic_rotate %1 by %c19_i32 dim 1 : vector<32x256xf32>, i32 -> vector<32x256xf32>
    %c14_46 = arith.constant 14 : index
    %c0_47 = arith.constant 0 : index
    %117 = vector.load %arg3[%c14_46, %c0_47] : memref<49x256xf32, #tpu.memory_space<vmem>>, vector<1x256xf32>
    %118 = vector.broadcast %117 : vector<1x256xf32> to vector<32x256xf32>
    %119 = arith.mulf %116, %118 : vector<32x256xf32>
    %120 = vector.broadcast %115 : vector<32x1xf32> to vector<32x256xf32>
    %121 = arith.mulf %119, %120 : vector<32x256xf32>
    %122 = arith.addf %114, %121 : vector<32x256xf32>
    %c0_48 = arith.constant 0 : index
    %c15 = arith.constant 15 : index
    %123 = vector.load %arg2[%c0_48, %c15] : memref<32x49xf32, #tpu.memory_space<vmem>>, vector<32x1xf32>
    %c18_i32 = arith.constant 18 : i32
    %124 = tpu.dynamic_rotate %1 by %c18_i32 dim 1 : vector<32x256xf32>, i32 -> vector<32x256xf32>
    %c15_49 = arith.constant 15 : index
    %c0_50 = arith.constant 0 : index
    %125 = vector.load %arg3[%c15_49, %c0_50] : memref<49x256xf32, #tpu.memory_space<vmem>>, vector<1x256xf32>
    %126 = vector.broadcast %125 : vector<1x256xf32> to vector<32x256xf32>
    %127 = arith.mulf %124, %126 : vector<32x256xf32>
    %128 = vector.broadcast %123 : vector<32x1xf32> to vector<32x256xf32>
    %129 = arith.mulf %127, %128 : vector<32x256xf32>
    %130 = arith.addf %122, %129 : vector<32x256xf32>
    %c0_51 = arith.constant 0 : index
    %c16 = arith.constant 16 : index
    %131 = vector.load %arg2[%c0_51, %c16] : memref<32x49xf32, #tpu.memory_space<vmem>>, vector<32x1xf32>
    %c17_i32 = arith.constant 17 : i32
    %132 = tpu.dynamic_rotate %1 by %c17_i32 dim 1 : vector<32x256xf32>, i32 -> vector<32x256xf32>
    %c16_52 = arith.constant 16 : index
    %c0_53 = arith.constant 0 : index
    %133 = vector.load %arg3[%c16_52, %c0_53] : memref<49x256xf32, #tpu.memory_space<vmem>>, vector<1x256xf32>
    %134 = vector.broadcast %133 : vector<1x256xf32> to vector<32x256xf32>
    %135 = arith.mulf %132, %134 : vector<32x256xf32>
    %136 = vector.broadcast %131 : vector<32x1xf32> to vector<32x256xf32>
    %137 = arith.mulf %135, %136 : vector<32x256xf32>
    %138 = arith.addf %130, %137 : vector<32x256xf32>
    %c0_54 = arith.constant 0 : index
    %c17 = arith.constant 17 : index
    %139 = vector.load %arg2[%c0_54, %c17] : memref<32x49xf32, #tpu.memory_space<vmem>>, vector<32x1xf32>
    %c16_i32 = arith.constant 16 : i32
    %140 = tpu.dynamic_rotate %1 by %c16_i32 dim 1 : vector<32x256xf32>, i32 -> vector<32x256xf32>
    %c17_55 = arith.constant 17 : index
    %c0_56 = arith.constant 0 : index
    %141 = vector.load %arg3[%c17_55, %c0_56] : memref<49x256xf32, #tpu.memory_space<vmem>>, vector<1x256xf32>
    %142 = vector.broadcast %141 : vector<1x256xf32> to vector<32x256xf32>
    %143 = arith.mulf %140, %142 : vector<32x256xf32>
    %144 = vector.broadcast %139 : vector<32x1xf32> to vector<32x256xf32>
    %145 = arith.mulf %143, %144 : vector<32x256xf32>
    %146 = arith.addf %138, %145 : vector<32x256xf32>
    %c0_57 = arith.constant 0 : index
    %c18 = arith.constant 18 : index
    %147 = vector.load %arg2[%c0_57, %c18] : memref<32x49xf32, #tpu.memory_space<vmem>>, vector<32x1xf32>
    %c15_i32 = arith.constant 15 : i32
    %148 = tpu.dynamic_rotate %1 by %c15_i32 dim 1 : vector<32x256xf32>, i32 -> vector<32x256xf32>
    %c18_58 = arith.constant 18 : index
    %c0_59 = arith.constant 0 : index
    %149 = vector.load %arg3[%c18_58, %c0_59] : memref<49x256xf32, #tpu.memory_space<vmem>>, vector<1x256xf32>
    %150 = vector.broadcast %149 : vector<1x256xf32> to vector<32x256xf32>
    %151 = arith.mulf %148, %150 : vector<32x256xf32>
    %152 = vector.broadcast %147 : vector<32x1xf32> to vector<32x256xf32>
    %153 = arith.mulf %151, %152 : vector<32x256xf32>
    %154 = arith.addf %146, %153 : vector<32x256xf32>
    %c0_60 = arith.constant 0 : index
    %c19 = arith.constant 19 : index
    %155 = vector.load %arg2[%c0_60, %c19] : memref<32x49xf32, #tpu.memory_space<vmem>>, vector<32x1xf32>
    %c14_i32 = arith.constant 14 : i32
    %156 = tpu.dynamic_rotate %1 by %c14_i32 dim 1 : vector<32x256xf32>, i32 -> vector<32x256xf32>
    %c19_61 = arith.constant 19 : index
    %c0_62 = arith.constant 0 : index
    %157 = vector.load %arg3[%c19_61, %c0_62] : memref<49x256xf32, #tpu.memory_space<vmem>>, vector<1x256xf32>
    %158 = vector.broadcast %157 : vector<1x256xf32> to vector<32x256xf32>
    %159 = arith.mulf %156, %158 : vector<32x256xf32>
    %160 = vector.broadcast %155 : vector<32x1xf32> to vector<32x256xf32>
    %161 = arith.mulf %159, %160 : vector<32x256xf32>
    %162 = arith.addf %154, %161 : vector<32x256xf32>
    %c0_63 = arith.constant 0 : index
    %c20 = arith.constant 20 : index
    %163 = vector.load %arg2[%c0_63, %c20] : memref<32x49xf32, #tpu.memory_space<vmem>>, vector<32x1xf32>
    %c13_i32 = arith.constant 13 : i32
    %164 = tpu.dynamic_rotate %1 by %c13_i32 dim 1 : vector<32x256xf32>, i32 -> vector<32x256xf32>
    %c20_64 = arith.constant 20 : index
    %c0_65 = arith.constant 0 : index
    %165 = vector.load %arg3[%c20_64, %c0_65] : memref<49x256xf32, #tpu.memory_space<vmem>>, vector<1x256xf32>
    %166 = vector.broadcast %165 : vector<1x256xf32> to vector<32x256xf32>
    %167 = arith.mulf %164, %166 : vector<32x256xf32>
    %168 = vector.broadcast %163 : vector<32x1xf32> to vector<32x256xf32>
    %169 = arith.mulf %167, %168 : vector<32x256xf32>
    %170 = arith.addf %162, %169 : vector<32x256xf32>
    %c0_66 = arith.constant 0 : index
    %c21 = arith.constant 21 : index
    %171 = vector.load %arg2[%c0_66, %c21] : memref<32x49xf32, #tpu.memory_space<vmem>>, vector<32x1xf32>
    %c3_i32 = arith.constant 3 : i32
    %172 = tpu.dynamic_rotate %1 by %c3_i32 dim 1 : vector<32x256xf32>, i32 -> vector<32x256xf32>
    %c21_67 = arith.constant 21 : index
    %c0_68 = arith.constant 0 : index
    %173 = vector.load %arg3[%c21_67, %c0_68] : memref<49x256xf32, #tpu.memory_space<vmem>>, vector<1x256xf32>
    %174 = vector.broadcast %173 : vector<1x256xf32> to vector<32x256xf32>
    %175 = arith.mulf %172, %174 : vector<32x256xf32>
    %176 = vector.broadcast %171 : vector<32x1xf32> to vector<32x256xf32>
    %177 = arith.mulf %175, %176 : vector<32x256xf32>
    %178 = arith.addf %170, %177 : vector<32x256xf32>
    %c0_69 = arith.constant 0 : index
    %c22 = arith.constant 22 : index
    %179 = vector.load %arg2[%c0_69, %c22] : memref<32x49xf32, #tpu.memory_space<vmem>>, vector<32x1xf32>
    %c2_i32 = arith.constant 2 : i32
    %180 = tpu.dynamic_rotate %1 by %c2_i32 dim 1 : vector<32x256xf32>, i32 -> vector<32x256xf32>
    %c22_70 = arith.constant 22 : index
    %c0_71 = arith.constant 0 : index
    %181 = vector.load %arg3[%c22_70, %c0_71] : memref<49x256xf32, #tpu.memory_space<vmem>>, vector<1x256xf32>
    %182 = vector.broadcast %181 : vector<1x256xf32> to vector<32x256xf32>
    %183 = arith.mulf %180, %182 : vector<32x256xf32>
    %184 = vector.broadcast %179 : vector<32x1xf32> to vector<32x256xf32>
    %185 = arith.mulf %183, %184 : vector<32x256xf32>
    %186 = arith.addf %178, %185 : vector<32x256xf32>
    %c0_72 = arith.constant 0 : index
    %c23 = arith.constant 23 : index
    %187 = vector.load %arg2[%c0_72, %c23] : memref<32x49xf32, #tpu.memory_space<vmem>>, vector<32x1xf32>
    %c1_i32 = arith.constant 1 : i32
    %188 = tpu.dynamic_rotate %1 by %c1_i32 dim 1 : vector<32x256xf32>, i32 -> vector<32x256xf32>
    %c23_73 = arith.constant 23 : index
    %c0_74 = arith.constant 0 : index
    %189 = vector.load %arg3[%c23_73, %c0_74] : memref<49x256xf32, #tpu.memory_space<vmem>>, vector<1x256xf32>
    %190 = vector.broadcast %189 : vector<1x256xf32> to vector<32x256xf32>
    %191 = arith.mulf %188, %190 : vector<32x256xf32>
    %192 = vector.broadcast %187 : vector<32x1xf32> to vector<32x256xf32>
    %193 = arith.mulf %191, %192 : vector<32x256xf32>
    %194 = arith.addf %186, %193 : vector<32x256xf32>
    %c0_75 = arith.constant 0 : index
    %c24 = arith.constant 24 : index
    %195 = vector.load %arg2[%c0_75, %c24] : memref<32x49xf32, #tpu.memory_space<vmem>>, vector<32x1xf32>
    %196 = vector.broadcast %195 : vector<32x1xf32> to vector<32x256xf32>
    %197 = arith.mulf %1, %196 : vector<32x256xf32>
    %198 = arith.addf %194, %197 : vector<32x256xf32>
    %c0_76 = arith.constant 0 : index
    %c25 = arith.constant 25 : index
    %199 = vector.load %arg2[%c0_76, %c25] : memref<32x49xf32, #tpu.memory_space<vmem>>, vector<32x1xf32>
    %c255_i32 = arith.constant 255 : i32
    %200 = tpu.dynamic_rotate %1 by %c255_i32 dim 1 : vector<32x256xf32>, i32 -> vector<32x256xf32>
    %c25_77 = arith.constant 25 : index
    %c0_78 = arith.constant 0 : index
    %201 = vector.load %arg3[%c25_77, %c0_78] : memref<49x256xf32, #tpu.memory_space<vmem>>, vector<1x256xf32>
    %202 = vector.broadcast %201 : vector<1x256xf32> to vector<32x256xf32>
    %203 = arith.mulf %200, %202 : vector<32x256xf32>
    %204 = vector.broadcast %199 : vector<32x1xf32> to vector<32x256xf32>
    %205 = arith.mulf %203, %204 : vector<32x256xf32>
    %206 = arith.addf %198, %205 : vector<32x256xf32>
    %c0_79 = arith.constant 0 : index
    %c26 = arith.constant 26 : index
    %207 = vector.load %arg2[%c0_79, %c26] : memref<32x49xf32, #tpu.memory_space<vmem>>, vector<32x1xf32>
    %c254_i32 = arith.constant 254 : i32
    %208 = tpu.dynamic_rotate %1 by %c254_i32 dim 1 : vector<32x256xf32>, i32 -> vector<32x256xf32>
    %c26_80 = arith.constant 26 : index
    %c0_81 = arith.constant 0 : index
    %209 = vector.load %arg3[%c26_80, %c0_81] : memref<49x256xf32, #tpu.memory_space<vmem>>, vector<1x256xf32>
    %210 = vector.broadcast %209 : vector<1x256xf32> to vector<32x256xf32>
    %211 = arith.mulf %208, %210 : vector<32x256xf32>
    %212 = vector.broadcast %207 : vector<32x1xf32> to vector<32x256xf32>
    %213 = arith.mulf %211, %212 : vector<32x256xf32>
    %214 = arith.addf %206, %213 : vector<32x256xf32>
    %c0_82 = arith.constant 0 : index
    %c27 = arith.constant 27 : index
    %215 = vector.load %arg2[%c0_82, %c27] : memref<32x49xf32, #tpu.memory_space<vmem>>, vector<32x1xf32>
    %c253_i32 = arith.constant 253 : i32
    %216 = tpu.dynamic_rotate %1 by %c253_i32 dim 1 : vector<32x256xf32>, i32 -> vector<32x256xf32>
    %c27_83 = arith.constant 27 : index
    %c0_84 = arith.constant 0 : index
    %217 = vector.load %arg3[%c27_83, %c0_84] : memref<49x256xf32, #tpu.memory_space<vmem>>, vector<1x256xf32>
    %218 = vector.broadcast %217 : vector<1x256xf32> to vector<32x256xf32>
    %219 = arith.mulf %216, %218 : vector<32x256xf32>
    %220 = vector.broadcast %215 : vector<32x1xf32> to vector<32x256xf32>
    %221 = arith.mulf %219, %220 : vector<32x256xf32>
    %222 = arith.addf %214, %221 : vector<32x256xf32>
    %c0_85 = arith.constant 0 : index
    %c28 = arith.constant 28 : index
    %223 = vector.load %arg2[%c0_85, %c28] : memref<32x49xf32, #tpu.memory_space<vmem>>, vector<32x1xf32>
    %c243_i32 = arith.constant 243 : i32
    %224 = tpu.dynamic_rotate %1 by %c243_i32 dim 1 : vector<32x256xf32>, i32 -> vector<32x256xf32>
    %c28_86 = arith.constant 28 : index
    %c0_87 = arith.constant 0 : index
    %225 = vector.load %arg3[%c28_86, %c0_87] : memref<49x256xf32, #tpu.memory_space<vmem>>, vector<1x256xf32>
    %226 = vector.broadcast %225 : vector<1x256xf32> to vector<32x256xf32>
    %227 = arith.mulf %224, %226 : vector<32x256xf32>
    %228 = vector.broadcast %223 : vector<32x1xf32> to vector<32x256xf32>
    %229 = arith.mulf %227, %228 : vector<32x256xf32>
    %230 = arith.addf %222, %229 : vector<32x256xf32>
    %c0_88 = arith.constant 0 : index
    %c29 = arith.constant 29 : index
    %231 = vector.load %arg2[%c0_88, %c29] : memref<32x49xf32, #tpu.memory_space<vmem>>, vector<32x1xf32>
    %c242_i32 = arith.constant 242 : i32
    %232 = tpu.dynamic_rotate %1 by %c242_i32 dim 1 : vector<32x256xf32>, i32 -> vector<32x256xf32>
    %c29_89 = arith.constant 29 : index
    %c0_90 = arith.constant 0 : index
    %233 = vector.load %arg3[%c29_89, %c0_90] : memref<49x256xf32, #tpu.memory_space<vmem>>, vector<1x256xf32>
    %234 = vector.broadcast %233 : vector<1x256xf32> to vector<32x256xf32>
    %235 = arith.mulf %232, %234 : vector<32x256xf32>
    %236 = vector.broadcast %231 : vector<32x1xf32> to vector<32x256xf32>
    %237 = arith.mulf %235, %236 : vector<32x256xf32>
    %238 = arith.addf %230, %237 : vector<32x256xf32>
    %c0_91 = arith.constant 0 : index
    %c30 = arith.constant 30 : index
    %239 = vector.load %arg2[%c0_91, %c30] : memref<32x49xf32, #tpu.memory_space<vmem>>, vector<32x1xf32>
    %c241_i32 = arith.constant 241 : i32
    %240 = tpu.dynamic_rotate %1 by %c241_i32 dim 1 : vector<32x256xf32>, i32 -> vector<32x256xf32>
    %c30_92 = arith.constant 30 : index
    %c0_93 = arith.constant 0 : index
    %241 = vector.load %arg3[%c30_92, %c0_93] : memref<49x256xf32, #tpu.memory_space<vmem>>, vector<1x256xf32>
    %242 = vector.broadcast %241 : vector<1x256xf32> to vector<32x256xf32>
    %243 = arith.mulf %240, %242 : vector<32x256xf32>
    %244 = vector.broadcast %239 : vector<32x1xf32> to vector<32x256xf32>
    %245 = arith.mulf %243, %244 : vector<32x256xf32>
    %246 = arith.addf %238, %245 : vector<32x256xf32>
    %c0_94 = arith.constant 0 : index
    %c31 = arith.constant 31 : index
    %247 = vector.load %arg2[%c0_94, %c31] : memref<32x49xf32, #tpu.memory_space<vmem>>, vector<32x1xf32>
    %c240_i32 = arith.constant 240 : i32
    %248 = tpu.dynamic_rotate %1 by %c240_i32 dim 1 : vector<32x256xf32>, i32 -> vector<32x256xf32>
    %c31_95 = arith.constant 31 : index
    %c0_96 = arith.constant 0 : index
    %249 = vector.load %arg3[%c31_95, %c0_96] : memref<49x256xf32, #tpu.memory_space<vmem>>, vector<1x256xf32>
    %250 = vector.broadcast %249 : vector<1x256xf32> to vector<32x256xf32>
    %251 = arith.mulf %248, %250 : vector<32x256xf32>
    %252 = vector.broadcast %247 : vector<32x1xf32> to vector<32x256xf32>
    %253 = arith.mulf %251, %252 : vector<32x256xf32>
    %254 = arith.addf %246, %253 : vector<32x256xf32>
    %c0_97 = arith.constant 0 : index
    %c32 = arith.constant 32 : index
    %255 = vector.load %arg2[%c0_97, %c32] : memref<32x49xf32, #tpu.memory_space<vmem>>, vector<32x1xf32>
    %c239_i32 = arith.constant 239 : i32
    %256 = tpu.dynamic_rotate %1 by %c239_i32 dim 1 : vector<32x256xf32>, i32 -> vector<32x256xf32>
    %c32_98 = arith.constant 32 : index
    %c0_99 = arith.constant 0 : index
    %257 = vector.load %arg3[%c32_98, %c0_99] : memref<49x256xf32, #tpu.memory_space<vmem>>, vector<1x256xf32>
    %258 = vector.broadcast %257 : vector<1x256xf32> to vector<32x256xf32>
    %259 = arith.mulf %256, %258 : vector<32x256xf32>
    %260 = vector.broadcast %255 : vector<32x1xf32> to vector<32x256xf32>
    %261 = arith.mulf %259, %260 : vector<32x256xf32>
    %262 = arith.addf %254, %261 : vector<32x256xf32>
    %c0_100 = arith.constant 0 : index
    %c33 = arith.constant 33 : index
    %263 = vector.load %arg2[%c0_100, %c33] : memref<32x49xf32, #tpu.memory_space<vmem>>, vector<32x1xf32>
    %c238_i32 = arith.constant 238 : i32
    %264 = tpu.dynamic_rotate %1 by %c238_i32 dim 1 : vector<32x256xf32>, i32 -> vector<32x256xf32>
    %c33_101 = arith.constant 33 : index
    %c0_102 = arith.constant 0 : index
    %265 = vector.load %arg3[%c33_101, %c0_102] : memref<49x256xf32, #tpu.memory_space<vmem>>, vector<1x256xf32>
    %266 = vector.broadcast %265 : vector<1x256xf32> to vector<32x256xf32>
    %267 = arith.mulf %264, %266 : vector<32x256xf32>
    %268 = vector.broadcast %263 : vector<32x1xf32> to vector<32x256xf32>
    %269 = arith.mulf %267, %268 : vector<32x256xf32>
    %270 = arith.addf %262, %269 : vector<32x256xf32>
    %c0_103 = arith.constant 0 : index
    %c34 = arith.constant 34 : index
    %271 = vector.load %arg2[%c0_103, %c34] : memref<32x49xf32, #tpu.memory_space<vmem>>, vector<32x1xf32>
    %c237_i32 = arith.constant 237 : i32
    %272 = tpu.dynamic_rotate %1 by %c237_i32 dim 1 : vector<32x256xf32>, i32 -> vector<32x256xf32>
    %c34_104 = arith.constant 34 : index
    %c0_105 = arith.constant 0 : index
    %273 = vector.load %arg3[%c34_104, %c0_105] : memref<49x256xf32, #tpu.memory_space<vmem>>, vector<1x256xf32>
    %274 = vector.broadcast %273 : vector<1x256xf32> to vector<32x256xf32>
    %275 = arith.mulf %272, %274 : vector<32x256xf32>
    %276 = vector.broadcast %271 : vector<32x1xf32> to vector<32x256xf32>
    %277 = arith.mulf %275, %276 : vector<32x256xf32>
    %278 = arith.addf %270, %277 : vector<32x256xf32>
    %c0_106 = arith.constant 0 : index
    %c35 = arith.constant 35 : index
    %279 = vector.load %arg2[%c0_106, %c35] : memref<32x49xf32, #tpu.memory_space<vmem>>, vector<32x1xf32>
    %c227_i32 = arith.constant 227 : i32
    %280 = tpu.dynamic_rotate %1 by %c227_i32 dim 1 : vector<32x256xf32>, i32 -> vector<32x256xf32>
    %c35_107 = arith.constant 35 : index
    %c0_108 = arith.constant 0 : index
    %281 = vector.load %arg3[%c35_107, %c0_108] : memref<49x256xf32, #tpu.memory_space<vmem>>, vector<1x256xf32>
    %282 = vector.broadcast %281 : vector<1x256xf32> to vector<32x256xf32>
    %283 = arith.mulf %280, %282 : vector<32x256xf32>
    %284 = vector.broadcast %279 : vector<32x1xf32> to vector<32x256xf32>
    %285 = arith.mulf %283, %284 : vector<32x256xf32>
    %286 = arith.addf %278, %285 : vector<32x256xf32>
    %c0_109 = arith.constant 0 : index
    %c36 = arith.constant 36 : index
    %287 = vector.load %arg2[%c0_109, %c36] : memref<32x49xf32, #tpu.memory_space<vmem>>, vector<32x1xf32>
    %c226_i32 = arith.constant 226 : i32
    %288 = tpu.dynamic_rotate %1 by %c226_i32 dim 1 : vector<32x256xf32>, i32 -> vector<32x256xf32>
    %c36_110 = arith.constant 36 : index
    %c0_111 = arith.constant 0 : index
    %289 = vector.load %arg3[%c36_110, %c0_111] : memref<49x256xf32, #tpu.memory_space<vmem>>, vector<1x256xf32>
    %290 = vector.broadcast %289 : vector<1x256xf32> to vector<32x256xf32>
    %291 = arith.mulf %288, %290 : vector<32x256xf32>
    %292 = vector.broadcast %287 : vector<32x1xf32> to vector<32x256xf32>
    %293 = arith.mulf %291, %292 : vector<32x256xf32>
    %294 = arith.addf %286, %293 : vector<32x256xf32>
    %c0_112 = arith.constant 0 : index
    %c37 = arith.constant 37 : index
    %295 = vector.load %arg2[%c0_112, %c37] : memref<32x49xf32, #tpu.memory_space<vmem>>, vector<32x1xf32>
    %c225_i32 = arith.constant 225 : i32
    %296 = tpu.dynamic_rotate %1 by %c225_i32 dim 1 : vector<32x256xf32>, i32 -> vector<32x256xf32>
    %c37_113 = arith.constant 37 : index
    %c0_114 = arith.constant 0 : index
    %297 = vector.load %arg3[%c37_113, %c0_114] : memref<49x256xf32, #tpu.memory_space<vmem>>, vector<1x256xf32>
    %298 = vector.broadcast %297 : vector<1x256xf32> to vector<32x256xf32>
    %299 = arith.mulf %296, %298 : vector<32x256xf32>
    %300 = vector.broadcast %295 : vector<32x1xf32> to vector<32x256xf32>
    %301 = arith.mulf %299, %300 : vector<32x256xf32>
    %302 = arith.addf %294, %301 : vector<32x256xf32>
    %c0_115 = arith.constant 0 : index
    %c38 = arith.constant 38 : index
    %303 = vector.load %arg2[%c0_115, %c38] : memref<32x49xf32, #tpu.memory_space<vmem>>, vector<32x1xf32>
    %c224_i32 = arith.constant 224 : i32
    %304 = tpu.dynamic_rotate %1 by %c224_i32 dim 1 : vector<32x256xf32>, i32 -> vector<32x256xf32>
    %c38_116 = arith.constant 38 : index
    %c0_117 = arith.constant 0 : index
    %305 = vector.load %arg3[%c38_116, %c0_117] : memref<49x256xf32, #tpu.memory_space<vmem>>, vector<1x256xf32>
    %306 = vector.broadcast %305 : vector<1x256xf32> to vector<32x256xf32>
    %307 = arith.mulf %304, %306 : vector<32x256xf32>
    %308 = vector.broadcast %303 : vector<32x1xf32> to vector<32x256xf32>
    %309 = arith.mulf %307, %308 : vector<32x256xf32>
    %310 = arith.addf %302, %309 : vector<32x256xf32>
    %c0_118 = arith.constant 0 : index
    %c39 = arith.constant 39 : index
    %311 = vector.load %arg2[%c0_118, %c39] : memref<32x49xf32, #tpu.memory_space<vmem>>, vector<32x1xf32>
    %c223_i32 = arith.constant 223 : i32
    %312 = tpu.dynamic_rotate %1 by %c223_i32 dim 1 : vector<32x256xf32>, i32 -> vector<32x256xf32>
    %c39_119 = arith.constant 39 : index
    %c0_120 = arith.constant 0 : index
    %313 = vector.load %arg3[%c39_119, %c0_120] : memref<49x256xf32, #tpu.memory_space<vmem>>, vector<1x256xf32>
    %314 = vector.broadcast %313 : vector<1x256xf32> to vector<32x256xf32>
    %315 = arith.mulf %312, %314 : vector<32x256xf32>
    %316 = vector.broadcast %311 : vector<32x1xf32> to vector<32x256xf32>
    %317 = arith.mulf %315, %316 : vector<32x256xf32>
    %318 = arith.addf %310, %317 : vector<32x256xf32>
    %c0_121 = arith.constant 0 : index
    %c40 = arith.constant 40 : index
    %319 = vector.load %arg2[%c0_121, %c40] : memref<32x49xf32, #tpu.memory_space<vmem>>, vector<32x1xf32>
    %c222_i32 = arith.constant 222 : i32
    %320 = tpu.dynamic_rotate %1 by %c222_i32 dim 1 : vector<32x256xf32>, i32 -> vector<32x256xf32>
    %c40_122 = arith.constant 40 : index
    %c0_123 = arith.constant 0 : index
    %321 = vector.load %arg3[%c40_122, %c0_123] : memref<49x256xf32, #tpu.memory_space<vmem>>, vector<1x256xf32>
    %322 = vector.broadcast %321 : vector<1x256xf32> to vector<32x256xf32>
    %323 = arith.mulf %320, %322 : vector<32x256xf32>
    %324 = vector.broadcast %319 : vector<32x1xf32> to vector<32x256xf32>
    %325 = arith.mulf %323, %324 : vector<32x256xf32>
    %326 = arith.addf %318, %325 : vector<32x256xf32>
    %c0_124 = arith.constant 0 : index
    %c41 = arith.constant 41 : index
    %327 = vector.load %arg2[%c0_124, %c41] : memref<32x49xf32, #tpu.memory_space<vmem>>, vector<32x1xf32>
    %c221_i32 = arith.constant 221 : i32
    %328 = tpu.dynamic_rotate %1 by %c221_i32 dim 1 : vector<32x256xf32>, i32 -> vector<32x256xf32>
    %c41_125 = arith.constant 41 : index
    %c0_126 = arith.constant 0 : index
    %329 = vector.load %arg3[%c41_125, %c0_126] : memref<49x256xf32, #tpu.memory_space<vmem>>, vector<1x256xf32>
    %330 = vector.broadcast %329 : vector<1x256xf32> to vector<32x256xf32>
    %331 = arith.mulf %328, %330 : vector<32x256xf32>
    %332 = vector.broadcast %327 : vector<32x1xf32> to vector<32x256xf32>
    %333 = arith.mulf %331, %332 : vector<32x256xf32>
    %334 = arith.addf %326, %333 : vector<32x256xf32>
    %c0_127 = arith.constant 0 : index
    %c42 = arith.constant 42 : index
    %335 = vector.load %arg2[%c0_127, %c42] : memref<32x49xf32, #tpu.memory_space<vmem>>, vector<32x1xf32>
    %c211_i32 = arith.constant 211 : i32
    %336 = tpu.dynamic_rotate %1 by %c211_i32 dim 1 : vector<32x256xf32>, i32 -> vector<32x256xf32>
    %c42_128 = arith.constant 42 : index
    %c0_129 = arith.constant 0 : index
    %337 = vector.load %arg3[%c42_128, %c0_129] : memref<49x256xf32, #tpu.memory_space<vmem>>, vector<1x256xf32>
    %338 = vector.broadcast %337 : vector<1x256xf32> to vector<32x256xf32>
    %339 = arith.mulf %336, %338 : vector<32x256xf32>
    %340 = vector.broadcast %335 : vector<32x1xf32> to vector<32x256xf32>
    %341 = arith.mulf %339, %340 : vector<32x256xf32>
    %342 = arith.addf %334, %341 : vector<32x256xf32>
    %c0_130 = arith.constant 0 : index
    %c43 = arith.constant 43 : index
    %343 = vector.load %arg2[%c0_130, %c43] : memref<32x49xf32, #tpu.memory_space<vmem>>, vector<32x1xf32>
    %c210_i32 = arith.constant 210 : i32
    %344 = tpu.dynamic_rotate %1 by %c210_i32 dim 1 : vector<32x256xf32>, i32 -> vector<32x256xf32>
    %c43_131 = arith.constant 43 : index
    %c0_132 = arith.constant 0 : index
    %345 = vector.load %arg3[%c43_131, %c0_132] : memref<49x256xf32, #tpu.memory_space<vmem>>, vector<1x256xf32>
    %346 = vector.broadcast %345 : vector<1x256xf32> to vector<32x256xf32>
    %347 = arith.mulf %344, %346 : vector<32x256xf32>
    %348 = vector.broadcast %343 : vector<32x1xf32> to vector<32x256xf32>
    %349 = arith.mulf %347, %348 : vector<32x256xf32>
    %350 = arith.addf %342, %349 : vector<32x256xf32>
    %c0_133 = arith.constant 0 : index
    %c44 = arith.constant 44 : index
    %351 = vector.load %arg2[%c0_133, %c44] : memref<32x49xf32, #tpu.memory_space<vmem>>, vector<32x1xf32>
    %c209_i32 = arith.constant 209 : i32
    %352 = tpu.dynamic_rotate %1 by %c209_i32 dim 1 : vector<32x256xf32>, i32 -> vector<32x256xf32>
    %c44_134 = arith.constant 44 : index
    %c0_135 = arith.constant 0 : index
    %353 = vector.load %arg3[%c44_134, %c0_135] : memref<49x256xf32, #tpu.memory_space<vmem>>, vector<1x256xf32>
    %354 = vector.broadcast %353 : vector<1x256xf32> to vector<32x256xf32>
    %355 = arith.mulf %352, %354 : vector<32x256xf32>
    %356 = vector.broadcast %351 : vector<32x1xf32> to vector<32x256xf32>
    %357 = arith.mulf %355, %356 : vector<32x256xf32>
    %358 = arith.addf %350, %357 : vector<32x256xf32>
    %c0_136 = arith.constant 0 : index
    %c45 = arith.constant 45 : index
    %359 = vector.load %arg2[%c0_136, %c45] : memref<32x49xf32, #tpu.memory_space<vmem>>, vector<32x1xf32>
    %c208_i32 = arith.constant 208 : i32
    %360 = tpu.dynamic_rotate %1 by %c208_i32 dim 1 : vector<32x256xf32>, i32 -> vector<32x256xf32>
    %c45_137 = arith.constant 45 : index
    %c0_138 = arith.constant 0 : index
    %361 = vector.load %arg3[%c45_137, %c0_138] : memref<49x256xf32, #tpu.memory_space<vmem>>, vector<1x256xf32>
    %362 = vector.broadcast %361 : vector<1x256xf32> to vector<32x256xf32>
    %363 = arith.mulf %360, %362 : vector<32x256xf32>
    %364 = vector.broadcast %359 : vector<32x1xf32> to vector<32x256xf32>
    %365 = arith.mulf %363, %364 : vector<32x256xf32>
    %366 = arith.addf %358, %365 : vector<32x256xf32>
    %c0_139 = arith.constant 0 : index
    %c46 = arith.constant 46 : index
    %367 = vector.load %arg2[%c0_139, %c46] : memref<32x49xf32, #tpu.memory_space<vmem>>, vector<32x1xf32>
    %c207_i32 = arith.constant 207 : i32
    %368 = tpu.dynamic_rotate %1 by %c207_i32 dim 1 : vector<32x256xf32>, i32 -> vector<32x256xf32>
    %c46_140 = arith.constant 46 : index
    %c0_141 = arith.constant 0 : index
    %369 = vector.load %arg3[%c46_140, %c0_141] : memref<49x256xf32, #tpu.memory_space<vmem>>, vector<1x256xf32>
    %370 = vector.broadcast %369 : vector<1x256xf32> to vector<32x256xf32>
    %371 = arith.mulf %368, %370 : vector<32x256xf32>
    %372 = vector.broadcast %367 : vector<32x1xf32> to vector<32x256xf32>
    %373 = arith.mulf %371, %372 : vector<32x256xf32>
    %374 = arith.addf %366, %373 : vector<32x256xf32>
    %c0_142 = arith.constant 0 : index
    %c47 = arith.constant 47 : index
    %375 = vector.load %arg2[%c0_142, %c47] : memref<32x49xf32, #tpu.memory_space<vmem>>, vector<32x1xf32>
    %c206_i32 = arith.constant 206 : i32
    %376 = tpu.dynamic_rotate %1 by %c206_i32 dim 1 : vector<32x256xf32>, i32 -> vector<32x256xf32>
    %c47_143 = arith.constant 47 : index
    %c0_144 = arith.constant 0 : index
    %377 = vector.load %arg3[%c47_143, %c0_144] : memref<49x256xf32, #tpu.memory_space<vmem>>, vector<1x256xf32>
    %378 = vector.broadcast %377 : vector<1x256xf32> to vector<32x256xf32>
    %379 = arith.mulf %376, %378 : vector<32x256xf32>
    %380 = vector.broadcast %375 : vector<32x1xf32> to vector<32x256xf32>
    %381 = arith.mulf %379, %380 : vector<32x256xf32>
    %382 = arith.addf %374, %381 : vector<32x256xf32>
    %c0_145 = arith.constant 0 : index
    %c48 = arith.constant 48 : index
    %383 = vector.load %arg2[%c0_145, %c48] : memref<32x49xf32, #tpu.memory_space<vmem>>, vector<32x1xf32>
    %c205_i32 = arith.constant 205 : i32
    %384 = tpu.dynamic_rotate %1 by %c205_i32 dim 1 : vector<32x256xf32>, i32 -> vector<32x256xf32>
    %c48_146 = arith.constant 48 : index
    %c0_147 = arith.constant 0 : index
    %385 = vector.load %arg3[%c48_146, %c0_147] : memref<49x256xf32, #tpu.memory_space<vmem>>, vector<1x256xf32>
    %386 = vector.broadcast %385 : vector<1x256xf32> to vector<32x256xf32>
    %387 = arith.mulf %384, %386 : vector<32x256xf32>
    %388 = vector.broadcast %383 : vector<32x1xf32> to vector<32x256xf32>
    %389 = arith.mulf %387, %388 : vector<32x256xf32>
    %390 = arith.addf %382, %389 : vector<32x256xf32>
    %c0_148 = arith.constant 0 : index
    %c0_149 = arith.constant 0 : index
    %391 = vector.load %arg4[%c0_148, %c0_149] : memref<32x1xf32, #tpu.memory_space<vmem>>, vector<32x1xf32>
    %392 = vector.broadcast %391 : vector<32x1xf32> to vector<32x256xf32>
    %393 = arith.addf %390, %392 : vector<32x256xf32>
    %cst_150 = arith.constant dense<0.000000e+00> : vector<256xf32>
    %394 = vector.multi_reduction <add>, %393, %cst_150 [0] : vector<32x256xf32> to vector<256xf32>
    %395 = vector.shape_cast %394 : vector<256xf32> to vector<1x256xf32>
    %cst_151 = arith.constant 3.125000e-02 : f32
    %396 = vector.broadcast %cst_151 : f32 to vector<1x256xf32>
    %397 = arith.mulf %395, %396 : vector<1x256xf32>
    %398 = arith.mulf %393, %393 : vector<32x256xf32>
    %cst_152 = arith.constant dense<0.000000e+00> : vector<256xf32>
    %399 = vector.multi_reduction <add>, %398, %cst_152 [0] : vector<32x256xf32> to vector<256xf32>
    %400 = vector.shape_cast %399 : vector<256xf32> to vector<1x256xf32>
    %cst_153 = arith.constant 3.125000e-02 : f32
    %401 = vector.broadcast %cst_153 : f32 to vector<1x256xf32>
    %402 = arith.mulf %400, %401 : vector<1x256xf32>
    %403 = arith.mulf %397, %397 : vector<1x256xf32>
    %404 = arith.subf %402, %403 : vector<1x256xf32>
    %cst_154 = arith.constant 0.000000e+00 : f32
    %405 = vector.broadcast %cst_154 : f32 to vector<1x256xf32>
    %406 = arith.maximumf %404, %405 : vector<1x256xf32>
    %407 = vector.broadcast %397 : vector<1x256xf32> to vector<32x256xf32>
    %408 = arith.subf %393, %407 : vector<32x256xf32>
    %cst_155 = arith.constant 9.99999997E-7 : f32
    %409 = vector.broadcast %cst_155 : f32 to vector<1x256xf32>
    %410 = arith.addf %406, %409 : vector<1x256xf32>
    %411 = math.rsqrt %410 : vector<1x256xf32>
    %412 = vector.broadcast %411 : vector<1x256xf32> to vector<32x256xf32>
    %413 = arith.mulf %408, %412 : vector<32x256xf32>
    %c0_156 = arith.constant 0 : index
    %c0_157 = arith.constant 0 : index
    %414 = vector.load %arg5[%c0_156, %c0_157] : memref<32x1xf32, #tpu.memory_space<vmem>>, vector<32x1xf32>
    %415 = vector.broadcast %414 : vector<32x1xf32> to vector<32x256xf32>
    %416 = arith.mulf %413, %415 : vector<32x256xf32>
    %c0_158 = arith.constant 0 : index
    %c0_159 = arith.constant 0 : index
    %417 = vector.load %arg6[%c0_158, %c0_159] : memref<32x1xf32, #tpu.memory_space<vmem>>, vector<32x1xf32>
    %418 = vector.broadcast %417 : vector<32x1xf32> to vector<32x256xf32>
    %419 = arith.addf %416, %418 : vector<32x256xf32>
    %c0_160 = arith.constant 0 : index
    %c0_161 = arith.constant 0 : index
    %420 = vector.load %arg7[%c0_160, %c0_161] : memref<16x32xf32, #tpu.memory_space<vmem>>, vector<16x32xf32>
    %cst_162 = arith.constant dense<0.000000e+00> : vector<16x256xf32>
    %421 = tpu.matmul %420, %419, %cst_162 {dimension_numbers = #tpu.dot_dimension_numbers<[1], [0], [0], [1], [0, 0, 1, 1], [], []>} : vector<16x32xf32>, vector<32x256xf32>, vector<16x256xf32> -> vector<16x256xf32>
    %c0_163 = arith.constant 0 : index
    %c0_164 = arith.constant 0 : index
    %422 = vector.load %arg8[%c0_163, %c0_164] : memref<16x1xf32, #tpu.memory_space<vmem>>, vector<16x1xf32>
    %423 = vector.broadcast %422 : vector<16x1xf32> to vector<16x256xf32>
    %424 = arith.addf %421, %423 : vector<16x256xf32>
    %cst_165 = arith.constant 5.000000e-01 : f32
    %425 = vector.broadcast %cst_165 : f32 to vector<16x256xf32>
    %426 = arith.mulf %425, %424 : vector<16x256xf32>
    %cst_166 = arith.constant 0.707106769 : f32
    %427 = vector.broadcast %cst_166 : f32 to vector<16x256xf32>
    %428 = arith.mulf %424, %427 : vector<16x256xf32>
    %429 = math.erf %428 : vector<16x256xf32>
    %cst_167 = arith.constant 1.000000e+00 : f32
    %430 = vector.broadcast %cst_167 : f32 to vector<16x256xf32>
    %431 = arith.addf %430, %429 : vector<16x256xf32>
    %432 = arith.mulf %426, %431 : vector<16x256xf32>
    %c0_168 = arith.constant 0 : index
    %c0_169 = arith.constant 0 : index
    %433 = vector.load %arg9[%c0_168, %c0_169] : memref<32x16xf32, #tpu.memory_space<vmem>>, vector<32x16xf32>
    %cst_170 = arith.constant dense<0.000000e+00> : vector<32x256xf32>
    %434 = tpu.matmul %433, %432, %cst_170 {dimension_numbers = #tpu.dot_dimension_numbers<[1], [0], [0], [1], [0, 0, 1, 1], [], []>} : vector<32x16xf32>, vector<16x256xf32>, vector<32x256xf32> -> vector<32x256xf32>
    %c0_171 = arith.constant 0 : index
    %c0_172 = arith.constant 0 : index
    %435 = vector.load %arg10[%c0_171, %c0_172] : memref<32x1xf32, #tpu.memory_space<vmem>>, vector<32x1xf32>
    %436 = vector.broadcast %435 : vector<32x1xf32> to vector<32x256xf32>
    %437 = arith.addf %434, %436 : vector<32x256xf32>
    %c0_173 = arith.constant 0 : index
    %c0_174 = arith.constant 0 : index
    %c0_175 = arith.constant 0 : index
    %438 = vector.load %arg11[%c0_173, %c0_174, %c0_175] : memref<1x32x256xf32, #tpu.memory_space<vmem>>, vector<1x32x256xf32>
    %439 = vector.shape_cast %438 : vector<1x32x256xf32> to vector<32x256xf32>
    %440 = vector.shape_cast %437 : vector<32x256xf32> to vector<1x32x256xf32>
    tpu.vector_store %arg11[%c0_173, %c0_174, %c0_175], %440 {strides = array<i32>} : memref<1x32x256xf32, #tpu.memory_space<vmem>>, vector<1x32x256xf32>,
    return
  }
  func.func @transform_0(%arg0: i32) -> (i32, i32, i32) {
    %c0_i32 = arith.constant 0 : i32
    %c0_i32_0 = arith.constant 0 : i32
    %c0_i32_1 = arith.constant 0 : i32
    return %arg0, %c0_i32, %c0_i32_0 : i32, i32, i32
  }
  func.func @transform_1(%arg0: i32) -> (i32, i32) {
    %c0_i32 = arith.constant 0 : i32
    %c0_i32_0 = arith.constant 0 : i32
    %c0_i32_1 = arith.constant 0 : i32
    return %c0_i32, %c0_i32_0 : i32, i32
  }
  func.func @transform_2(%arg0: i32) -> (i32, i32) {
    %c0_i32 = arith.constant 0 : i32
    %c0_i32_0 = arith.constant 0 : i32
    %c0_i32_1 = arith.constant 0 : i32
    return %c0_i32, %c0_i32_0 : i32, i32
  }
  func.func @transform_3(%arg0: i32) -> (i32, i32) {
    %c0_i32 = arith.constant 0 : i32
    %c0_i32_0 = arith.constant 0 : i32
    %c0_i32_1 = arith.constant 0 : i32
    return %c0_i32, %c0_i32_0 : i32, i32
  }
  func.func @transform_4(%arg0: i32) -> (i32, i32) {
    %c0_i32 = arith.constant 0 : i32
    %c0_i32_0 = arith.constant 0 : i32
    %c0_i32_1 = arith.constant 0 : i32
    return %c0_i32, %c0_i32_0 : i32, i32
  }
  func.func @transform_5(%arg0: i32) -> (i32, i32) {
    %c0_i32 = arith.constant 0 : i32
    %c0_i32_0 = arith.constant 0 : i32
    %c0_i32_1 = arith.constant 0 : i32
    return %c0_i32, %c0_i32_0 : i32, i32
  }
  func.func @transform_6(%arg0: i32) -> (i32, i32) {
    %c0_i32 = arith.constant 0 : i32
    %c0_i32_0 = arith.constant 0 : i32
    %c0_i32_1 = arith.constant 0 : i32
    return %c0_i32, %c0_i32_0 : i32, i32
  }
  func.func @transform_7(%arg0: i32) -> (i32, i32) {
    %c0_i32 = arith.constant 0 : i32
    %c0_i32_0 = arith.constant 0 : i32
    %c0_i32_1 = arith.constant 0 : i32
    return %c0_i32, %c0_i32_0 : i32, i32
  }
  func.func @transform_8(%arg0: i32) -> (i32, i32) {
    %c0_i32 = arith.constant 0 : i32
    %c0_i32_0 = arith.constant 0 : i32
    %c0_i32_1 = arith.constant 0 : i32
    return %c0_i32, %c0_i32_0 : i32, i32
  }
  func.func @transform_9(%arg0: i32) -> (i32, i32) {
    %c0_i32 = arith.constant 0 : i32
    %c0_i32_0 = arith.constant 0 : i32
    %c0_i32_1 = arith.constant 0 : i32
    return %c0_i32, %c0_i32_0 : i32, i32
  }
  func.func @transform_10(%arg0: i32) -> (i32, i32, i32) {
    %c0_i32 = arith.constant 0 : i32
    %c0_i32_0 = arith.constant 0 : i32
    %c0_i32_1 = arith.constant 0 : i32
    return %arg0, %c0_i32, %c0_i32_0 : i32, i32, i32
  }
}

</mosaic_0001>

<llo_original>
// kernel: tpu_custom_call.1
$region0: #{tpu_custom_call.1}
  #allocation0 [shape = 'u32[]', space=smem, size = 0x4, offset = 0x4, fixed_abs, tag = 'smem constant byte address 0x4 - core index']
  #allocation1 [shape = 'u32[144,128]{1,0:T(1,128)}', space=vmem, size = 0x12000, scoped, tag = 'internal scratch']
  %s0 = inlined_call_operand.vmem [shape: f32[2,32,256], index: 0, kind: input, shape index: {}]
  %s1 = inlined_call_operand.vmem [shape: f32[32,49], index: 1, kind: input, shape index: {}]
  %s2 = inlined_call_operand.hbm [shape: f32[49,256], index: 2, kind: input, shape index: {}]
  %s3 = inlined_call_operand.vmem [shape: f32[32,1], index: 3, kind: input, shape index: {}]
  %s4 = inlined_call_operand.vmem [shape: f32[32,1], index: 4, kind: input, shape index: {}]
  %s5 = inlined_call_operand.vmem [shape: f32[32,1], index: 5, kind: input, shape index: {}]
  %s6 = inlined_call_operand.vmem [shape: f32[16,32], index: 6, kind: input, shape index: {}]
  %s7 = inlined_call_operand.vmem [shape: f32[16,1], index: 7, kind: input, shape index: {}]
  %s8 = inlined_call_operand.vmem [shape: f32[32,16], index: 8, kind: input, shape index: {}]
  %s9 = inlined_call_operand.vmem [shape: f32[32,1], index: 9, kind: input, shape index: {}]
  %s10 = inlined_call_operand.hbm [shape: f32[2,32,256], index: 10, kind: output, shape index: {}]
  %s11 = sld [smem:[#allocation0]]
  $region77: #{tpu_custom_call.1} parent=0
    _
  %s13 = ssub.s32 1, %s11
  %s14 = scalar_select 0, %s13, %s11
  $region1: #{tpu_custom_call.1} parent=0
    #allocation2 [shape = 'u8[57344]{0}', space=vmem, size = 0xe000, scoped, tag = 'input window, operand 2, single buffered']
    #allocation3 [shape = 's32[2]{0}', space=sflag, size = 0x8, scoped, tag = 'scoped memory for tpu_custom_call.1']
    #allocation4 [shape = 's32[2]{0}', space=sflag, size = 0x8, scoped, tag = 'scoped memory for tpu_custom_call.1']
    #allocation5 [shape = 'u8[65536]{0}', space=vmem, size = 0x10000, scoped, tag = 'output window, operand 0']
    %15 = vsyncpa [#allocation3], 0
    %16 = vsyncpa [#allocation4], 0
    %s17 = scalar_lea.sflag [#allocation4], 1
    %18 = vsyncpa %s17, 0
    loop: start=0, step=1, limit=4
    $region2: #{tpu_custom_call.1} parent=1 // loop_pre_header
      _
    $region3: #{tpu_custom_call.1} parent=1 // loop_header
      %s20 = sphi 0, %s24
      %p21 = scmp.ge.s32.totalorder %s20, 4
      %s30 = sphi 0, %s32
      %s33 = sphi 0, %s30
      %s34 = sphi 0, %s33
      %s50 = sphi 0, %s34
      %s54 = sphi 0, %s54
      %s56 = sphi 0, %s54
      %s57 = sphi 0, %s56
      %s71 = sphi 0, %s57
      %s75 = sphi 0, %s75
      %s77 = sphi 0, %s75
      %s78 = sphi 0, %s77
      %s92 = sphi 0, %s78
      %s96 = sphi 0, %s96
      %s98 = sphi 0, %s96
      %s99 = sphi 0, %s98
      %s113 = sphi 0, %s99
      %s117 = sphi 0, %s117
      %s119 = sphi 0, %s117
      %s120 = sphi 0, %s119
      %s134 = sphi 0, %s120
      %s138 = sphi 0, %s138
      %s140 = sphi 0, %s138
      %s141 = sphi 0, %s140
      %s155 = sphi 0, %s141
      %s159 = sphi 0, %s159
      %s161 = sphi 0, %s159
      %s162 = sphi 0, %s161
      %s176 = sphi 0, %s162
      %s180 = sphi 0, %s180
      %s182 = sphi 0, %s180
      %s183 = sphi 0, %s182
      %s197 = sphi 0, %s183
      %s201 = sphi 0, %s201
      %s203 = sphi 0, %s201
      %s204 = sphi 0, %s203
      %s218 = sphi 0, %s204
      %s222 = sphi 0, %s222
      %s224 = sphi 0, %s222
      %s225 = sphi 0, %s224
      %s239 = sphi 0, %s225
      %s245 = sphi 0, %s247
      %s248 = sphi 0, %s245
      %s249 = sphi 0, %s248
      %s265 = sphi 0, %s249
    $region4: #{tpu_custom_call.1} parent=1 // loop_header_branch
      %23 = sbr.rel (%p21) target = $region8
    $region5: #{tpu_custom_call.1} parent=1 // loop_body
      %s25 = ssub.s32 %s20, 1
      %s26 = ssub.s32 %s20, 2
      %s27 = sadd.s32 %s20, 1
      %s28 = ssub.s32 %s20, %s27
      %p29 = scmp.eq.s32.totalorder %s28, 0
      %s31 = sadd.s32 %s30, 1
      %s32 = scalar_select %p29, %s30, %s31
      %p35 = pneg %p29
      %p36 = scmp.eq.s32.totalorder %s20, 1
      %p37 = por %p35, %p36
      %p38 = scmp.ne.s32.totalorder %s30, %s33
      %p39 = scmp.eq.s32.totalorder %s20, 0
      %p40 = por %p38, %p39
      %p41 = scmp.ne.s32.totalorder %s30, %s33
      %p42 = scmp.eq.s32.totalorder %s25, 1
      %p43 = por %p41, %p42
      %p44 = scmp.ne.s32.totalorder %s33, %s34
      %p45 = scmp.eq.s32.totalorder %s25, 0
      %p46 = por %p44, %p45
      %p47 = scmp.ne.s32.totalorder %s33, %s34
      %p48 = scmp.eq.s32.totalorder %s26, 1
      %p49 = por %p47, %p48
      %p51 = scmp.ne.s32.totalorder %s34, %s50
      %p52 = scmp.eq.s32.totalorder %s26, 0
      %p53 = por %p51, %p52
      %s55 = sadd.s32 %s54, 1
      %p58 = scmp.eq.s32.totalorder %s20, 1
      %p59 = scmp.ne.s32.totalorder %s54, %s56
      %p60 = scmp.eq.s32.totalorder %s20, 0
      %p61 = por %p59, %p60
      %p62 = scmp.ne.s32.totalorder %s54, %s56
      %p63 = scmp.eq.s32.totalorder %s25, 1
      %p64 = por %p62, %p63
      %p65 = scmp.ne.s32.totalorder %s56, %s57
      %p66 = scmp.eq.s32.totalorder %s25, 0
      %p67 = por %p65, %p66
      %p68 = scmp.ne.s32.totalorder %s56, %s57
      %p69 = scmp.eq.s32.totalorder %s26, 1
      %p70 = por %p68, %p69
      %p72 = scmp.ne.s32.totalorder %s57, %s71
      %p73 = scmp.eq.s32.totalorder %s26, 0
      %p74 = por %p72, %p73
      %s76 = sadd.s32 %s75, 1
      %p79 = scmp.eq.s32.totalorder %s20, 1
      %p80 = scmp.ne.s32.totalorder %s75, %s77
      %p81 = scmp.eq.s32.totalorder %s20, 0
      %p82 = por %p80, %p81
      %p83 = scmp.ne.s32.totalorder %s75, %s77
      %p84 = scmp.eq.s32.totalorder %s25, 1
      %p85 = por %p83, %p84
      %p86 = scmp.ne.s32.totalorder %s77, %s78
      %p87 = scmp.eq.s32.totalorder %s25, 0
      %p88 = por %p86, %p87
      %p89 = scmp.ne.s32.totalorder %s77, %s78
      %p90 = scmp.eq.s32.totalorder %s26, 1
      %p91 = por %p89, %p90
      %p93 = scmp.ne.s32.totalorder %s78, %s92
      %p94 = scmp.eq.s32.totalorder %s26, 0
      %p95 = por %p93, %p94
      %s97 = sadd.s32 %s96, 1
      %p100 = scmp.eq.s32.totalorder %s20, 1
      %p101 = scmp.ne.s32.totalorder %s96, %s98
      %p102 = scmp.eq.s32.totalorder %s20, 0
      %p103 = por %p101, %p102
      %p104 = scmp.ne.s32.totalorder %s96, %s98
      %p105 = scmp.eq.s32.totalorder %s25, 1
      %p106 = por %p104, %p105
      %p107 = scmp.ne.s32.totalorder %s98, %s99
      %p108 = scmp.eq.s32.totalorder %s25, 0
      %p109 = por %p107, %p108
      %p110 = scmp.ne.s32.totalorder %s98, %s99
      %p111 = scmp.eq.s32.totalorder %s26, 1
      %p112 = por %p110, %p111
      %p114 = scmp.ne.s32.totalorder %s99, %s113
      %p115 = scmp.eq.s32.totalorder %s26, 0
      %p116 = por %p114, %p115
      %s118 = sadd.s32 %s117, 1
      %p121 = scmp.eq.s32.totalorder %s20, 1
      %p122 = scmp.ne.s32.totalorder %s117, %s119
      %p123 = scmp.eq.s32.totalorder %s20, 0
      %p124 = por %p122, %p123
      %p125 = scmp.ne.s32.totalorder %s117, %s119
      %p126 = scmp.eq.s32.totalorder %s25, 1
      %p127 = por %p125, %p126
      %p128 = scmp.ne.s32.totalorder %s119, %s120
      %p129 = scmp.eq.s32.totalorder %s25, 0
      %p130 = por %p128, %p129
      %p131 = scmp.ne.s32.totalorder %s119, %s120
      %p132 = scmp.eq.s32.totalorder %s26, 1
      %p133 = por %p131, %p132
      %p135 = scmp.ne.s32.totalorder %s120, %s134
      %p136 = scmp.eq.s32.totalorder %s26, 0
      %p137 = por %p135, %p136
      %s139 = sadd.s32 %s138, 1
      %p142 = scmp.eq.s32.totalorder %s20, 1
      %p143 = scmp.ne.s32.totalorder %s138, %s140
      %p144 = scmp.eq.s32.totalorder %s20, 0
      %p145 = por %p143, %p144
      %p146 = scmp.ne.s32.totalorder %s138, %s140
      %p147 = scmp.eq.s32.totalorder %s25, 1
      %p148 = por %p146, %p147
      %p149 = scmp.ne.s32.totalorder %s140, %s141
      %p150 = scmp.eq.s32.totalorder %s25, 0
      %p151 = por %p149, %p150
      %p152 = scmp.ne.s32.totalorder %s140, %s141
      %p153 = scmp.eq.s32.totalorder %s26, 1
      %p154 = por %p152, %p153
      %p156 = scmp.ne.s32.totalorder %s141, %s155
      %p157 = scmp.eq.s32.totalorder %s26, 0
      %p158 = por %p156, %p157
      %s160 = sadd.s32 %s159, 1
      %p163 = scmp.eq.s32.totalorder %s20, 1
      %p164 = scmp.ne.s32.totalorder %s159, %s161
      %p165 = scmp.eq.s32.totalorder %s20, 0
      %p166 = por %p164, %p165
      %p167 = scmp.ne.s32.totalorder %s159, %s161
      %p168 = scmp.eq.s32.totalorder %s25, 1
      %p169 = por %p167, %p168
      %p170 = scmp.ne.s32.totalorder %s161, %s162
      %p171 = scmp.eq.s32.totalorder %s25, 0
      %p172 = por %p170, %p171
      %p173 = scmp.ne.s32.totalorder %s161, %s162
      %p174 = scmp.eq.s32.totalorder %s26, 1
      %p175 = por %p173, %p174
      %p177 = scmp.ne.s32.totalorder %s162, %s176
      %p178 = scmp.eq.s32.totalorder %s26, 0
      %p179 = por %p177, %p178
      %s181 = sadd.s32 %s180, 1
      %p184 = scmp.eq.s32.totalorder %s20, 1
      %p185 = scmp.ne.s32.totalorder %s180, %s182
      %p186 = scmp.eq.s32.totalorder %s20, 0
      %p187 = por %p185, %p186
      %p188 = scmp.ne.s32.totalorder %s180, %s182
      %p189 = scmp.eq.s32.totalorder %s25, 1
      %p190 = por %p188, %p189
      %p191 = scmp.ne.s32.totalorder %s182, %s183
      %p192 = scmp.eq.s32.totalorder %s25, 0
      %p193 = por %p191, %p192
      %p194 = scmp.ne.s32.totalorder %s182, %s183
      %p195 = scmp.eq.s32.totalorder %s26, 1
      %p196 = por %p194, %p195
      %p198 = scmp.ne.s32.totalorder %s183, %s197
      %p199 = scmp.eq.s32.totalorder %s26, 0
      %p200 = por %p198, %p199
      %s202 = sadd.s32 %s201, 1
      %p205 = scmp.eq.s32.totalorder %s20, 1
      %p206 = scmp.ne.s32.totalorder %s201, %s203
      %p207 = scmp.eq.s32.totalorder %s20, 0
      %p208 = por %p206, %p207
      %p209 = scmp.ne.s32.totalorder %s201, %s203
      %p210 = scmp.eq.s32.totalorder %s25, 1
      %p211 = por %p209, %p210
      %p212 = scmp.ne.s32.totalorder %s203, %s204
      %p213 = scmp.eq.s32.totalorder %s25, 0
      %p214 = por %p212, %p213
      %p215 = scmp.ne.s32.totalorder %s203, %s204
      %p216 = scmp.eq.s32.totalorder %s26, 1
      %p217 = por %p215, %p216
      %p219 = scmp.ne.s32.totalorder %s204, %s218
      %p220 = scmp.eq.s32.totalorder %s26, 0
      %p221 = por %p219, %p220
      %s223 = sadd.s32 %s222, 1
      %p226 = scmp.eq.s32.totalorder %s20, 1
      %p227 = scmp.ne.s32.totalorder %s222, %s224
      %p228 = scmp.eq.s32.totalorder %s20, 0
      %p229 = por %p227, %p228
      %p230 = scmp.ne.s32.totalorder %s222, %s224
      %p231 = scmp.eq.s32.totalorder %s25, 1
      %p232 = por %p230, %p231
      %p233 = scmp.ne.s32.totalorder %s224, %s225
      %p234 = scmp.eq.s32.totalorder %s25, 0
      %p235 = por %p233, %p234
      %p236 = scmp.ne.s32.totalorder %s224, %s225
      %p237 = scmp.eq.s32.totalorder %s26, 1
      %p238 = por %p236, %p237
      %p240 = scmp.ne.s32.totalorder %s225, %s239
      %p241 = scmp.eq.s32.totalorder %s26, 0
      %p242 = por %p240, %p241
      %s243 = ssub.s32 %s20, %s27
      %p244 = scmp.eq.s32.totalorder %s243, 0
      %s246 = sadd.s32 %s245, 1
      %s247 = scalar_select %p244, %s245, %s246
      %p250 = pneg %p244
      %p251 = scmp.eq.s32.totalorder %s20, 1
      %p252 = por %p250, %p251
      %p253 = scmp.ne.s32.totalorder %s245, %s248
      %p254 = scmp.eq.s32.totalorder %s20, 0
      %p255 = por %p253, %p254
      %p256 = scmp.ne.s32.totalorder %s245, %s248
      %p257 = scmp.eq.s32.totalorder %s25, 1
      %p258 = por %p256, %p257
      %p259 = scmp.ne.s32.totalorder %s248, %s249
      %p260 = scmp.eq.s32.totalorder %s25, 0
      %p261 = por %p259, %p260
      %p262 = scmp.ne.s32.totalorder %s248, %s249
      %p263 = scmp.eq.s32.totalorder %s26, 1
      %p264 = por %p262, %p263
      %p266 = scmp.ne.s32.totalorder %s249, %s265
      %p267 = scmp.eq.s32.totalorder %s26, 0
      %p268 = por %p266, %p267
      %p269 = scmp.le.s32.totalorder 1, %s20
      %p270 = scmp.lt.s32.totalorder %s20, 3
      %p271 = pnand %p269, %p270
      %p272 = pneg %p271
      // Predicated region
      $region9: #{tpu_custom_call.1} parent=5 // pred_check
        _
      $region10: #{tpu_custom_call.1} parent=5 // pred_check_branch
        %274 = sbr.rel (%p271) target = $region12
      $region11: #{tpu_custom_call.1} parent=5 // pred_region
        %s275 = ssub.s32 %s20, 1
        // Predicated region
        $region13: #{tpu_custom_call.1} parent=11 // pred_check
          %p276 = pneg %p67
        $region14: #{tpu_custom_call.1} parent=11 // pred_check_branch
          %278 = sbr.rel (%p276) target = $region16
        $region15: #{tpu_custom_call.1} parent=11 // pred_region
          _
        $region16: #{tpu_custom_call.1} parent=11 // pred_fallthru
          _
        // Predicated region
        $region17: #{tpu_custom_call.1} parent=11 // pred_check
          %p279 = pneg %p88
        $region18: #{tpu_custom_call.1} parent=11 // pred_check_branch
          %281 = sbr.rel (%p279) target = $region20
        $region19: #{tpu_custom_call.1} parent=11 // pred_region
          %s283 = ssub.s32 1792, 1792
          %284 = vsyncadd [#allocation3], %s283
          %s285 = sshll.u32 [#allocation2], 4
          %s286 = int_to_ptr.vmem [resolvable:$true] %s285
          %291 = dma.hbm_to_vmem [thread:$0]  %s2, 1792, %s286, [#allocation3], 256, 256, 16
        $region20: #{tpu_custom_call.1} parent=11 // pred_fallthru
          _
        // Predicated region
        $region21: #{tpu_custom_call.1} parent=11 // pred_check
          %p292 = pneg %p109
        $region22: #{tpu_custom_call.1} parent=11 // pred_check_branch
          %294 = sbr.rel (%p292) target = $region24
        $region23: #{tpu_custom_call.1} parent=11 // pred_region
          _
        $region24: #{tpu_custom_call.1} parent=11 // pred_fallthru
          _
        // Predicated region
        $region25: #{tpu_custom_call.1} parent=11 // pred_check
          %p295 = pneg %p130
        $region26: #{tpu_custom_call.1} parent=11 // pred_check_branch
          %297 = sbr.rel (%p295) target = $region28
        $region27: #{tpu_custom_call.1} parent=11 // pred_region
          _
        $region28: #{tpu_custom_call.1} parent=11 // pred_fallthru
          _
        // Predicated region
        $region29: #{tpu_custom_call.1} parent=11 // pred_check
          %p298 = pneg %p151
        $region30: #{tpu_custom_call.1} parent=11 // pred_check_branch
          %300 = sbr.rel (%p298) target = $region32
        $region31: #{tpu_custom_call.1} parent=11 // pred_region
          _
        $region32: #{tpu_custom_call.1} parent=11 // pred_fallthru
          _
        // Predicated region
        $region33: #{tpu_custom_call.1} parent=11 // pred_check
          %p301 = pneg %p172
        $region34: #{tpu_custom_call.1} parent=11 // pred_check_branch
          %303 = sbr.rel (%p301) target = $region36
        $region35: #{tpu_custom_call.1} parent=11 // pred_region
          _
        $region36: #{tpu_custom_call.1} parent=11 // pred_fallthru
          _
        // Predicated region
        $region37: #{tpu_custom_call.1} parent=11 // pred_check
          %p304 = pneg %p193
        $region38: #{tpu_custom_call.1} parent=11 // pred_check_branch
          %306 = sbr.rel (%p304) target = $region40
        $region39: #{tpu_custom_call.1} parent=11 // pred_region
          _
        $region40: #{tpu_custom_call.1} parent=11 // pred_fallthru
          _
        // Predicated region
        $region41: #{tpu_custom_call.1} parent=11 // pred_check
          %p307 = pneg %p214
        $region42: #{tpu_custom_call.1} parent=11 // pred_check_branch
          %309 = sbr.rel (%p307) target = $region44
        $region43: #{tpu_custom_call.1} parent=11 // pred_region
          _
        $region44: #{tpu_custom_call.1} parent=11 // pred_fallthru
          _
        // Predicated region
        $region45: #{tpu_custom_call.1} parent=11 // pred_check
          %p310 = pneg %p235
        $region46: #{tpu_custom_call.1} parent=11 // pred_check_branch
          %312 = sbr.rel (%p310) target = $region48
        $region47: #{tpu_custom_call.1} parent=11 // pred_region
          _
        $region48: #{tpu_custom_call.1} parent=11 // pred_fallthru
          _
      $region12: #{tpu_custom_call.1} parent=5 // pred_fallthru
        _
      %p313 = scmp.lt.s32.totalorder %s20, 2
      // Predicated region
      $region49: #{tpu_custom_call.1} parent=5 // pred_check
        %p314 = pneg %p313
      $region50: #{tpu_custom_call.1} parent=5 // pred_check_branch
        %316 = sbr.rel (%p314) target = $region52
      $region51: #{tpu_custom_call.1} parent=5 // pred_region
        // Predicated region
        $region53: #{tpu_custom_call.1} parent=51 // pred_check
          %p317 = pneg %p40
        $region54: #{tpu_custom_call.1} parent=51 // pred_check_branch
          %319 = sbr.rel (%p317) target = $region56
        $region55: #{tpu_custom_call.1} parent=51 // pred_region
          %p320 = scmp.lt.s32.totalorder %s20, 1
          %s321 = scalar_select %p320, %s20, 1
          %s322 = smul.addr %s321, 8
          %s323 = smul.addr %s322, 8
          %s324 = scalar_lea.vmem %s0, %s323
        $region56: #{tpu_custom_call.1} parent=51 // pred_fallthru
          _
      $region52: #{tpu_custom_call.1} parent=5 // pred_fallthru
        _
      %p325 = scmp.le.s32.totalorder 1, %s20
      %p326 = scmp.lt.s32.totalorder %s20, 3
      %p327 = pnand %p325, %p326
      %p328 = pneg %p327
      // Predicated region
      $region57: #{tpu_custom_call.1} parent=5 // pred_check
        _
      $region58: #{tpu_custom_call.1} parent=5 // pred_check_branch
        %330 = sbr.rel (%p327) target = $region60
      $region59: #{tpu_custom_call.1} parent=5 // pred_region
        %s331 = ssub.s32 %s20, 1
        // Predicated region
        $region61: #{tpu_custom_call.1} parent=59 // pred_check
          %p332 = pneg %p88
        $region62: #{tpu_custom_call.1} parent=59 // pred_check_branch
          %334 = sbr.rel (%p332) target = $region64
        $region63: #{tpu_custom_call.1} parent=59 // pred_region
          %335 = dma.done [#allocation3], 1792
        $region64: #{tpu_custom_call.1} parent=59 // pred_fallthru
          _
        %p336 = scmp.lt.s32.totalorder %s25, 1
        %s337 = scalar_select %p336, %s25, 1
        %s338 = smul.addr %s337, 8
        %s339 = smul.addr %s338, 8
        %s340 = scalar_lea.vmem %s0, %s339
        %p341 = pneg %p46
        %p342 = pneg %p43
        %p343 = pneg %p67
        %p344 = pneg %p64
        %p345 = pneg %p88
        %p346 = pneg %p85
        %p347 = pneg %p109
        %p348 = pneg %p106
        %p349 = pneg %p130
        %p350 = pneg %p127
        %p351 = pneg %p151
        %p352 = pneg %p148
        %p353 = pneg %p172
        %p354 = pneg %p169
        %p355 = pneg %p193
        %p356 = pneg %p190
        %p357 = pneg %p214
        %p358 = pneg %p211
        %p359 = pneg %p235
        %p360 = pneg %p232
        %p361 = pneg %p261
        %p362 = pneg %p258
        %s363 = sand.u32 %s248, 1
        %s364 = scalar_lea.sflag [#allocation4], %s363
        %s365 = sand.u32 %s248, 1
        %s366 = smul.addr %s365, 64
        %s367 = scalar_lea.vmem [#allocation5], %s366
        %p368 = scmp.lt.s32.totalorder %s25, 1
        %s369 = scalar_select %p368, %s25, 1
        %s370 = smul.addr %s369, 8
        %s371 = smul.addr %s370, 8
        %s372 = scalar_lea.vmem %s0, %s371
        %v373 = vld [vmem:[%s372] sm:$0xff]
        %v374 = vld [vmem:[%s372 + $0x8] sm:$0xff]
        %v375 = vld [vmem:[%s372 + $0x10] sm:$0xff]
        %v376 = vld [vmem:[%s372 + $0x18] sm:$0xff]
        %v377 = vld [vmem:[%s372 + $0x20] sm:$0xff]
        %v378 = vld [vmem:[%s372 + $0x28] sm:$0xff]
        %v379 = vld [vmem:[%s372 + $0x30] sm:$0xff]
        %v380 = vld [vmem:[%s372 + $0x38] sm:$0xff]
        %v381 = vld [vmem:[%s1] sm:$0xff]
        %v382 = vld [vmem:[%s1 + $0x8] sm:$0xff]
        %v383 = vld [vmem:[%s1 + $0x10] sm:$0xff]
        %v384 = vld [vmem:[%s1 + $0x18] sm:$0xff]
        %385 = vrot.lane.b32.xlu0 %v373, 51
        %v386 = vpop.permute.xlu0 %385
        %387 = vrot.lane.b32.xlu0 %v375, 51
        %v388 = vpop.permute.xlu0 %387
        %389 = vrot.lane.b32.xlu0 %v377, 51
        %v390 = vpop.permute.xlu0 %389
        %391 = vrot.lane.b32.xlu0 %v379, 51
        %v392 = vpop.permute.xlu0 %391
        %393 = vrot.lane.b32.xlu0 %v374, 51
        %v394 = vpop.permute.xlu0 %393
        %395 = vrot.lane.b32.xlu0 %v376, 51
        %v396 = vpop.permute.xlu0 %395
        %397 = vrot.lane.b32.xlu0 %v378, 51
        %v398 = vpop.permute.xlu0 %397
        %399 = vrot.lane.b32.xlu0 %v380, 51
        %v400 = vpop.permute.xlu0 %399
        %v401 = vlaneseq
        %v402 = vand.u32 %v401, 127
        %vm403 = vcmp.lt.s32.totalorder %v402, 51
        %v404 = vsel %vm403, %v386, %v394
        %v405 = vsel %vm403, %v388, %v396
        %v406 = vsel %vm403, %v390, %v398
        %v407 = vsel %vm403, %v392, %v400
        %v408 = vsel %vm403, %v394, %v386
        %v409 = vsel %vm403, %v396, %v388
        %v410 = vsel %vm403, %v398, %v390
        %v411 = vsel %vm403, %v400, %v392
        %v412 = vld [vmem:[#allocation2] ss:$8 sm:$0x3]
        %v414 = vlaneseq
        %v415 = vshrl.u32 %v414, 7
        %v416 = vsub.s32 0, %v415
        %v417 = vrot.slane %v412, %v416
        %v418 = vlaneseq
        %v419 = vshrl.u32 %v418, 7
        %v420 = vsub.s32 1, %v419
        %v421 = vrot.slane %v412, %v420
        %v424 = vmul.f32 %v408, %v417
        %v425 = vmul.f32 %v404, %v421
        %v426 = vmul.f32 %v409, %v417
        %v427 = vmul.f32 %v405, %v421
        %v428 = vmul.f32 %v410, %v417
        %v429 = vmul.f32 %v406, %v421
        %v430 = vmul.f32 %v411, %v417
        %v431 = vmul.f32 %v407, %v421
        %433 = vset.pattern.permute.xlu0 0
        %434 = vperm.xlu0 %433, %v381
        %v435 = vpop.permute.xlu0 %434
        %438 = vset.pattern.permute.xlu0 0
        %439 = vperm.xlu0 %438, %v382
        %v440 = vpop.permute.xlu0 %439
        %443 = vset.pattern.permute.xlu0 0
        %444 = vperm.xlu0 %443, %v383
        %v445 = vpop.permute.xlu0 %444
        %448 = vset.pattern.permute.xlu0 0
        %449 = vperm.xlu0 %448, %v384
        %v450 = vpop.permute.xlu0 %449
        %v452 = vmul.f32 %v424, %v435
        %v453 = vmul.f32 %v425, %v435
        %v454 = vmul.f32 %v426, %v440
        %v455 = vmul.f32 %v427, %v440
        %v456 = vmul.f32 %v428, %v445
        %v457 = vmul.f32 %v429, %v445
        %v458 = vmul.f32 %v430, %v450
        %v459 = vmul.f32 %v431, %v450
        %v460 = vadd.f32 %v452, 0.0
        %v461 = vadd.f32 %v453, 0.0
        %v462 = vadd.f32 %v454, 0.0
        %v463 = vadd.f32 %v455, 0.0
        %v464 = vadd.f32 %v456, 0.0
        %v465 = vadd.f32 %v457, 0.0
        %v466 = vadd.f32 %v458, 0.0
        %v467 = vadd.f32 %v459, 0.0
        %468 = vrot.lane.b32.xlu0 %v373, 50
        %v469 = vpop.permute.xlu0 %468
        %470 = vrot.lane.b32.xlu0 %v375, 50
        %v471 = vpop.permute.xlu0 %470
        %472 = vrot.lane.b32.xlu0 %v377, 50
        %v473 = vpop.permute.xlu0 %472
        %474 = vrot.lane.b32.xlu0 %v379, 50
        %v475 = vpop.permute.xlu0 %474
        %476 = vrot.lane.b32.xlu0 %v374, 50
        %v477 = vpop.permute.xlu0 %476
        %478 = vrot.lane.b32.xlu0 %v376, 50
        %v479 = vpop.permute.xlu0 %478
        %480 = vrot.lane.b32.xlu0 %v378, 50
        %v481 = vpop.permute.xlu0 %480
        %482 = vrot.lane.b32.xlu0 %v380, 50
        %v483 = vpop.permute.xlu0 %482
        %vm484 = vcmp.lt.s32.totalorder %v402, 50
        %v485 = vsel %vm484, %v469, %v477
        %v486 = vsel %vm484, %v471, %v479
        %v487 = vsel %vm484, %v473, %v481
        %v488 = vsel %vm484, %v475, %v483
        %v489 = vsel %vm484, %v477, %v469
        %v490 = vsel %vm484, %v479, %v471
        %v491 = vsel %vm484, %v481, %v473
        %v492 = vsel %vm484, %v483, %v475
        %s493 = scalar_lea.vmem [#allocation2], 1
        %v494 = vld [vmem:[%s493] ss:$8 sm:$0x3]
        %v496 = vlaneseq
        %v497 = vshrl.u32 %v496, 7
        %v498 = vsub.s32 0, %v497
        %v499 = vrot.slane %v494, %v498
        %v500 = vlaneseq
        %v501 = vshrl.u32 %v500, 7
        %v502 = vsub.s32 1, %v501
        %v503 = vrot.slane %v494, %v502
        %v506 = vmul.f32 %v489, %v499
        %v507 = vmul.f32 %v485, %v503
        %v508 = vmul.f32 %v490, %v499
        %v509 = vmul.f32 %v486, %v503
        %v510 = vmul.f32 %v491, %v499
        %v511 = vmul.f32 %v487, %v503
        %v512 = vmul.f32 %v492, %v499
        %v513 = vmul.f32 %v488, %v503
        %514 = vset.pattern.permute.xlu0 1
        %515 = vperm.xlu0 %514, %v381
        %v516 = vpop.permute.xlu0 %515
        %518 = vset.pattern.permute.xlu0 1
        %519 = vperm.xlu0 %518, %v382
        %v520 = vpop.permute.xlu0 %519
        %522 = vset.pattern.permute.xlu0 1
        %523 = vperm.xlu0 %522, %v383
        %v524 = vpop.permute.xlu0 %523
        %526 = vset.pattern.permute.xlu0 1
        %527 = vperm.xlu0 %526, %v384
        %v528 = vpop.permute.xlu0 %527
        %v530 = vmul.f32 %v506, %v516
        %v531 = vmul.f32 %v507, %v516
        %v532 = vmul.f32 %v508, %v520
        %v533 = vmul.f32 %v509, %v520
        %v534 = vmul.f32 %v510, %v524
        %v535 = vmul.f32 %v511, %v524
        %v536 = vmul.f32 %v512, %v528
        %v537 = vmul.f32 %v513, %v528
        %v538 = vadd.f32 %v460, %v530
        %v539 = vadd.f32 %v461, %v531
        %v540 = vadd.f32 %v462, %v532
        %v541 = vadd.f32 %v463, %v533
        %v542 = vadd.f32 %v464, %v534
        %v543 = vadd.f32 %v465, %v535
        %v544 = vadd.f32 %v466, %v536
        %v545 = vadd.f32 %v467, %v537
        %546 = vrot.lane.b32.xlu0 %v373, 49
        %v547 = vpop.permute.xlu0 %546
        %548 = vrot.lane.b32.xlu0 %v375, 49
        %v549 = vpop.permute.xlu0 %548
        %550 = vrot.lane.b32.xlu0 %v377, 49
        %v551 = vpop.permute.xlu0 %550
        %552 = vrot.lane.b32.xlu0 %v379, 49
        %v553 = vpop.permute.xlu0 %552
        %554 = vrot.lane.b32.xlu0 %v374, 49
        %v555 = vpop.permute.xlu0 %554
        %556 = vrot.lane.b32.xlu0 %v376, 49
        %v557 = vpop.permute.xlu0 %556
        %558 = vrot.lane.b32.xlu0 %v378, 49
        %v559 = vpop.permute.xlu0 %558
        %560 = vrot.lane.b32.xlu0 %v380, 49
        %v561 = vpop.permute.xlu0 %560
        %vm562 = vcmp.lt.s32.totalorder %v402, 49
        %v563 = vsel %vm562, %v547, %v555
        %v564 = vsel %vm562, %v549, %v557
        %v565 = vsel %vm562, %v551, %v559
        %v566 = vsel %vm562, %v553, %v561
        %v567 = vsel %vm562, %v555, %v547
        %v568 = vsel %vm562, %v557, %v549
        %v569 = vsel %vm562, %v559, %v551
        %v570 = vsel %vm562, %v561, %v553
        %s571 = scalar_lea.vmem [#allocation2], 2
        %v572 = vld [vmem:[%s571] ss:$8 sm:$0x3]
        %v574 = vlaneseq
        %v575 = vshrl.u32 %v574, 7
        %v576 = vsub.s32 0, %v575
        %v577 = vrot.slane %v572, %v576
        %v578 = vlaneseq
        %v579 = vshrl.u32 %v578, 7
        %v580 = vsub.s32 1, %v579
        %v581 = vrot.slane %v572, %v580
        %v584 = vmul.f32 %v567, %v577
        %v585 = vmul.f32 %v563, %v581
        %v586 = vmul.f32 %v568, %v577
        %v587 = vmul.f32 %v564, %v581
        %v588 = vmul.f32 %v569, %v577
        %v589 = vmul.f32 %v565, %v581
        %v590 = vmul.f32 %v570, %v577
        %v591 = vmul.f32 %v566, %v581
        %592 = vset.pattern.permute.xlu0 2
        %593 = vperm.xlu0 %592, %v381
        %v594 = vpop.permute.xlu0 %593
        %596 = vset.pattern.permute.xlu0 2
        %597 = vperm.xlu0 %596, %v382
        %v598 = vpop.permute.xlu0 %597
        %600 = vset.pattern.permute.xlu0 2
        %601 = vperm.xlu0 %600, %v383
        %v602 = vpop.permute.xlu0 %601
        %604 = vset.pattern.permute.xlu0 2
        %605 = vperm.xlu0 %604, %v384
        %v606 = vpop.permute.xlu0 %605
        %v608 = vmul.f32 %v584, %v594
        %v609 = vmul.f32 %v585, %v594
        %v610 = vmul.f32 %v586, %v598
        %v611 = vmul.f32 %v587, %v598
        %v612 = vmul.f32 %v588, %v602
        %v613 = vmul.f32 %v589, %v602
        %v614 = vmul.f32 %v590, %v606
        %v615 = vmul.f32 %v591, %v606
        %v616 = vadd.f32 %v538, %v608
        %v617 = vadd.f32 %v539, %v609
        %v618 = vadd.f32 %v540, %v610
        %v619 = vadd.f32 %v541, %v611
        %v620 = vadd.f32 %v542, %v612
        %v621 = vadd.f32 %v543, %v613
        %v622 = vadd.f32 %v544, %v614
        %v623 = vadd.f32 %v545, %v615
        %624 = vrot.lane.b32.xlu0 %v373, 48
        %v625 = vpop.permute.xlu0 %624
        %626 = vrot.lane.b32.xlu0 %v375, 48
        %v627 = vpop.permute.xlu0 %626
        %628 = vrot.lane.b32.xlu0 %v377, 48
        %v629 = vpop.permute.xlu0 %628
        %630 = vrot.lane.b32.xlu0 %v379, 48
        %v631 = vpop.permute.xlu0 %630
        %632 = vrot.lane.b32.xlu0 %v374, 48
        %v633 = vpop.permute.xlu0 %632
        %634 = vrot.lane.b32.xlu0 %v376, 48
        %v635 = vpop.permute.xlu0 %634
        %636 = vrot.lane.b32.xlu0 %v378, 48
        %v637 = vpop.permute.xlu0 %636
        %638 = vrot.lane.b32.xlu0 %v380, 48
        %v639 = vpop.permute.xlu0 %638
        %vm640 = vcmp.lt.s32.totalorder %v402, 48
        %v641 = vsel %vm640, %v625, %v633
        %v642 = vsel %vm640, %v627, %v635
        %v643 = vsel %vm640, %v629, %v637
        %v644 = vsel %vm640, %v631, %v639
        %v645 = vsel %vm640, %v633, %v625
        %v646 = vsel %vm640, %v635, %v627
        %v647 = vsel %vm640, %v637, %v629
        %v648 = vsel %vm640, %v639, %v631
        %s649 = scalar_lea.vmem [#allocation2], 3
        %v650 = vld [vmem:[%s649] ss:$8 sm:$0x3]
        %v652 = vlaneseq
        %v653 = vshrl.u32 %v652, 7
        %v654 = vsub.s32 0, %v653
        %v655 = vrot.slane %v650, %v654
        %v656 = vlaneseq
        %v657 = vshrl.u32 %v656, 7
        %v658 = vsub.s32 1, %v657
        %v659 = vrot.slane %v650, %v658
        %v662 = vmul.f32 %v645, %v655
        %v663 = vmul.f32 %v641, %v659
        %v664 = vmul.f32 %v646, %v655
        %v665 = vmul.f32 %v642, %v659
        %v666 = vmul.f32 %v647, %v655
        %v667 = vmul.f32 %v643, %v659
        %v668 = vmul.f32 %v648, %v655
        %v669 = vmul.f32 %v644, %v659
        %670 = vset.pattern.permute.xlu0 3
        %671 = vperm.xlu0 %670, %v381
        %v672 = vpop.permute.xlu0 %671
        %674 = vset.pattern.permute.xlu0 3
        %675 = vperm.xlu0 %674, %v382
        %v676 = vpop.permute.xlu0 %675
        %678 = vset.pattern.permute.xlu0 3
        %679 = vperm.xlu0 %678, %v383
        %v680 = vpop.permute.xlu0 %679
        %682 = vset.pattern.permute.xlu0 3
        %683 = vperm.xlu0 %682, %v384
        %v684 = vpop.permute.xlu0 %683
        %v686 = vmul.f32 %v662, %v672
        %v687 = vmul.f32 %v663, %v672
        %v688 = vmul.f32 %v664, %v676
        %v689 = vmul.f32 %v665, %v676
        %v690 = vmul.f32 %v666, %v680
        %v691 = vmul.f32 %v667, %v680
        %v692 = vmul.f32 %v668, %v684
        %v693 = vmul.f32 %v669, %v684
        %v694 = vadd.f32 %v616, %v686
        %v695 = vadd.f32 %v617, %v687
        %v696 = vadd.f32 %v618, %v688
        %v697 = vadd.f32 %v619, %v689
        %v698 = vadd.f32 %v620, %v690
        %v699 = vadd.f32 %v621, %v691
        %v700 = vadd.f32 %v622, %v692
        %v701 = vadd.f32 %v623, %v693
        %702 = vrot.lane.b32.xlu0 %v373, 47
        %v703 = vpop.permute.xlu0 %702
        %704 = vrot.lane.b32.xlu0 %v375, 47
        %v705 = vpop.permute.xlu0 %704
        %706 = vrot.lane.b32.xlu0 %v377, 47
        %v707 = vpop.permute.xlu0 %706
        %708 = vrot.lane.b32.xlu0 %v379, 47
        %v709 = vpop.permute.xlu0 %708
        %710 = vrot.lane.b32.xlu0 %v374, 47
        %v711 = vpop.permute.xlu0 %710
        %712 = vrot.lane.b32.xlu0 %v376, 47
        %v713 = vpop.permute.xlu0 %712
        %714 = vrot.lane.b32.xlu0 %v378, 47
        %v715 = vpop.permute.xlu0 %714
        %716 = vrot.lane.b32.xlu0 %v380, 47
        %v717 = vpop.permute.xlu0 %716
        %vm718 = vcmp.lt.s32.totalorder %v402, 47
        %v719 = vsel %vm718, %v703, %v711
        %v720 = vsel %vm718, %v705, %v713
        %v721 = vsel %vm718, %v707, %v715
        %v722 = vsel %vm718, %v709, %v717
        %v723 = vsel %vm718, %v711, %v703
        %v724 = vsel %vm718, %v713, %v705
        %v725 = vsel %vm718, %v715, %v707
        %v726 = vsel %vm718, %v717, %v709
        %s727 = scalar_lea.vmem [#allocation2], 4
        %v728 = vld [vmem:[%s727] ss:$8 sm:$0x3]
        %v730 = vlaneseq
        %v731 = vshrl.u32 %v730, 7
        %v732 = vsub.s32 0, %v731
        %v733 = vrot.slane %v728, %v732
        %v734 = vlaneseq
        %v735 = vshrl.u32 %v734, 7
        %v736 = vsub.s32 1, %v735
        %v737 = vrot.slane %v728, %v736
        %v740 = vmul.f32 %v723, %v733
        %v741 = vmul.f32 %v719, %v737
        %v742 = vmul.f32 %v724, %v733
        %v743 = vmul.f32 %v720, %v737
        %v744 = vmul.f32 %v725, %v733
        %v745 = vmul.f32 %v721, %v737
        %v746 = vmul.f32 %v726, %v733
        %v747 = vmul.f32 %v722, %v737
        %748 = vset.pattern.permute.xlu0 4
        %749 = vperm.xlu0 %748, %v381
        %v750 = vpop.permute.xlu0 %749
        %752 = vset.pattern.permute.xlu0 4
        %753 = vperm.xlu0 %752, %v382
        %v754 = vpop.permute.xlu0 %753
        %756 = vset.pattern.permute.xlu0 4
        %757 = vperm.xlu0 %756, %v383
        %v758 = vpop.permute.xlu0 %757
        %760 = vset.pattern.permute.xlu0 4
        %761 = vperm.xlu0 %760, %v384
        %v762 = vpop.permute.xlu0 %761
        %v764 = vmul.f32 %v740, %v750
        %v765 = vmul.f32 %v741, %v750
        %v766 = vmul.f32 %v742, %v754
        %v767 = vmul.f32 %v743, %v754
        %v768 = vmul.f32 %v744, %v758
        %v769 = vmul.f32 %v745, %v758
        %v770 = vmul.f32 %v746, %v762
        %v771 = vmul.f32 %v747, %v762
        %v772 = vadd.f32 %v694, %v764
        %v773 = vadd.f32 %v695, %v765
        %v774 = vadd.f32 %v696, %v766
        %v775 = vadd.f32 %v697, %v767
        %v776 = vadd.f32 %v698, %v768
        %v777 = vadd.f32 %v699, %v769
        %v778 = vadd.f32 %v700, %v770
        %v779 = vadd.f32 %v701, %v771
        %780 = vrot.lane.b32.xlu0 %v373, 46
        %v781 = vpop.permute.xlu0 %780
        %782 = vrot.lane.b32.xlu0 %v375, 46
        %v783 = vpop.permute.xlu0 %782
        %784 = vrot.lane.b32.xlu0 %v377, 46
        %v785 = vpop.permute.xlu0 %784
        %786 = vrot.lane.b32.xlu0 %v379, 46
        %v787 = vpop.permute.xlu0 %786
        %788 = vrot.lane.b32.xlu0 %v374, 46
        %v789 = vpop.permute.xlu0 %788
        %790 = vrot.lane.b32.xlu0 %v376, 46
        %v791 = vpop.permute.xlu0 %790
        %792 = vrot.lane.b32.xlu0 %v378, 46
        %v793 = vpop.permute.xlu0 %792
        %794 = vrot.lane.b32.xlu0 %v380, 46
        %v795 = vpop.permute.xlu0 %794
        %vm796 = vcmp.lt.s32.totalorder %v402, 46
        %v797 = vsel %vm796, %v781, %v789
        %v798 = vsel %vm796, %v783, %v791
        %v799 = vsel %vm796, %v785, %v793
        %v800 = vsel %vm796, %v787, %v795
        %v801 = vsel %vm796, %v789, %v781
        %v802 = vsel %vm796, %v791, %v783
        %v803 = vsel %vm796, %v793, %v785
        %v804 = vsel %vm796, %v795, %v787
        %s805 = scalar_lea.vmem [#allocation2], 5
        %v806 = vld [vmem:[%s805] ss:$8 sm:$0x3]
        %v808 = vlaneseq
        %v809 = vshrl.u32 %v808, 7
        %v810 = vsub.s32 0, %v809
        %v811 = vrot.slane %v806, %v810
        %v812 = vlaneseq
        %v813 = vshrl.u32 %v812, 7
        %v814 = vsub.s32 1, %v813
        %v815 = vrot.slane %v806, %v814
        %v818 = vmul.f32 %v801, %v811
        %v819 = vmul.f32 %v797, %v815
        %v820 = vmul.f32 %v802, %v811
        %v821 = vmul.f32 %v798, %v815
        %v822 = vmul.f32 %v803, %v811
        %v823 = vmul.f32 %v799, %v815
        %v824 = vmul.f32 %v804, %v811
        %v825 = vmul.f32 %v800, %v815
        %826 = vset.pattern.permute.xlu0 5
        %827 = vperm.xlu0 %826, %v381
        %v828 = vpop.permute.xlu0 %827
        %830 = vset.pattern.permute.xlu0 5
        %831 = vperm.xlu0 %830, %v382
        %v832 = vpop.permute.xlu0 %831
        %834 = vset.pattern.permute.xlu0 5
        %835 = vperm.xlu0 %834, %v383
        %v836 = vpop.permute.xlu0 %835
        %838 = vset.pattern.permute.xlu0 5
        %839 = vperm.xlu0 %838, %v384
        %v840 = vpop.permute.xlu0 %839
        %v842 = vmul.f32 %v818, %v828
        %v843 = vmul.f32 %v819, %v828
        %v844 = vmul.f32 %v820, %v832
        %v845 = vmul.f32 %v821, %v832
        %v846 = vmul.f32 %v822, %v836
        %v847 = vmul.f32 %v823, %v836
        %v848 = vmul.f32 %v824, %v840
        %v849 = vmul.f32 %v825, %v840
        %v850 = vadd.f32 %v772, %v842
        %v851 = vadd.f32 %v773, %v843
        %v852 = vadd.f32 %v774, %v844
        %v853 = vadd.f32 %v775, %v845
        %v854 = vadd.f32 %v776, %v846
        %v855 = vadd.f32 %v777, %v847
        %v856 = vadd.f32 %v778, %v848
        %v857 = vadd.f32 %v779, %v849
        %858 = vrot.lane.b32.xlu0 %v373, 45
        %v859 = vpop.permute.xlu0 %858
        %860 = vrot.lane.b32.xlu0 %v375, 45
        %v861 = vpop.permute.xlu0 %860
        %862 = vrot.lane.b32.xlu0 %v377, 45
        %v863 = vpop.permute.xlu0 %862
        %864 = vrot.lane.b32.xlu0 %v379, 45
        %v865 = vpop.permute.xlu0 %864
        %866 = vrot.lane.b32.xlu0 %v374, 45
        %v867 = vpop.permute.xlu0 %866
        %868 = vrot.lane.b32.xlu0 %v376, 45
        %v869 = vpop.permute.xlu0 %868
        %870 = vrot.lane.b32.xlu0 %v378, 45
        %v871 = vpop.permute.xlu0 %870
        %872 = vrot.lane.b32.xlu0 %v380, 45
        %v873 = vpop.permute.xlu0 %872
        %vm874 = vcmp.lt.s32.totalorder %v402, 45
        %v875 = vsel %vm874, %v859, %v867
        %v876 = vsel %vm874, %v861, %v869
        %v877 = vsel %vm874, %v863, %v871
        %v878 = vsel %vm874, %v865, %v873
        %v879 = vsel %vm874, %v867, %v859
        %v880 = vsel %vm874, %v869, %v861
        %v881 = vsel %vm874, %v871, %v863
        %v882 = vsel %vm874, %v873, %v865
        %s883 = scalar_lea.vmem [#allocation2], 6
        %v884 = vld [vmem:[%s883] ss:$8 sm:$0x3]
        %v886 = vlaneseq
        %v887 = vshrl.u32 %v886, 7
        %v888 = vsub.s32 0, %v887
        %v889 = vrot.slane %v884, %v888
        %v890 = vlaneseq
        %v891 = vshrl.u32 %v890, 7
        %v892 = vsub.s32 1, %v891
        %v893 = vrot.slane %v884, %v892
        %v896 = vmul.f32 %v879, %v889
        %v897 = vmul.f32 %v875, %v893
        %v898 = vmul.f32 %v880, %v889
        %v899 = vmul.f32 %v876, %v893
        %v900 = vmul.f32 %v881, %v889
        %v901 = vmul.f32 %v877, %v893
        %v902 = vmul.f32 %v882, %v889
        %v903 = vmul.f32 %v878, %v893
        %904 = vset.pattern.permute.xlu0 6
        %905 = vperm.xlu0 %904, %v381
        %v906 = vpop.permute.xlu0 %905
        %908 = vset.pattern.permute.xlu0 6
        %909 = vperm.xlu0 %908, %v382
        %v910 = vpop.permute.xlu0 %909
        %912 = vset.pattern.permute.xlu0 6
        %913 = vperm.xlu0 %912, %v383
        %v914 = vpop.permute.xlu0 %913
        %916 = vset.pattern.permute.xlu0 6
        %917 = vperm.xlu0 %916, %v384
        %v918 = vpop.permute.xlu0 %917
        %v920 = vmul.f32 %v896, %v906
        %v921 = vmul.f32 %v897, %v906
        %v922 = vmul.f32 %v898, %v910
        %v923 = vmul.f32 %v899, %v910
        %v924 = vmul.f32 %v900, %v914
        %v925 = vmul.f32 %v901, %v914
        %v926 = vmul.f32 %v902, %v918
        %v927 = vmul.f32 %v903, %v918
        %v928 = vadd.f32 %v850, %v920
        %v929 = vadd.f32 %v851, %v921
        %v930 = vadd.f32 %v852, %v922
        %v931 = vadd.f32 %v853, %v923
        %v932 = vadd.f32 %v854, %v924
        %v933 = vadd.f32 %v855, %v925
        %v934 = vadd.f32 %v856, %v926
        %v935 = vadd.f32 %v857, %v927
        %936 = vrot.lane.b32.xlu0 %v373, 35
        %v937 = vpop.permute.xlu0 %936
        %938 = vrot.lane.b32.xlu0 %v375, 35
        %v939 = vpop.permute.xlu0 %938
        %940 = vrot.lane.b32.xlu0 %v377, 35
        %v941 = vpop.permute.xlu0 %940
        %942 = vrot.lane.b32.xlu0 %v379, 35
        %v943 = vpop.permute.xlu0 %942
        %944 = vrot.lane.b32.xlu0 %v374, 35
        %v945 = vpop.permute.xlu0 %944
        %946 = vrot.lane.b32.xlu0 %v376, 35
        %v947 = vpop.permute.xlu0 %946
        %948 = vrot.lane.b32.xlu0 %v378, 35
        %v949 = vpop.permute.xlu0 %948
        %950 = vrot.lane.b32.xlu0 %v380, 35
        %v951 = vpop.permute.xlu0 %950
        %vm952 = vcmp.lt.s32.totalorder %v402, 35
        %v953 = vsel %vm952, %v937, %v945
        %v954 = vsel %vm952, %v939, %v947
        %v955 = vsel %vm952, %v941, %v949
        %v956 = vsel %vm952, %v943, %v951
        %v957 = vsel %vm952, %v945, %v937
        %v958 = vsel %vm952, %v947, %v939
        %v959 = vsel %vm952, %v949, %v941
        %v960 = vsel %vm952, %v951, %v943
        %s961 = scalar_lea.vmem [#allocation2], 7
        %v962 = vld [vmem:[%s961] ss:$8 sm:$0x3]
        %v964 = vlaneseq
        %v965 = vshrl.u32 %v964, 7
        %v966 = vsub.s32 0, %v965
        %v967 = vrot.slane %v962, %v966
        %v968 = vlaneseq
        %v969 = vshrl.u32 %v968, 7
        %v970 = vsub.s32 1, %v969
        %v971 = vrot.slane %v962, %v970
        %v974 = vmul.f32 %v957, %v967
        %v975 = vmul.f32 %v953, %v971
        %v976 = vmul.f32 %v958, %v967
        %v977 = vmul.f32 %v954, %v971
        %v978 = vmul.f32 %v959, %v967
        %v979 = vmul.f32 %v955, %v971
        %v980 = vmul.f32 %v960, %v967
        %v981 = vmul.f32 %v956, %v971
        %982 = vset.pattern.permute.xlu0 7
        %983 = vperm.xlu0 %982, %v381
        %v984 = vpop.permute.xlu0 %983
        %986 = vset.pattern.permute.xlu0 7
        %987 = vperm.xlu0 %986, %v382
        %v988 = vpop.permute.xlu0 %987
        %990 = vset.pattern.permute.xlu0 7
        %991 = vperm.xlu0 %990, %v383
        %v992 = vpop.permute.xlu0 %991
        %994 = vset.pattern.permute.xlu0 7
        %995 = vperm.xlu0 %994, %v384
        %v996 = vpop.permute.xlu0 %995
        %v998 = vmul.f32 %v974, %v984
        %v999 = vmul.f32 %v975, %v984
        %v1000 = vmul.f32 %v976, %v988
        %v1001 = vmul.f32 %v977, %v988
        %v1002 = vmul.f32 %v978, %v992
        %v1003 = vmul.f32 %v979, %v992
        %v1004 = vmul.f32 %v980, %v996
        %v1005 = vmul.f32 %v981, %v996
        %v1006 = vadd.f32 %v928, %v998
        %v1007 = vadd.f32 %v929, %v999
        %v1008 = vadd.f32 %v930, %v1000
        %v1009 = vadd.f32 %v931, %v1001
        %v1010 = vadd.f32 %v932, %v1002
        %v1011 = vadd.f32 %v933, %v1003
        %v1012 = vadd.f32 %v934, %v1004
        %v1013 = vadd.f32 %v935, %v1005
        %1014 = vrot.lane.b32.xlu0 %v373, 34
        %v1015 = vpop.permute.xlu0 %1014
        %1016 = vrot.lane.b32.xlu0 %v375, 34
        %v1017 = vpop.permute.xlu0 %1016
        %1018 = vrot.lane.b32.xlu0 %v377, 34
        %v1019 = vpop.permute.xlu0 %1018
        %1020 = vrot.lane.b32.xlu0 %v379, 34
        %v1021 = vpop.permute.xlu0 %1020
        %1022 = vrot.lane.b32.xlu0 %v374, 34
        %v1023 = vpop.permute.xlu0 %1022
        %1024 = vrot.lane.b32.xlu0 %v376, 34
        %v1025 = vpop.permute.xlu0 %1024
        %1026 = vrot.lane.b32.xlu0 %v378, 34
        %v1027 = vpop.permute.xlu0 %1026
        %1028 = vrot.lane.b32.xlu0 %v380, 34
        %v1029 = vpop.permute.xlu0 %1028
        %vm1030 = vcmp.lt.s32.totalorder %v402, 34
        %v1031 = vsel %vm1030, %v1015, %v1023
        %v1032 = vsel %vm1030, %v1017, %v1025
        %v1033 = vsel %vm1030, %v1019, %v1027
        %v1034 = vsel %vm1030, %v1021, %v1029
        %v1035 = vsel %vm1030, %v1023, %v1015
        %v1036 = vsel %vm1030, %v1025, %v1017
        %v1037 = vsel %vm1030, %v1027, %v1019
        %v1038 = vsel %vm1030, %v1029, %v1021
        %s1039 = scalar_lea.vmem [#allocation2], 16
        %v1040 = vld [vmem:[%s1039] ss:$8 sm:$0x3]
        %v1042 = vlaneseq
        %v1043 = vshrl.u32 %v1042, 7
        %v1044 = vsub.s32 0, %v1043
        %v1045 = vrot.slane %v1040, %v1044
        %v1046 = vlaneseq
        %v1047 = vshrl.u32 %v1046, 7
        %v1048 = vsub.s32 1, %v1047
        %v1049 = vrot.slane %v1040, %v1048
        %v1052 = vmul.f32 %v1035, %v1045
        %v1053 = vmul.f32 %v1031, %v1049
        %v1054 = vmul.f32 %v1036, %v1045
        %v1055 = vmul.f32 %v1032, %v1049
        %v1056 = vmul.f32 %v1037, %v1045
        %v1057 = vmul.f32 %v1033, %v1049
        %v1058 = vmul.f32 %v1038, %v1045
        %v1059 = vmul.f32 %v1034, %v1049
        %1060 = vset.pattern.permute.xlu0 8
        %1061 = vperm.xlu0 %1060, %v381
        %v1062 = vpop.permute.xlu0 %1061
        %1064 = vset.pattern.permute.xlu0 8
        %1065 = vperm.xlu0 %1064, %v382
        %v1066 = vpop.permute.xlu0 %1065
        %1068 = vset.pattern.permute.xlu0 8
        %1069 = vperm.xlu0 %1068, %v383
        %v1070 = vpop.permute.xlu0 %1069
        %1072 = vset.pattern.permute.xlu0 8
        %1073 = vperm.xlu0 %1072, %v384
        %v1074 = vpop.permute.xlu0 %1073
        %v1076 = vmul.f32 %v1052, %v1062
        %v1077 = vmul.f32 %v1053, %v1062
        %v1078 = vmul.f32 %v1054, %v1066
        %v1079 = vmul.f32 %v1055, %v1066
        %v1080 = vmul.f32 %v1056, %v1070
        %v1081 = vmul.f32 %v1057, %v1070
        %v1082 = vmul.f32 %v1058, %v1074
        %v1083 = vmul.f32 %v1059, %v1074
        %v1084 = vadd.f32 %v1006, %v1076
        %v1085 = vadd.f32 %v1007, %v1077
        %v1086 = vadd.f32 %v1008, %v1078
        %v1087 = vadd.f32 %v1009, %v1079
        %v1088 = vadd.f32 %v1010, %v1080
        %v1089 = vadd.f32 %v1011, %v1081
        %v1090 = vadd.f32 %v1012, %v1082
        %v1091 = vadd.f32 %v1013, %v1083
        %1092 = vrot.lane.b32.xlu0 %v373, 33
        %v1093 = vpop.permute.xlu0 %1092
        %1094 = vrot.lane.b32.xlu0 %v375, 33
        %v1095 = vpop.permute.xlu0 %1094
        %1096 = vrot.lane.b32.xlu0 %v377, 33
        %v1097 = vpop.permute.xlu0 %1096
        %1098 = vrot.lane.b32.xlu0 %v379, 33
        %v1099 = vpop.permute.xlu0 %1098
        %1100 = vrot.lane.b32.xlu0 %v374, 33
        %v1101 = vpop.permute.xlu0 %1100
        %1102 = vrot.lane.b32.xlu0 %v376, 33
        %v1103 = vpop.permute.xlu0 %1102
        %1104 = vrot.lane.b32.xlu0 %v378, 33
        %v1105 = vpop.permute.xlu0 %1104
        %1106 = vrot.lane.b32.xlu0 %v380, 33
        %v1107 = vpop.permute.xlu0 %1106
        %vm1108 = vcmp.lt.s32.totalorder %v402, 33
        %v1109 = vsel %vm1108, %v1093, %v1101
        %v1110 = vsel %vm1108, %v1095, %v1103
        %v1111 = vsel %vm1108, %v1097, %v1105
        %v1112 = vsel %vm1108, %v1099, %v1107
        %v1113 = vsel %vm1108, %v1101, %v1093
        %v1114 = vsel %vm1108, %v1103, %v1095
        %v1115 = vsel %vm1108, %v1105, %v1097
        %v1116 = vsel %vm1108, %v1107, %v1099
        %s1117 = scalar_lea.vmem [#allocation2], 17
        %v1118 = vld [vmem:[%s1117] ss:$8 sm:$0x3]
        %v1120 = vlaneseq
        %v1121 = vshrl.u32 %v1120, 7
        %v1122 = vsub.s32 0, %v1121
        %v1123 = vrot.slane %v1118, %v1122
        %v1124 = vlaneseq
        %v1125 = vshrl.u32 %v1124, 7
        %v1126 = vsub.s32 1, %v1125
        %v1127 = vrot.slane %v1118, %v1126
        %v1130 = vmul.f32 %v1113, %v1123
        %v1131 = vmul.f32 %v1109, %v1127
        %v1132 = vmul.f32 %v1114, %v1123
        %v1133 = vmul.f32 %v1110, %v1127
        %v1134 = vmul.f32 %v1115, %v1123
        %v1135 = vmul.f32 %v1111, %v1127
        %v1136 = vmul.f32 %v1116, %v1123
        %v1137 = vmul.f32 %v1112, %v1127
        %1138 = vset.pattern.permute.xlu0 9
        %1139 = vperm.xlu0 %1138, %v381
        %v1140 = vpop.permute.xlu0 %1139
        %1142 = vset.pattern.permute.xlu0 9
        %1143 = vperm.xlu0 %1142, %v382
        %v1144 = vpop.permute.xlu0 %1143
        %1146 = vset.pattern.permute.xlu0 9
        %1147 = vperm.xlu0 %1146, %v383
        %v1148 = vpop.permute.xlu0 %1147
        %1150 = vset.pattern.permute.xlu0 9
        %1151 = vperm.xlu0 %1150, %v384
        %v1152 = vpop.permute.xlu0 %1151
        %v1154 = vmul.f32 %v1130, %v1140
        %v1155 = vmul.f32 %v1131, %v1140
        %v1156 = vmul.f32 %v1132, %v1144
        %v1157 = vmul.f32 %v1133, %v1144
        %v1158 = vmul.f32 %v1134, %v1148
        %v1159 = vmul.f32 %v1135, %v1148
        %v1160 = vmul.f32 %v1136, %v1152
        %v1161 = vmul.f32 %v1137, %v1152
        %v1162 = vadd.f32 %v1084, %v1154
        %v1163 = vadd.f32 %v1085, %v1155
        %v1164 = vadd.f32 %v1086, %v1156
        %v1165 = vadd.f32 %v1087, %v1157
        %v1166 = vadd.f32 %v1088, %v1158
        %v1167 = vadd.f32 %v1089, %v1159
        %v1168 = vadd.f32 %v1090, %v1160
        %v1169 = vadd.f32 %v1091, %v1161
        %1170 = vrot.lane.b32.xlu0 %v373, 32
        %v1171 = vpop.permute.xlu0 %1170
        %1172 = vrot.lane.b32.xlu0 %v375, 32
        %v1173 = vpop.permute.xlu0 %1172
        %1174 = vrot.lane.b32.xlu0 %v377, 32
        %v1175 = vpop.permute.xlu0 %1174
        %1176 = vrot.lane.b32.xlu0 %v379, 32
        %v1177 = vpop.permute.xlu0 %1176
        %1178 = vrot.lane.b32.xlu0 %v374, 32
        %v1179 = vpop.permute.xlu0 %1178
        %1180 = vrot.lane.b32.xlu0 %v376, 32
        %v1181 = vpop.permute.xlu0 %1180
        %1182 = vrot.lane.b32.xlu0 %v378, 32
        %v1183 = vpop.permute.xlu0 %1182
        %1184 = vrot.lane.b32.xlu0 %v380, 32
        %v1185 = vpop.permute.xlu0 %1184
        %vm1186 = vcmp.lt.s32.totalorder %v402, 32
        %v1187 = vsel %vm1186, %v1171, %v1179
        %v1188 = vsel %vm1186, %v1173, %v1181
        %v1189 = vsel %vm1186, %v1175, %v1183
        %v1190 = vsel %vm1186, %v1177, %v1185
        %v1191 = vsel %vm1186, %v1179, %v1171
        %v1192 = vsel %vm1186, %v1181, %v1173
        %v1193 = vsel %vm1186, %v1183, %v1175
        %v1194 = vsel %vm1186, %v1185, %v1177
        %s1195 = scalar_lea.vmem [#allocation2], 18
        %v1196 = vld [vmem:[%s1195] ss:$8 sm:$0x3]
        %v1198 = vlaneseq
        %v1199 = vshrl.u32 %v1198, 7
        %v1200 = vsub.s32 0, %v1199
        %v1201 = vrot.slane %v1196, %v1200
        %v1202 = vlaneseq
        %v1203 = vshrl.u32 %v1202, 7
        %v1204 = vsub.s32 1, %v1203
        %v1205 = vrot.slane %v1196, %v1204
        %v1208 = vmul.f32 %v1191, %v1201
        %v1209 = vmul.f32 %v1187, %v1205
        %v1210 = vmul.f32 %v1192, %v1201
        %v1211 = vmul.f32 %v1188, %v1205
        %v1212 = vmul.f32 %v1193, %v1201
        %v1213 = vmul.f32 %v1189, %v1205
        %v1214 = vmul.f32 %v1194, %v1201
        %v1215 = vmul.f32 %v1190, %v1205
        %1216 = vset.pattern.permute.xlu0 10
        %1217 = vperm.xlu0 %1216, %v381
        %v1218 = vpop.permute.xlu0 %1217
        %1220 = vset.pattern.permute.xlu0 10
        %1221 = vperm.xlu0 %1220, %v382
        %v1222 = vpop.permute.xlu0 %1221
        %1224 = vset.pattern.permute.xlu0 10
        %1225 = vperm.xlu0 %1224, %v383
        %v1226 = vpop.permute.xlu0 %1225
        %1228 = vset.pattern.permute.xlu0 10
        %1229 = vperm.xlu0 %1228, %v384
        %v1230 = vpop.permute.xlu0 %1229
        %v1232 = vmul.f32 %v1208, %v1218
        %v1233 = vmul.f32 %v1209, %v1218
        %v1234 = vmul.f32 %v1210, %v1222
        %v1235 = vmul.f32 %v1211, %v1222
        %v1236 = vmul.f32 %v1212, %v1226
        %v1237 = vmul.f32 %v1213, %v1226
        %v1238 = vmul.f32 %v1214, %v1230
        %v1239 = vmul.f32 %v1215, %v1230
        %v1240 = vadd.f32 %v1162, %v1232
        %v1241 = vadd.f32 %v1163, %v1233
        %v1242 = vadd.f32 %v1164, %v1234
        %v1243 = vadd.f32 %v1165, %v1235
        %v1244 = vadd.f32 %v1166, %v1236
        %v1245 = vadd.f32 %v1167, %v1237
        %v1246 = vadd.f32 %v1168, %v1238
        %v1247 = vadd.f32 %v1169, %v1239
        %1248 = vrot.lane.b32.xlu0 %v373, 31
        %v1249 = vpop.permute.xlu0 %1248
        %1250 = vrot.lane.b32.xlu0 %v375, 31
        %v1251 = vpop.permute.xlu0 %1250
        %1252 = vrot.lane.b32.xlu0 %v377, 31
        %v1253 = vpop.permute.xlu0 %1252
        %1254 = vrot.lane.b32.xlu0 %v379, 31
        %v1255 = vpop.permute.xlu0 %1254
        %1256 = vrot.lane.b32.xlu0 %v374, 31
        %v1257 = vpop.permute.xlu0 %1256
        %1258 = vrot.lane.b32.xlu0 %v376, 31
        %v1259 = vpop.permute.xlu0 %1258
        %1260 = vrot.lane.b32.xlu0 %v378, 31
        %v1261 = vpop.permute.xlu0 %1260
        %1262 = vrot.lane.b32.xlu0 %v380, 31
        %v1263 = vpop.permute.xlu0 %1262
        %vm1264 = vcmp.lt.s32.totalorder %v402, 31
        %v1265 = vsel %vm1264, %v1249, %v1257
        %v1266 = vsel %vm1264, %v1251, %v1259
        %v1267 = vsel %vm1264, %v1253, %v1261
        %v1268 = vsel %vm1264, %v1255, %v1263
        %v1269 = vsel %vm1264, %v1257, %v1249
        %v1270 = vsel %vm1264, %v1259, %v1251
        %v1271 = vsel %vm1264, %v1261, %v1253
        %v1272 = vsel %vm1264, %v1263, %v1255
        %s1273 = scalar_lea.vmem [#allocation2], 19
        %v1274 = vld [vmem:[%s1273] ss:$8 sm:$0x3]
        %v1276 = vlaneseq
        %v1277 = vshrl.u32 %v1276, 7
        %v1278 = vsub.s32 0, %v1277
        %v1279 = vrot.slane %v1274, %v1278
        %v1280 = vlaneseq
        %v1281 = vshrl.u32 %v1280, 7
        %v1282 = vsub.s32 1, %v1281
        %v1283 = vrot.slane %v1274, %v1282
        %v1286 = vmul.f32 %v1269, %v1279
        %v1287 = vmul.f32 %v1265, %v1283
        %v1288 = vmul.f32 %v1270, %v1279
        %v1289 = vmul.f32 %v1266, %v1283
        %v1290 = vmul.f32 %v1271, %v1279
        %v1291 = vmul.f32 %v1267, %v1283
        %v1292 = vmul.f32 %v1272, %v1279
        %v1293 = vmul.f32 %v1268, %v1283
        %1294 = vset.pattern.permute.xlu0 11
        %1295 = vperm.xlu0 %1294, %v381
        %v1296 = vpop.permute.xlu0 %1295
        %1298 = vset.pattern.permute.xlu0 11
        %1299 = vperm.xlu0 %1298, %v382
        %v1300 = vpop.permute.xlu0 %1299
        %1302 = vset.pattern.permute.xlu0 11
        %1303 = vperm.xlu0 %1302, %v383
        %v1304 = vpop.permute.xlu0 %1303
        %1306 = vset.pattern.permute.xlu0 11
        %1307 = vperm.xlu0 %1306, %v384
        %v1308 = vpop.permute.xlu0 %1307
        %v1310 = vmul.f32 %v1286, %v1296
        %v1311 = vmul.f32 %v1287, %v1296
        %v1312 = vmul.f32 %v1288, %v1300
        %v1313 = vmul.f32 %v1289, %v1300
        %v1314 = vmul.f32 %v1290, %v1304
        %v1315 = vmul.f32 %v1291, %v1304
        %v1316 = vmul.f32 %v1292, %v1308
        %v1317 = vmul.f32 %v1293, %v1308
        %v1318 = vadd.f32 %v1240, %v1310
        %v1319 = vadd.f32 %v1241, %v1311
        %v1320 = vadd.f32 %v1242, %v1312
        %v1321 = vadd.f32 %v1243, %v1313
        %v1322 = vadd.f32 %v1244, %v1314
        %v1323 = vadd.f32 %v1245, %v1315
        %v1324 = vadd.f32 %v1246, %v1316
        %v1325 = vadd.f32 %v1247, %v1317
        %1326 = vrot.lane.b32.xlu0 %v373, 30
        %v1327 = vpop.permute.xlu0 %1326
        %1328 = vrot.lane.b32.xlu0 %v375, 30
        %v1329 = vpop.permute.xlu0 %1328
        %1330 = vrot.lane.b32.xlu0 %v377, 30
        %v1331 = vpop.permute.xlu0 %1330
        %1332 = vrot.lane.b32.xlu0 %v379, 30
        %v1333 = vpop.permute.xlu0 %1332
        %1334 = vrot.lane.b32.xlu0 %v374, 30
        %v1335 = vpop.permute.xlu0 %1334
        %1336 = vrot.lane.b32.xlu0 %v376, 30
        %v1337 = vpop.permute.xlu0 %1336
        %1338 = vrot.lane.b32.xlu0 %v378, 30
        %v1339 = vpop.permute.xlu0 %1338
        %1340 = vrot.lane.b32.xlu0 %v380, 30
        %v1341 = vpop.permute.xlu0 %1340
        %vm1342 = vcmp.lt.s32.totalorder %v402, 30
        %v1343 = vsel %vm1342, %v1327, %v1335
        %v1344 = vsel %vm1342, %v1329, %v1337
        %v1345 = vsel %vm1342, %v1331, %v1339
        %v1346 = vsel %vm1342, %v1333, %v1341
        %v1347 = vsel %vm1342, %v1335, %v1327
        %v1348 = vsel %vm1342, %v1337, %v1329
        %v1349 = vsel %vm1342, %v1339, %v1331
        %v1350 = vsel %vm1342, %v1341, %v1333
        %s1351 = scalar_lea.vmem [#allocation2], 20
        %v1352 = vld [vmem:[%s1351] ss:$8 sm:$0x3]
        %v1354 = vlaneseq
        %v1355 = vshrl.u32 %v1354, 7
        %v1356 = vsub.s32 0, %v1355
        %v1357 = vrot.slane %v1352, %v1356
        %v1358 = vlaneseq
        %v1359 = vshrl.u32 %v1358, 7
        %v1360 = vsub.s32 1, %v1359
        %v1361 = vrot.slane %v1352, %v1360
        %v1364 = vmul.f32 %v1347, %v1357
        %v1365 = vmul.f32 %v1343, %v1361
        %v1366 = vmul.f32 %v1348, %v1357
        %v1367 = vmul.f32 %v1344, %v1361
        %v1368 = vmul.f32 %v1349, %v1357
        %v1369 = vmul.f32 %v1345, %v1361
        %v1370 = vmul.f32 %v1350, %v1357
        %v1371 = vmul.f32 %v1346, %v1361
        %1372 = vset.pattern.permute.xlu0 12
        %1373 = vperm.xlu0 %1372, %v381
        %v1374 = vpop.permute.xlu0 %1373
        %1376 = vset.pattern.permute.xlu0 12
        %1377 = vperm.xlu0 %1376, %v382
        %v1378 = vpop.permute.xlu0 %1377
        %1380 = vset.pattern.permute.xlu0 12
        %1381 = vperm.xlu0 %1380, %v383
        %v1382 = vpop.permute.xlu0 %1381
        %1384 = vset.pattern.permute.xlu0 12
        %1385 = vperm.xlu0 %1384, %v384
        %v1386 = vpop.permute.xlu0 %1385
        %v1388 = vmul.f32 %v1364, %v1374
        %v1389 = vmul.f32 %v1365, %v1374
        %v1390 = vmul.f32 %v1366, %v1378
        %v1391 = vmul.f32 %v1367, %v1378
        %v1392 = vmul.f32 %v1368, %v1382
        %v1393 = vmul.f32 %v1369, %v1382
        %v1394 = vmul.f32 %v1370, %v1386
        %v1395 = vmul.f32 %v1371, %v1386
        %v1396 = vadd.f32 %v1318, %v1388
        %v1397 = vadd.f32 %v1319, %v1389
        %v1398 = vadd.f32 %v1320, %v1390
        %v1399 = vadd.f32 %v1321, %v1391
        %v1400 = vadd.f32 %v1322, %v1392
        %v1401 = vadd.f32 %v1323, %v1393
        %v1402 = vadd.f32 %v1324, %v1394
        %v1403 = vadd.f32 %v1325, %v1395
        %1404 = vrot.lane.b32.xlu0 %v373, 29
        %v1405 = vpop.permute.xlu0 %1404
        %1406 = vrot.lane.b32.xlu0 %v375, 29
        %v1407 = vpop.permute.xlu0 %1406
        %1408 = vrot.lane.b32.xlu0 %v377, 29
        %v1409 = vpop.permute.xlu0 %1408
        %1410 = vrot.lane.b32.xlu0 %v379, 29
        %v1411 = vpop.permute.xlu0 %1410
        %1412 = vrot.lane.b32.xlu0 %v374, 29
        %v1413 = vpop.permute.xlu0 %1412
        %1414 = vrot.lane.b32.xlu0 %v376, 29
        %v1415 = vpop.permute.xlu0 %1414
        %1416 = vrot.lane.b32.xlu0 %v378, 29
        %v1417 = vpop.permute.xlu0 %1416
        %1418 = vrot.lane.b32.xlu0 %v380, 29
        %v1419 = vpop.permute.xlu0 %1418
        %vm1420 = vcmp.lt.s32.totalorder %v402, 29
        %v1421 = vsel %vm1420, %v1405, %v1413
        %v1422 = vsel %vm1420, %v1407, %v1415
        %v1423 = vsel %vm1420, %v1409, %v1417
        %v1424 = vsel %vm1420, %v1411, %v1419
        %v1425 = vsel %vm1420, %v1413, %v1405
        %v1426 = vsel %vm1420, %v1415, %v1407
        %v1427 = vsel %vm1420, %v1417, %v1409
        %v1428 = vsel %vm1420, %v1419, %v1411
        %s1429 = scalar_lea.vmem [#allocation2], 21
        %v1430 = vld [vmem:[%s1429] ss:$8 sm:$0x3]
        %v1432 = vlaneseq
        %v1433 = vshrl.u32 %v1432, 7
        %v1434 = vsub.s32 0, %v1433
        %v1435 = vrot.slane %v1430, %v1434
        %v1436 = vlaneseq
        %v1437 = vshrl.u32 %v1436, 7
        %v1438 = vsub.s32 1, %v1437
        %v1439 = vrot.slane %v1430, %v1438
        %v1442 = vmul.f32 %v1425, %v1435
        %v1443 = vmul.f32 %v1421, %v1439
        %v1444 = vmul.f32 %v1426, %v1435
        %v1445 = vmul.f32 %v1422, %v1439
        %v1446 = vmul.f32 %v1427, %v1435
        %v1447 = vmul.f32 %v1423, %v1439
        %v1448 = vmul.f32 %v1428, %v1435
        %v1449 = vmul.f32 %v1424, %v1439
        %1450 = vset.pattern.permute.xlu0 13
        %1451 = vperm.xlu0 %1450, %v381
        %v1452 = vpop.permute.xlu0 %1451
        %1454 = vset.pattern.permute.xlu0 13
        %1455 = vperm.xlu0 %1454, %v382
        %v1456 = vpop.permute.xlu0 %1455
        %1458 = vset.pattern.permute.xlu0 13
        %1459 = vperm.xlu0 %1458, %v383
        %v1460 = vpop.permute.xlu0 %1459
        %1462 = vset.pattern.permute.xlu0 13
        %1463 = vperm.xlu0 %1462, %v384
        %v1464 = vpop.permute.xlu0 %1463
        %v1466 = vmul.f32 %v1442, %v1452
        %v1467 = vmul.f32 %v1443, %v1452
        %v1468 = vmul.f32 %v1444, %v1456
        %v1469 = vmul.f32 %v1445, %v1456
        %v1470 = vmul.f32 %v1446, %v1460
        %v1471 = vmul.f32 %v1447, %v1460
        %v1472 = vmul.f32 %v1448, %v1464
        %v1473 = vmul.f32 %v1449, %v1464
        %v1474 = vadd.f32 %v1396, %v1466
        %v1475 = vadd.f32 %v1397, %v1467
        %v1476 = vadd.f32 %v1398, %v1468
        %v1477 = vadd.f32 %v1399, %v1469
        %v1478 = vadd.f32 %v1400, %v1470
        %v1479 = vadd.f32 %v1401, %v1471
        %v1480 = vadd.f32 %v1402, %v1472
        %v1481 = vadd.f32 %v1403, %v1473
        %1482 = vrot.lane.b32.xlu0 %v373, 19
        %v1483 = vpop.permute.xlu0 %1482
        %1484 = vrot.lane.b32.xlu0 %v375, 19
        %v1485 = vpop.permute.xlu0 %1484
        %1486 = vrot.lane.b32.xlu0 %v377, 19
        %v1487 = vpop.permute.xlu0 %1486
        %1488 = vrot.lane.b32.xlu0 %v379, 19
        %v1489 = vpop.permute.xlu0 %1488
        %1490 = vrot.lane.b32.xlu0 %v374, 19
        %v1491 = vpop.permute.xlu0 %1490
        %1492 = vrot.lane.b32.xlu0 %v376, 19
        %v1493 = vpop.permute.xlu0 %1492
        %1494 = vrot.lane.b32.xlu0 %v378, 19
        %v1495 = vpop.permute.xlu0 %1494
        %1496 = vrot.lane.b32.xlu0 %v380, 19
        %v1497 = vpop.permute.xlu0 %1496
        %vm1498 = vcmp.lt.s32.totalorder %v402, 19
        %v1499 = vsel %vm1498, %v1483, %v1491
        %v1500 = vsel %vm1498, %v1485, %v1493
        %v1501 = vsel %vm1498, %v1487, %v1495
        %v1502 = vsel %vm1498, %v1489, %v1497
        %v1503 = vsel %vm1498, %v1491, %v1483
        %v1504 = vsel %vm1498, %v1493, %v1485
        %v1505 = vsel %vm1498, %v1495, %v1487
        %v1506 = vsel %vm1498, %v1497, %v1489
        %s1507 = scalar_lea.vmem [#allocation2], 22
        %v1508 = vld [vmem:[%s1507] ss:$8 sm:$0x3]
        %v1510 = vlaneseq
        %v1511 = vshrl.u32 %v1510, 7
        %v1512 = vsub.s32 0, %v1511
        %v1513 = vrot.slane %v1508, %v1512
        %v1514 = vlaneseq
        %v1515 = vshrl.u32 %v1514, 7
        %v1516 = vsub.s32 1, %v1515
        %v1517 = vrot.slane %v1508, %v1516
        %v1520 = vmul.f32 %v1503, %v1513
        %v1521 = vmul.f32 %v1499, %v1517
        %v1522 = vmul.f32 %v1504, %v1513
        %v1523 = vmul.f32 %v1500, %v1517
        %v1524 = vmul.f32 %v1505, %v1513
        %v1525 = vmul.f32 %v1501, %v1517
        %v1526 = vmul.f32 %v1506, %v1513
        %v1527 = vmul.f32 %v1502, %v1517
        %1528 = vset.pattern.permute.xlu0 14
        %1529 = vperm.xlu0 %1528, %v381
        %v1530 = vpop.permute.xlu0 %1529
        %1532 = vset.pattern.permute.xlu0 14
        %1533 = vperm.xlu0 %1532, %v382
        %v1534 = vpop.permute.xlu0 %1533
        %1536 = vset.pattern.permute.xlu0 14
        %1537 = vperm.xlu0 %1536, %v383
        %v1538 = vpop.permute.xlu0 %1537
        %1540 = vset.pattern.permute.xlu0 14
        %1541 = vperm.xlu0 %1540, %v384
        %v1542 = vpop.permute.xlu0 %1541
        %v1544 = vmul.f32 %v1520, %v1530
        %v1545 = vmul.f32 %v1521, %v1530
        %v1546 = vmul.f32 %v1522, %v1534
        %v1547 = vmul.f32 %v1523, %v1534
        %v1548 = vmul.f32 %v1524, %v1538
        %v1549 = vmul.f32 %v1525, %v1538
        %v1550 = vmul.f32 %v1526, %v1542
        %v1551 = vmul.f32 %v1527, %v1542
        %v1552 = vadd.f32 %v1474, %v1544
        %v1553 = vadd.f32 %v1475, %v1545
        %v1554 = vadd.f32 %v1476, %v1546
        %v1555 = vadd.f32 %v1477, %v1547
        %v1556 = vadd.f32 %v1478, %v1548
        %v1557 = vadd.f32 %v1479, %v1549
        %v1558 = vadd.f32 %v1480, %v1550
        %v1559 = vadd.f32 %v1481, %v1551
        %1560 = vrot.lane.b32.xlu0 %v373, 18
        %v1561 = vpop.permute.xlu0 %1560
        %1562 = vrot.lane.b32.xlu0 %v375, 18
        %v1563 = vpop.permute.xlu0 %1562
        %1564 = vrot.lane.b32.xlu0 %v377, 18
        %v1565 = vpop.permute.xlu0 %1564
        %1566 = vrot.lane.b32.xlu0 %v379, 18
        %v1567 = vpop.permute.xlu0 %1566
        %1568 = vrot.lane.b32.xlu0 %v374, 18
        %v1569 = vpop.permute.xlu0 %1568
        %1570 = vrot.lane.b32.xlu0 %v376, 18
        %v1571 = vpop.permute.xlu0 %1570
        %1572 = vrot.lane.b32.xlu0 %v378, 18
        %v1573 = vpop.permute.xlu0 %1572
        %1574 = vrot.lane.b32.xlu0 %v380, 18
        %v1575 = vpop.permute.xlu0 %1574
        %vm1576 = vcmp.lt.s32.totalorder %v402, 18
        %v1577 = vsel %vm1576, %v1561, %v1569
        %v1578 = vsel %vm1576, %v1563, %v1571
        %v1579 = vsel %vm1576, %v1565, %v1573
        %v1580 = vsel %vm1576, %v1567, %v1575
        %v1581 = vsel %vm1576, %v1569, %v1561
        %v1582 = vsel %vm1576, %v1571, %v1563
        %v1583 = vsel %vm1576, %v1573, %v1565
        %v1584 = vsel %vm1576, %v1575, %v1567
        %s1585 = scalar_lea.vmem [#allocation2], 23
        %v1586 = vld [vmem:[%s1585] ss:$8 sm:$0x3]
        %v1588 = vlaneseq
        %v1589 = vshrl.u32 %v1588, 7
        %v1590 = vsub.s32 0, %v1589
        %v1591 = vrot.slane %v1586, %v1590
        %v1592 = vlaneseq
        %v1593 = vshrl.u32 %v1592, 7
        %v1594 = vsub.s32 1, %v1593
        %v1595 = vrot.slane %v1586, %v1594
        %v1598 = vmul.f32 %v1581, %v1591
        %v1599 = vmul.f32 %v1577, %v1595
        %v1600 = vmul.f32 %v1582, %v1591
        %v1601 = vmul.f32 %v1578, %v1595
        %v1602 = vmul.f32 %v1583, %v1591
        %v1603 = vmul.f32 %v1579, %v1595
        %v1604 = vmul.f32 %v1584, %v1591
        %v1605 = vmul.f32 %v1580, %v1595
        %1606 = vset.pattern.permute.xlu0 15
        %1607 = vperm.xlu0 %1606, %v381
        %v1608 = vpop.permute.xlu0 %1607
        %1610 = vset.pattern.permute.xlu0 15
        %1611 = vperm.xlu0 %1610, %v382
        %v1612 = vpop.permute.xlu0 %1611
        %1614 = vset.pattern.permute.xlu0 15
        %1615 = vperm.xlu0 %1614, %v383
        %v1616 = vpop.permute.xlu0 %1615
        %1618 = vset.pattern.permute.xlu0 15
        %1619 = vperm.xlu0 %1618, %v384
        %v1620 = vpop.permute.xlu0 %1619
        %v1622 = vmul.f32 %v1598, %v1608
        %v1623 = vmul.f32 %v1599, %v1608
        %v1624 = vmul.f32 %v1600, %v1612
        %v1625 = vmul.f32 %v1601, %v1612
        %v1626 = vmul.f32 %v1602, %v1616
        %v1627 = vmul.f32 %v1603, %v1616
        %v1628 = vmul.f32 %v1604, %v1620
        %v1629 = vmul.f32 %v1605, %v1620
        %v1630 = vadd.f32 %v1552, %v1622
        %v1631 = vadd.f32 %v1553, %v1623
        %v1632 = vadd.f32 %v1554, %v1624
        %v1633 = vadd.f32 %v1555, %v1625
        %v1634 = vadd.f32 %v1556, %v1626
        %v1635 = vadd.f32 %v1557, %v1627
        %v1636 = vadd.f32 %v1558, %v1628
        %v1637 = vadd.f32 %v1559, %v1629
        %1638 = vrot.lane.b32.xlu0 %v373, 17
        %v1639 = vpop.permute.xlu0 %1638
        %1640 = vrot.lane.b32.xlu0 %v375, 17
        %v1641 = vpop.permute.xlu0 %1640
        %1642 = vrot.lane.b32.xlu0 %v377, 17
        %v1643 = vpop.permute.xlu0 %1642
        %1644 = vrot.lane.b32.xlu0 %v379, 17
        %v1645 = vpop.permute.xlu0 %1644
        %1646 = vrot.lane.b32.xlu0 %v374, 17
        %v1647 = vpop.permute.xlu0 %1646
        %1648 = vrot.lane.b32.xlu0 %v376, 17
        %v1649 = vpop.permute.xlu0 %1648
        %1650 = vrot.lane.b32.xlu0 %v378, 17
        %v1651 = vpop.permute.xlu0 %1650
        %1652 = vrot.lane.b32.xlu0 %v380, 17
        %v1653 = vpop.permute.xlu0 %1652
        %vm1654 = vcmp.lt.s32.totalorder %v402, 17
        %v1655 = vsel %vm1654, %v1639, %v1647
        %v1656 = vsel %vm1654, %v1641, %v1649
        %v1657 = vsel %vm1654, %v1643, %v1651
        %v1658 = vsel %vm1654, %v1645, %v1653
        %v1659 = vsel %vm1654, %v1647, %v1639
        %v1660 = vsel %vm1654, %v1649, %v1641
        %v1661 = vsel %vm1654, %v1651, %v1643
        %v1662 = vsel %vm1654, %v1653, %v1645
        %s1663 = scalar_lea.vmem [#allocation2], 32
        %v1664 = vld [vmem:[%s1663] ss:$8 sm:$0x3]
        %v1666 = vlaneseq
        %v1667 = vshrl.u32 %v1666, 7
        %v1668 = vsub.s32 0, %v1667
        %v1669 = vrot.slane %v1664, %v1668
        %v1670 = vlaneseq
        %v1671 = vshrl.u32 %v1670, 7
        %v1672 = vsub.s32 1, %v1671
        %v1673 = vrot.slane %v1664, %v1672
        %v1676 = vmul.f32 %v1659, %v1669
        %v1677 = vmul.f32 %v1655, %v1673
        %v1678 = vmul.f32 %v1660, %v1669
        %v1679 = vmul.f32 %v1656, %v1673
        %v1680 = vmul.f32 %v1661, %v1669
        %v1681 = vmul.f32 %v1657, %v1673
        %v1682 = vmul.f32 %v1662, %v1669
        %v1683 = vmul.f32 %v1658, %v1673
        %1684 = vset.pattern.permute.xlu0 16
        %1685 = vperm.xlu0 %1684, %v381
        %v1686 = vpop.permute.xlu0 %1685
        %1688 = vset.pattern.permute.xlu0 16
        %1689 = vperm.xlu0 %1688, %v382
        %v1690 = vpop.permute.xlu0 %1689
        %1692 = vset.pattern.permute.xlu0 16
        %1693 = vperm.xlu0 %1692, %v383
        %v1694 = vpop.permute.xlu0 %1693
        %1696 = vset.pattern.permute.xlu0 16
        %1697 = vperm.xlu0 %1696, %v384
        %v1698 = vpop.permute.xlu0 %1697
        %v1700 = vmul.f32 %v1676, %v1686
        %v1701 = vmul.f32 %v1677, %v1686
        %v1702 = vmul.f32 %v1678, %v1690
        %v1703 = vmul.f32 %v1679, %v1690
        %v1704 = vmul.f32 %v1680, %v1694
        %v1705 = vmul.f32 %v1681, %v1694
        %v1706 = vmul.f32 %v1682, %v1698
        %v1707 = vmul.f32 %v1683, %v1698
        %v1708 = vadd.f32 %v1630, %v1700
        %v1709 = vadd.f32 %v1631, %v1701
        %v1710 = vadd.f32 %v1632, %v1702
        %v1711 = vadd.f32 %v1633, %v1703
        %v1712 = vadd.f32 %v1634, %v1704
        %v1713 = vadd.f32 %v1635, %v1705
        %v1714 = vadd.f32 %v1636, %v1706
        %v1715 = vadd.f32 %v1637, %v1707
        %1716 = vrot.lane.b32.xlu0 %v373, 16
        %v1717 = vpop.permute.xlu0 %1716
        %1718 = vrot.lane.b32.xlu0 %v375, 16
        %v1719 = vpop.permute.xlu0 %1718
        %1720 = vrot.lane.b32.xlu0 %v377, 16
        %v1721 = vpop.permute.xlu0 %1720
        %1722 = vrot.lane.b32.xlu0 %v379, 16
        %v1723 = vpop.permute.xlu0 %1722
        %1724 = vrot.lane.b32.xlu0 %v374, 16
        %v1725 = vpop.permute.xlu0 %1724
        %1726 = vrot.lane.b32.xlu0 %v376, 16
        %v1727 = vpop.permute.xlu0 %1726
        %1728 = vrot.lane.b32.xlu0 %v378, 16
        %v1729 = vpop.permute.xlu0 %1728
        %1730 = vrot.lane.b32.xlu0 %v380, 16
        %v1731 = vpop.permute.xlu0 %1730
        %vm1732 = vcmp.lt.s32.totalorder %v402, 16
        %v1733 = vsel %vm1732, %v1717, %v1725
        %v1734 = vsel %vm1732, %v1719, %v1727
        %v1735 = vsel %vm1732, %v1721, %v1729
        %v1736 = vsel %vm1732, %v1723, %v1731
        %v1737 = vsel %vm1732, %v1725, %v1717
        %v1738 = vsel %vm1732, %v1727, %v1719
        %v1739 = vsel %vm1732, %v1729, %v1721
        %v1740 = vsel %vm1732, %v1731, %v1723
        %s1741 = scalar_lea.vmem [#allocation2], 33
        %v1742 = vld [vmem:[%s1741] ss:$8 sm:$0x3]
        %v1744 = vlaneseq
        %v1745 = vshrl.u32 %v1744, 7
        %v1746 = vsub.s32 0, %v1745
        %v1747 = vrot.slane %v1742, %v1746
        %v1748 = vlaneseq
        %v1749 = vshrl.u32 %v1748, 7
        %v1750 = vsub.s32 1, %v1749
        %v1751 = vrot.slane %v1742, %v1750
        %v1754 = vmul.f32 %v1737, %v1747
        %v1755 = vmul.f32 %v1733, %v1751
        %v1756 = vmul.f32 %v1738, %v1747
        %v1757 = vmul.f32 %v1734, %v1751
        %v1758 = vmul.f32 %v1739, %v1747
        %v1759 = vmul.f32 %v1735, %v1751
        %v1760 = vmul.f32 %v1740, %v1747
        %v1761 = vmul.f32 %v1736, %v1751
        %1762 = vset.pattern.permute.xlu0 17
        %1763 = vperm.xlu0 %1762, %v381
        %v1764 = vpop.permute.xlu0 %1763
        %1766 = vset.pattern.permute.xlu0 17
        %1767 = vperm.xlu0 %1766, %v382
        %v1768 = vpop.permute.xlu0 %1767
        %1770 = vset.pattern.permute.xlu0 17
        %1771 = vperm.xlu0 %1770, %v383
        %v1772 = vpop.permute.xlu0 %1771
        %1774 = vset.pattern.permute.xlu0 17
        %1775 = vperm.xlu0 %1774, %v384
        %v1776 = vpop.permute.xlu0 %1775
        %v1778 = vmul.f32 %v1754, %v1764
        %v1779 = vmul.f32 %v1755, %v1764
        %v1780 = vmul.f32 %v1756, %v1768
        %v1781 = vmul.f32 %v1757, %v1768
        %v1782 = vmul.f32 %v1758, %v1772
        %v1783 = vmul.f32 %v1759, %v1772
        %v1784 = vmul.f32 %v1760, %v1776
        %v1785 = vmul.f32 %v1761, %v1776
        %v1786 = vadd.f32 %v1708, %v1778
        %v1787 = vadd.f32 %v1709, %v1779
        %v1788 = vadd.f32 %v1710, %v1780
        %v1789 = vadd.f32 %v1711, %v1781
        %v1790 = vadd.f32 %v1712, %v1782
        %v1791 = vadd.f32 %v1713, %v1783
        %v1792 = vadd.f32 %v1714, %v1784
        %v1793 = vadd.f32 %v1715, %v1785
        %1794 = vrot.lane.b32.xlu0 %v373, 15
        %v1795 = vpop.permute.xlu0 %1794
        %1796 = vrot.lane.b32.xlu0 %v375, 15
        %v1797 = vpop.permute.xlu0 %1796
        %1798 = vrot.lane.b32.xlu0 %v377, 15
        %v1799 = vpop.permute.xlu0 %1798
        %1800 = vrot.lane.b32.xlu0 %v379, 15
        %v1801 = vpop.permute.xlu0 %1800
        %1802 = vrot.lane.b32.xlu0 %v374, 15
        %v1803 = vpop.permute.xlu0 %1802
        %1804 = vrot.lane.b32.xlu0 %v376, 15
        %v1805 = vpop.permute.xlu0 %1804
        %1806 = vrot.lane.b32.xlu0 %v378, 15
        %v1807 = vpop.permute.xlu0 %1806
        %1808 = vrot.lane.b32.xlu0 %v380, 15
        %v1809 = vpop.permute.xlu0 %1808
        %vm1810 = vcmp.lt.s32.totalorder %v402, 15
        %v1811 = vsel %vm1810, %v1795, %v1803
        %v1812 = vsel %vm1810, %v1797, %v1805
        %v1813 = vsel %vm1810, %v1799, %v1807
        %v1814 = vsel %vm1810, %v1801, %v1809
        %v1815 = vsel %vm1810, %v1803, %v1795
        %v1816 = vsel %vm1810, %v1805, %v1797
        %v1817 = vsel %vm1810, %v1807, %v1799
        %v1818 = vsel %vm1810, %v1809, %v1801
        %s1819 = scalar_lea.vmem [#allocation2], 34
        %v1820 = vld [vmem:[%s1819] ss:$8 sm:$0x3]
        %v1822 = vlaneseq
        %v1823 = vshrl.u32 %v1822, 7
        %v1824 = vsub.s32 0, %v1823
        %v1825 = vrot.slane %v1820, %v1824
        %v1826 = vlaneseq
        %v1827 = vshrl.u32 %v1826, 7
        %v1828 = vsub.s32 1, %v1827
        %v1829 = vrot.slane %v1820, %v1828
        %v1832 = vmul.f32 %v1815, %v1825
        %v1833 = vmul.f32 %v1811, %v1829
        %v1834 = vmul.f32 %v1816, %v1825
        %v1835 = vmul.f32 %v1812, %v1829
        %v1836 = vmul.f32 %v1817, %v1825
        %v1837 = vmul.f32 %v1813, %v1829
        %v1838 = vmul.f32 %v1818, %v1825
        %v1839 = vmul.f32 %v1814, %v1829
        %1840 = vset.pattern.permute.xlu0 18
        %1841 = vperm.xlu0 %1840, %v381
        %v1842 = vpop.permute.xlu0 %1841
        %1844 = vset.pattern.permute.xlu0 18
        %1845 = vperm.xlu0 %1844, %v382
        %v1846 = vpop.permute.xlu0 %1845
        %1848 = vset.pattern.permute.xlu0 18
        %1849 = vperm.xlu0 %1848, %v383
        %v1850 = vpop.permute.xlu0 %1849
        %1852 = vset.pattern.permute.xlu0 18
        %1853 = vperm.xlu0 %1852, %v384
        %v1854 = vpop.permute.xlu0 %1853
        %v1856 = vmul.f32 %v1832, %v1842
        %v1857 = vmul.f32 %v1833, %v1842
        %v1858 = vmul.f32 %v1834, %v1846
        %v1859 = vmul.f32 %v1835, %v1846
        %v1860 = vmul.f32 %v1836, %v1850
        %v1861 = vmul.f32 %v1837, %v1850
        %v1862 = vmul.f32 %v1838, %v1854
        %v1863 = vmul.f32 %v1839, %v1854
        %v1864 = vadd.f32 %v1786, %v1856
        %v1865 = vadd.f32 %v1787, %v1857
        %v1866 = vadd.f32 %v1788, %v1858
        %v1867 = vadd.f32 %v1789, %v1859
        %v1868 = vadd.f32 %v1790, %v1860
        %v1869 = vadd.f32 %v1791, %v1861
        %v1870 = vadd.f32 %v1792, %v1862
        %v1871 = vadd.f32 %v1793, %v1863
        %1872 = vrot.lane.b32.xlu0 %v373, 14
        %v1873 = vpop.permute.xlu0 %1872
        %1874 = vrot.lane.b32.xlu0 %v375, 14
        %v1875 = vpop.permute.xlu0 %1874
        %1876 = vrot.lane.b32.xlu0 %v377, 14
        %v1877 = vpop.permute.xlu0 %1876
        %1878 = vrot.lane.b32.xlu0 %v379, 14
        %v1879 = vpop.permute.xlu0 %1878
        %1880 = vrot.lane.b32.xlu0 %v374, 14
        %v1881 = vpop.permute.xlu0 %1880
        %1882 = vrot.lane.b32.xlu0 %v376, 14
        %v1883 = vpop.permute.xlu0 %1882
        %1884 = vrot.lane.b32.xlu0 %v378, 14
        %v1885 = vpop.permute.xlu0 %1884
        %1886 = vrot.lane.b32.xlu0 %v380, 14
        %v1887 = vpop.permute.xlu0 %1886
        %vm1888 = vcmp.lt.s32.totalorder %v402, 14
        %v1889 = vsel %vm1888, %v1873, %v1881
        %v1890 = vsel %vm1888, %v1875, %v1883
        %v1891 = vsel %vm1888, %v1877, %v1885
        %v1892 = vsel %vm1888, %v1879, %v1887
        %v1893 = vsel %vm1888, %v1881, %v1873
        %v1894 = vsel %vm1888, %v1883, %v1875
        %v1895 = vsel %vm1888, %v1885, %v1877
        %v1896 = vsel %vm1888, %v1887, %v1879
        %s1897 = scalar_lea.vmem [#allocation2], 35
        %v1898 = vld [vmem:[%s1897] ss:$8 sm:$0x3]
        %v1900 = vlaneseq
        %v1901 = vshrl.u32 %v1900, 7
        %v1902 = vsub.s32 0, %v1901
        %v1903 = vrot.slane %v1898, %v1902
        %v1904 = vlaneseq
        %v1905 = vshrl.u32 %v1904, 7
        %v1906 = vsub.s32 1, %v1905
        %v1907 = vrot.slane %v1898, %v1906
        %v1910 = vmul.f32 %v1893, %v1903
        %v1911 = vmul.f32 %v1889, %v1907
        %v1912 = vmul.f32 %v1894, %v1903
        %v1913 = vmul.f32 %v1890, %v1907
        %v1914 = vmul.f32 %v1895, %v1903
        %v1915 = vmul.f32 %v1891, %v1907
        %v1916 = vmul.f32 %v1896, %v1903
        %v1917 = vmul.f32 %v1892, %v1907
        %1918 = vset.pattern.permute.xlu0 19
        %1919 = vperm.xlu0 %1918, %v381
        %v1920 = vpop.permute.xlu0 %1919
        %1922 = vset.pattern.permute.xlu0 19
        %1923 = vperm.xlu0 %1922, %v382
        %v1924 = vpop.permute.xlu0 %1923
        %1926 = vset.pattern.permute.xlu0 19
        %1927 = vperm.xlu0 %1926, %v383
        %v1928 = vpop.permute.xlu0 %1927
        %1930 = vset.pattern.permute.xlu0 19
        %1931 = vperm.xlu0 %1930, %v384
        %v1932 = vpop.permute.xlu0 %1931
        %v1934 = vmul.f32 %v1910, %v1920
        %v1935 = vmul.f32 %v1911, %v1920
        %v1936 = vmul.f32 %v1912, %v1924
        %v1937 = vmul.f32 %v1913, %v1924
        %v1938 = vmul.f32 %v1914, %v1928
        %v1939 = vmul.f32 %v1915, %v1928
        %v1940 = vmul.f32 %v1916, %v1932
        %v1941 = vmul.f32 %v1917, %v1932
        %v1942 = vadd.f32 %v1864, %v1934
        %v1943 = vadd.f32 %v1865, %v1935
        %v1944 = vadd.f32 %v1866, %v1936
        %v1945 = vadd.f32 %v1867, %v1937
        %v1946 = vadd.f32 %v1868, %v1938
        %v1947 = vadd.f32 %v1869, %v1939
        %v1948 = vadd.f32 %v1870, %v1940
        %v1949 = vadd.f32 %v1871, %v1941
        %1950 = vrot.lane.b32.xlu0 %v373, 13
        %v1951 = vpop.permute.xlu0 %1950
        %1952 = vrot.lane.b32.xlu0 %v375, 13
        %v1953 = vpop.permute.xlu0 %1952
        %1954 = vrot.lane.b32.xlu0 %v377, 13
        %v1955 = vpop.permute.xlu0 %1954
        %1956 = vrot.lane.b32.xlu0 %v379, 13
        %v1957 = vpop.permute.xlu0 %1956
        %1958 = vrot.lane.b32.xlu0 %v374, 13
        %v1959 = vpop.permute.xlu0 %1958
        %1960 = vrot.lane.b32.xlu0 %v376, 13
        %v1961 = vpop.permute.xlu0 %1960
        %1962 = vrot.lane.b32.xlu0 %v378, 13
        %v1963 = vpop.permute.xlu0 %1962
        %1964 = vrot.lane.b32.xlu0 %v380, 13
        %v1965 = vpop.permute.xlu0 %1964
        %vm1966 = vcmp.lt.s32.totalorder %v402, 13
        %v1967 = vsel %vm1966, %v1951, %v1959
        %v1968 = vsel %vm1966, %v1953, %v1961
        %v1969 = vsel %vm1966, %v1955, %v1963
        %v1970 = vsel %vm1966, %v1957, %v1965
        %v1971 = vsel %vm1966, %v1959, %v1951
        %v1972 = vsel %vm1966, %v1961, %v1953
        %v1973 = vsel %vm1966, %v1963, %v1955
        %v1974 = vsel %vm1966, %v1965, %v1957
        %s1975 = scalar_lea.vmem [#allocation2], 36
        %v1976 = vld [vmem:[%s1975] ss:$8 sm:$0x3]
        %v1978 = vlaneseq
        %v1979 = vshrl.u32 %v1978, 7
        %v1980 = vsub.s32 0, %v1979
        %v1981 = vrot.slane %v1976, %v1980
        %v1982 = vlaneseq
        %v1983 = vshrl.u32 %v1982, 7
        %v1984 = vsub.s32 1, %v1983
        %v1985 = vrot.slane %v1976, %v1984
        %v1988 = vmul.f32 %v1971, %v1981
        %v1989 = vmul.f32 %v1967, %v1985
        %v1990 = vmul.f32 %v1972, %v1981
        %v1991 = vmul.f32 %v1968, %v1985
        %v1992 = vmul.f32 %v1973, %v1981
        %v1993 = vmul.f32 %v1969, %v1985
        %v1994 = vmul.f32 %v1974, %v1981
        %v1995 = vmul.f32 %v1970, %v1985
        %1996 = vset.pattern.permute.xlu0 20
        %1997 = vperm.xlu0 %1996, %v381
        %v1998 = vpop.permute.xlu0 %1997
        %2000 = vset.pattern.permute.xlu0 20
        %2001 = vperm.xlu0 %2000, %v382
        %v2002 = vpop.permute.xlu0 %2001
        %2004 = vset.pattern.permute.xlu0 20
        %2005 = vperm.xlu0 %2004, %v383
        %v2006 = vpop.permute.xlu0 %2005
        %2008 = vset.pattern.permute.xlu0 20
        %2009 = vperm.xlu0 %2008, %v384
        %v2010 = vpop.permute.xlu0 %2009
        %v2012 = vmul.f32 %v1988, %v1998
        %v2013 = vmul.f32 %v1989, %v1998
        %v2014 = vmul.f32 %v1990, %v2002
        %v2015 = vmul.f32 %v1991, %v2002
        %v2016 = vmul.f32 %v1992, %v2006
        %v2017 = vmul.f32 %v1993, %v2006
        %v2018 = vmul.f32 %v1994, %v2010
        %v2019 = vmul.f32 %v1995, %v2010
        %v2020 = vadd.f32 %v1942, %v2012
        %v2021 = vadd.f32 %v1943, %v2013
        %v2022 = vadd.f32 %v1944, %v2014
        %v2023 = vadd.f32 %v1945, %v2015
        %v2024 = vadd.f32 %v1946, %v2016
        %v2025 = vadd.f32 %v1947, %v2017
        %v2026 = vadd.f32 %v1948, %v2018
        %v2027 = vadd.f32 %v1949, %v2019
        %2028 = vrot.lane.b32.xlu0 %v373, 3
        %v2029 = vpop.permute.xlu0 %2028
        %2030 = vrot.lane.b32.xlu0 %v375, 3
        %v2031 = vpop.permute.xlu0 %2030
        %2032 = vrot.lane.b32.xlu0 %v377, 3
        %v2033 = vpop.permute.xlu0 %2032
        %2034 = vrot.lane.b32.xlu0 %v379, 3
        %v2035 = vpop.permute.xlu0 %2034
        %2036 = vrot.lane.b32.xlu0 %v374, 3
        %v2037 = vpop.permute.xlu0 %2036
        %2038 = vrot.lane.b32.xlu0 %v376, 3
        %v2039 = vpop.permute.xlu0 %2038
        %2040 = vrot.lane.b32.xlu0 %v378, 3
        %v2041 = vpop.permute.xlu0 %2040
        %2042 = vrot.lane.b32.xlu0 %v380, 3
        %v2043 = vpop.permute.xlu0 %2042
        %vm2044 = vcmp.lt.s32.totalorder %v402, 3
        %v2045 = vsel %vm2044, %v2029, %v2037
        %v2046 = vsel %vm2044, %v2031, %v2039
        %v2047 = vsel %vm2044, %v2033, %v2041
        %v2048 = vsel %vm2044, %v2035, %v2043
        %v2049 = vsel %vm2044, %v2037, %v2029
        %v2050 = vsel %vm2044, %v2039, %v2031
        %v2051 = vsel %vm2044, %v2041, %v2033
        %v2052 = vsel %vm2044, %v2043, %v2035
        %s2053 = scalar_lea.vmem [#allocation2], 37
        %v2054 = vld [vmem:[%s2053] ss:$8 sm:$0x3]
        %v2056 = vlaneseq
        %v2057 = vshrl.u32 %v2056, 7
        %v2058 = vsub.s32 0, %v2057
        %v2059 = vrot.slane %v2054, %v2058
        %v2060 = vlaneseq
        %v2061 = vshrl.u32 %v2060, 7
        %v2062 = vsub.s32 1, %v2061
        %v2063 = vrot.slane %v2054, %v2062
        %v2066 = vmul.f32 %v2049, %v2059
        %v2067 = vmul.f32 %v2045, %v2063
        %v2068 = vmul.f32 %v2050, %v2059
        %v2069 = vmul.f32 %v2046, %v2063
        %v2070 = vmul.f32 %v2051, %v2059
        %v2071 = vmul.f32 %v2047, %v2063
        %v2072 = vmul.f32 %v2052, %v2059
        %v2073 = vmul.f32 %v2048, %v2063
        %2074 = vset.pattern.permute.xlu0 21
        %2075 = vperm.xlu0 %2074, %v381
        %v2076 = vpop.permute.xlu0 %2075
        %2078 = vset.pattern.permute.xlu0 21
        %2079 = vperm.xlu0 %2078, %v382
        %v2080 = vpop.permute.xlu0 %2079
        %2082 = vset.pattern.permute.xlu0 21
        %2083 = vperm.xlu0 %2082, %v383
        %v2084 = vpop.permute.xlu0 %2083
        %2086 = vset.pattern.permute.xlu0 21
        %2087 = vperm.xlu0 %2086, %v384
        %v2088 = vpop.permute.xlu0 %2087
        %v2090 = vmul.f32 %v2066, %v2076
        %v2091 = vmul.f32 %v2067, %v2076
        %v2092 = vmul.f32 %v2068, %v2080
        %v2093 = vmul.f32 %v2069, %v2080
        %v2094 = vmul.f32 %v2070, %v2084
        %v2095 = vmul.f32 %v2071, %v2084
        %v2096 = vmul.f32 %v2072, %v2088
        %v2097 = vmul.f32 %v2073, %v2088
        %v2098 = vadd.f32 %v2020, %v2090
        %v2099 = vadd.f32 %v2021, %v2091
        %v2100 = vadd.f32 %v2022, %v2092
        %v2101 = vadd.f32 %v2023, %v2093
        %v2102 = vadd.f32 %v2024, %v2094
        %v2103 = vadd.f32 %v2025, %v2095
        %v2104 = vadd.f32 %v2026, %v2096
        %v2105 = vadd.f32 %v2027, %v2097
        %2106 = vrot.lane.b32.xlu0 %v373, 2
        %v2107 = vpop.permute.xlu0 %2106
        %2108 = vrot.lane.b32.xlu0 %v375, 2
        %v2109 = vpop.permute.xlu0 %2108
        %2110 = vrot.lane.b32.xlu0 %v377, 2
        %v2111 = vpop.permute.xlu0 %2110
        %2112 = vrot.lane.b32.xlu0 %v379, 2
        %v2113 = vpop.permute.xlu0 %2112
        %2114 = vrot.lane.b32.xlu0 %v374, 2
        %v2115 = vpop.permute.xlu0 %2114
        %2116 = vrot.lane.b32.xlu0 %v376, 2
        %v2117 = vpop.permute.xlu0 %2116
        %2118 = vrot.lane.b32.xlu0 %v378, 2
        %v2119 = vpop.permute.xlu0 %2118
        %2120 = vrot.lane.b32.xlu0 %v380, 2
        %v2121 = vpop.permute.xlu0 %2120
        %vm2122 = vcmp.lt.s32.totalorder %v402, 2
        %v2123 = vsel %vm2122, %v2107, %v2115
        %v2124 = vsel %vm2122, %v2109, %v2117
        %v2125 = vsel %vm2122, %v2111, %v2119
        %v2126 = vsel %vm2122, %v2113, %v2121
        %v2127 = vsel %vm2122, %v2115, %v2107
        %v2128 = vsel %vm2122, %v2117, %v2109
        %v2129 = vsel %vm2122, %v2119, %v2111
        %v2130 = vsel %vm2122, %v2121, %v2113
        %s2131 = scalar_lea.vmem [#allocation2], 38
        %v2132 = vld [vmem:[%s2131] ss:$8 sm:$0x3]
        %v2134 = vlaneseq
        %v2135 = vshrl.u32 %v2134, 7
        %v2136 = vsub.s32 0, %v2135
        %v2137 = vrot.slane %v2132, %v2136
        %v2138 = vlaneseq
        %v2139 = vshrl.u32 %v2138, 7
        %v2140 = vsub.s32 1, %v2139
        %v2141 = vrot.slane %v2132, %v2140
        %v2144 = vmul.f32 %v2127, %v2137
        %v2145 = vmul.f32 %v2123, %v2141
        %v2146 = vmul.f32 %v2128, %v2137
        %v2147 = vmul.f32 %v2124, %v2141
        %v2148 = vmul.f32 %v2129, %v2137
        %v2149 = vmul.f32 %v2125, %v2141
        %v2150 = vmul.f32 %v2130, %v2137
        %v2151 = vmul.f32 %v2126, %v2141
        %2152 = vset.pattern.permute.xlu0 22
        %2153 = vperm.xlu0 %2152, %v381
        %v2154 = vpop.permute.xlu0 %2153
        %2156 = vset.pattern.permute.xlu0 22
        %2157 = vperm.xlu0 %2156, %v382
        %v2158 = vpop.permute.xlu0 %2157
        %2160 = vset.pattern.permute.xlu0 22
        %2161 = vperm.xlu0 %2160, %v383
        %v2162 = vpop.permute.xlu0 %2161
        %2164 = vset.pattern.permute.xlu0 22
        %2165 = vperm.xlu0 %2164, %v384
        %v2166 = vpop.permute.xlu0 %2165
        %v2168 = vmul.f32 %v2144, %v2154
        %v2169 = vmul.f32 %v2145, %v2154
        %v2170 = vmul.f32 %v2146, %v2158
        %v2171 = vmul.f32 %v2147, %v2158
        %v2172 = vmul.f32 %v2148, %v2162
        %v2173 = vmul.f32 %v2149, %v2162
        %v2174 = vmul.f32 %v2150, %v2166
        %v2175 = vmul.f32 %v2151, %v2166
        %v2176 = vadd.f32 %v2098, %v2168
        %v2177 = vadd.f32 %v2099, %v2169
        %v2178 = vadd.f32 %v2100, %v2170
        %v2179 = vadd.f32 %v2101, %v2171
        %v2180 = vadd.f32 %v2102, %v2172
        %v2181 = vadd.f32 %v2103, %v2173
        %v2182 = vadd.f32 %v2104, %v2174
        %v2183 = vadd.f32 %v2105, %v2175
        %2184 = vrot.lane.b32.xlu0 %v373, 1
        %v2185 = vpop.permute.xlu0 %2184
        %2186 = vrot.lane.b32.xlu0 %v375, 1
        %v2187 = vpop.permute.xlu0 %2186
        %2188 = vrot.lane.b32.xlu0 %v377, 1
        %v2189 = vpop.permute.xlu0 %2188
        %2190 = vrot.lane.b32.xlu0 %v379, 1
        %v2191 = vpop.permute.xlu0 %2190
        %2192 = vrot.lane.b32.xlu0 %v374, 1
        %v2193 = vpop.permute.xlu0 %2192
        %2194 = vrot.lane.b32.xlu0 %v376, 1
        %v2195 = vpop.permute.xlu0 %2194
        %2196 = vrot.lane.b32.xlu0 %v378, 1
        %v2197 = vpop.permute.xlu0 %2196
        %2198 = vrot.lane.b32.xlu0 %v380, 1
        %v2199 = vpop.permute.xlu0 %2198
        %vm2200 = vcmp.lt.s32.totalorder %v402, 1
        %v2201 = vsel %vm2200, %v2185, %v2193
        %v2202 = vsel %vm2200, %v2187, %v2195
        %v2203 = vsel %vm2200, %v2189, %v2197
        %v2204 = vsel %vm2200, %v2191, %v2199
        %v2205 = vsel %vm2200, %v2193, %v2185
        %v2206 = vsel %vm2200, %v2195, %v2187
        %v2207 = vsel %vm2200, %v2197, %v2189
        %v2208 = vsel %vm2200, %v2199, %v2191
        %s2209 = scalar_lea.vmem [#allocation2], 39
        %v2210 = vld [vmem:[%s2209] ss:$8 sm:$0x3]
        %v2212 = vlaneseq
        %v2213 = vshrl.u32 %v2212, 7
        %v2214 = vsub.s32 0, %v2213
        %v2215 = vrot.slane %v2210, %v2214
        %v2216 = vlaneseq
        %v2217 = vshrl.u32 %v2216, 7
        %v2218 = vsub.s32 1, %v2217
        %v2219 = vrot.slane %v2210, %v2218
        %v2222 = vmul.f32 %v2205, %v2215
        %v2223 = vmul.f32 %v2201, %v2219
        %v2224 = vmul.f32 %v2206, %v2215
        %v2225 = vmul.f32 %v2202, %v2219
        %v2226 = vmul.f32 %v2207, %v2215
        %v2227 = vmul.f32 %v2203, %v2219
        %v2228 = vmul.f32 %v2208, %v2215
        %v2229 = vmul.f32 %v2204, %v2219
        %2230 = vset.pattern.permute.xlu0 23
        %2231 = vperm.xlu0 %2230, %v381
        %v2232 = vpop.permute.xlu0 %2231
        %2234 = vset.pattern.permute.xlu0 23
        %2235 = vperm.xlu0 %2234, %v382
        %v2236 = vpop.permute.xlu0 %2235
        %2238 = vset.pattern.permute.xlu0 23
        %2239 = vperm.xlu0 %2238, %v383
        %v2240 = vpop.permute.xlu0 %2239
        %2242 = vset.pattern.permute.xlu0 23
        %2243 = vperm.xlu0 %2242, %v384
        %v2244 = vpop.permute.xlu0 %2243
        %v2246 = vmul.f32 %v2222, %v2232
        %v2247 = vmul.f32 %v2223, %v2232
        %v2248 = vmul.f32 %v2224, %v2236
        %v2249 = vmul.f32 %v2225, %v2236
        %v2250 = vmul.f32 %v2226, %v2240
        %v2251 = vmul.f32 %v2227, %v2240
        %v2252 = vmul.f32 %v2228, %v2244
        %v2253 = vmul.f32 %v2229, %v2244
        %v2254 = vadd.f32 %v2176, %v2246
        %v2255 = vadd.f32 %v2177, %v2247
        %v2256 = vadd.f32 %v2178, %v2248
        %v2257 = vadd.f32 %v2179, %v2249
        %v2258 = vadd.f32 %v2180, %v2250
        %v2259 = vadd.f32 %v2181, %v2251
        %v2260 = vadd.f32 %v2182, %v2252
        %v2261 = vadd.f32 %v2183, %v2253
        %2262 = vset.pattern.permute.xlu0 24
        %2263 = vperm.xlu0 %2262, %v381
        %v2264 = vpop.permute.xlu0 %2263
        %2266 = vset.pattern.permute.xlu0 24
        %2267 = vperm.xlu0 %2266, %v382
        %v2268 = vpop.permute.xlu0 %2267
        %2270 = vset.pattern.permute.xlu0 24
        %2271 = vperm.xlu0 %2270, %v383
        %v2272 = vpop.permute.xlu0 %2271
        %2274 = vset.pattern.permute.xlu0 24
        %2275 = vperm.xlu0 %2274, %v384
        %v2276 = vpop.permute.xlu0 %2275
        %v2278 = vmul.f32 %v373, %v2264
        %v2279 = vmul.f32 %v374, %v2264
        %v2280 = vmul.f32 %v375, %v2268
        %v2281 = vmul.f32 %v376, %v2268
        %v2282 = vmul.f32 %v377, %v2272
        %v2283 = vmul.f32 %v378, %v2272
        %v2284 = vmul.f32 %v379, %v2276
        %v2285 = vmul.f32 %v380, %v2276
        %v2286 = vadd.f32 %v2254, %v2278
        %v2287 = vadd.f32 %v2255, %v2279
        %v2288 = vadd.f32 %v2256, %v2280
        %v2289 = vadd.f32 %v2257, %v2281
        %v2290 = vadd.f32 %v2258, %v2282
        %v2291 = vadd.f32 %v2259, %v2283
        %v2292 = vadd.f32 %v2260, %v2284
        %v2293 = vadd.f32 %v2261, %v2285
        %2294 = vrot.lane.b32.xlu0 %v373, 127
        %v2295 = vpop.permute.xlu0 %2294
        %2296 = vrot.lane.b32.xlu0 %v375, 127
        %v2297 = vpop.permute.xlu0 %2296
        %2298 = vrot.lane.b32.xlu0 %v377, 127
        %v2299 = vpop.permute.xlu0 %2298
        %2300 = vrot.lane.b32.xlu0 %v379, 127
        %v2301 = vpop.permute.xlu0 %2300
        %2302 = vrot.lane.b32.xlu0 %v374, 127
        %v2303 = vpop.permute.xlu0 %2302
        %2304 = vrot.lane.b32.xlu0 %v376, 127
        %v2305 = vpop.permute.xlu0 %2304
        %2306 = vrot.lane.b32.xlu0 %v378, 127
        %v2307 = vpop.permute.xlu0 %2306
        %2308 = vrot.lane.b32.xlu0 %v380, 127
        %v2309 = vpop.permute.xlu0 %2308
        %vm2310 = vcmp.lt.s32.totalorder %v402, 127
        %v2311 = vsel %vm2310, %v2295, %v2303
        %v2312 = vsel %vm2310, %v2297, %v2305
        %v2313 = vsel %vm2310, %v2299, %v2307
        %v2314 = vsel %vm2310, %v2301, %v2309
        %v2315 = vsel %vm2310, %v2303, %v2295
        %v2316 = vsel %vm2310, %v2305, %v2297
        %v2317 = vsel %vm2310, %v2307, %v2299
        %v2318 = vsel %vm2310, %v2309, %v2301
        %s2319 = scalar_lea.vmem [#allocation2], 49
        %v2320 = vld [vmem:[%s2319] ss:$8 sm:$0x3]
        %v2322 = vlaneseq
        %v2323 = vshrl.u32 %v2322, 7
        %v2324 = vsub.s32 0, %v2323
        %v2325 = vrot.slane %v2320, %v2324
        %v2326 = vlaneseq
        %v2327 = vshrl.u32 %v2326, 7
        %v2328 = vsub.s32 1, %v2327
        %v2329 = vrot.slane %v2320, %v2328
        %v2332 = vmul.f32 %v2311, %v2325
        %v2333 = vmul.f32 %v2315, %v2329
        %v2334 = vmul.f32 %v2312, %v2325
        %v2335 = vmul.f32 %v2316, %v2329
        %v2336 = vmul.f32 %v2313, %v2325
        %v2337 = vmul.f32 %v2317, %v2329
        %v2338 = vmul.f32 %v2314, %v2325
        %v2339 = vmul.f32 %v2318, %v2329
        %2340 = vset.pattern.permute.xlu0 25
        %2341 = vperm.xlu0 %2340, %v381
        %v2342 = vpop.permute.xlu0 %2341
        %2344 = vset.pattern.permute.xlu0 25
        %2345 = vperm.xlu0 %2344, %v382
        %v2346 = vpop.permute.xlu0 %2345
        %2348 = vset.pattern.permute.xlu0 25
        %2349 = vperm.xlu0 %2348, %v383
        %v2350 = vpop.permute.xlu0 %2349
        %2352 = vset.pattern.permute.xlu0 25
        %2353 = vperm.xlu0 %2352, %v384
        %v2354 = vpop.permute.xlu0 %2353
        %v2356 = vmul.f32 %v2332, %v2342
        %v2357 = vmul.f32 %v2333, %v2342
        %v2358 = vmul.f32 %v2334, %v2346
        %v2359 = vmul.f32 %v2335, %v2346
        %v2360 = vmul.f32 %v2336, %v2350
        %v2361 = vmul.f32 %v2337, %v2350
        %v2362 = vmul.f32 %v2338, %v2354
        %v2363 = vmul.f32 %v2339, %v2354
        %v2364 = vadd.f32 %v2286, %v2356
        %v2365 = vadd.f32 %v2287, %v2357
        %v2366 = vadd.f32 %v2288, %v2358
        %v2367 = vadd.f32 %v2289, %v2359
        %v2368 = vadd.f32 %v2290, %v2360
        %v2369 = vadd.f32 %v2291, %v2361
        %v2370 = vadd.f32 %v2292, %v2362
        %v2371 = vadd.f32 %v2293, %v2363
        %2372 = vrot.lane.b32.xlu0 %v373, 126
        %v2373 = vpop.permute.xlu0 %2372
        %2374 = vrot.lane.b32.xlu0 %v375, 126
        %v2375 = vpop.permute.xlu0 %2374
        %2376 = vrot.lane.b32.xlu0 %v377, 126
        %v2377 = vpop.permute.xlu0 %2376
        %2378 = vrot.lane.b32.xlu0 %v379, 126
        %v2379 = vpop.permute.xlu0 %2378
        %2380 = vrot.lane.b32.xlu0 %v374, 126
        %v2381 = vpop.permute.xlu0 %2380
        %2382 = vrot.lane.b32.xlu0 %v376, 126
        %v2383 = vpop.permute.xlu0 %2382
        %2384 = vrot.lane.b32.xlu0 %v378, 126
        %v2385 = vpop.permute.xlu0 %2384
        %2386 = vrot.lane.b32.xlu0 %v380, 126
        %v2387 = vpop.permute.xlu0 %2386
        %vm2388 = vcmp.lt.s32.totalorder %v402, 126
        %v2389 = vsel %vm2388, %v2373, %v2381
        %v2390 = vsel %vm2388, %v2375, %v2383
        %v2391 = vsel %vm2388, %v2377, %v2385
        %v2392 = vsel %vm2388, %v2379, %v2387
        %v2393 = vsel %vm2388, %v2381, %v2373
        %v2394 = vsel %vm2388, %v2383, %v2375
        %v2395 = vsel %vm2388, %v2385, %v2377
        %v2396 = vsel %vm2388, %v2387, %v2379
        %s2397 = scalar_lea.vmem [#allocation2], 50
        %v2398 = vld [vmem:[%s2397] ss:$8 sm:$0x3]
        %v2400 = vlaneseq
        %v2401 = vshrl.u32 %v2400, 7
        %v2402 = vsub.s32 0, %v2401
        %v2403 = vrot.slane %v2398, %v2402
        %v2404 = vlaneseq
        %v2405 = vshrl.u32 %v2404, 7
        %v2406 = vsub.s32 1, %v2405
        %v2407 = vrot.slane %v2398, %v2406
        %v2410 = vmul.f32 %v2389, %v2403
        %v2411 = vmul.f32 %v2393, %v2407
        %v2412 = vmul.f32 %v2390, %v2403
        %v2413 = vmul.f32 %v2394, %v2407
        %v2414 = vmul.f32 %v2391, %v2403
        %v2415 = vmul.f32 %v2395, %v2407
        %v2416 = vmul.f32 %v2392, %v2403
        %v2417 = vmul.f32 %v2396, %v2407
        %2418 = vset.pattern.permute.xlu0 26
        %2419 = vperm.xlu0 %2418, %v381
        %v2420 = vpop.permute.xlu0 %2419
        %2422 = vset.pattern.permute.xlu0 26
        %2423 = vperm.xlu0 %2422, %v382
        %v2424 = vpop.permute.xlu0 %2423
        %2426 = vset.pattern.permute.xlu0 26
        %2427 = vperm.xlu0 %2426, %v383
        %v2428 = vpop.permute.xlu0 %2427
        %2430 = vset.pattern.permute.xlu0 26
        %2431 = vperm.xlu0 %2430, %v384
        %v2432 = vpop.permute.xlu0 %2431
        %v2434 = vmul.f32 %v2410, %v2420
        %v2435 = vmul.f32 %v2411, %v2420
        %v2436 = vmul.f32 %v2412, %v2424
        %v2437 = vmul.f32 %v2413, %v2424
        %v2438 = vmul.f32 %v2414, %v2428
        %v2439 = vmul.f32 %v2415, %v2428
        %v2440 = vmul.f32 %v2416, %v2432
        %v2441 = vmul.f32 %v2417, %v2432
        %v2442 = vadd.f32 %v2364, %v2434
        %v2443 = vadd.f32 %v2365, %v2435
        %v2444 = vadd.f32 %v2366, %v2436
        %v2445 = vadd.f32 %v2367, %v2437
        %v2446 = vadd.f32 %v2368, %v2438
        %v2447 = vadd.f32 %v2369, %v2439
        %v2448 = vadd.f32 %v2370, %v2440
        %v2449 = vadd.f32 %v2371, %v2441
        %2450 = vrot.lane.b32.xlu0 %v373, 125
        %v2451 = vpop.permute.xlu0 %2450
        %2452 = vrot.lane.b32.xlu0 %v375, 125
        %v2453 = vpop.permute.xlu0 %2452
        %2454 = vrot.lane.b32.xlu0 %v377, 125
        %v2455 = vpop.permute.xlu0 %2454
        %2456 = vrot.lane.b32.xlu0 %v379, 125
        %v2457 = vpop.permute.xlu0 %2456
        %2458 = vrot.lane.b32.xlu0 %v374, 125
        %v2459 = vpop.permute.xlu0 %2458
        %2460 = vrot.lane.b32.xlu0 %v376, 125
        %v2461 = vpop.permute.xlu0 %2460
        %2462 = vrot.lane.b32.xlu0 %v378, 125
        %v2463 = vpop.permute.xlu0 %2462
        %2464 = vrot.lane.b32.xlu0 %v380, 125
        %v2465 = vpop.permute.xlu0 %2464
        %vm2466 = vcmp.lt.s32.totalorder %v402, 125
        %v2467 = vsel %vm2466, %v2451, %v2459
        %v2468 = vsel %vm2466, %v2453, %v2461
        %v2469 = vsel %vm2466, %v2455, %v2463
        %v2470 = vsel %vm2466, %v2457, %v2465
        %v2471 = vsel %vm2466, %v2459, %v2451
        %v2472 = vsel %vm2466, %v2461, %v2453
        %v2473 = vsel %vm2466, %v2463, %v2455
        %v2474 = vsel %vm2466, %v2465, %v2457
        %s2475 = scalar_lea.vmem [#allocation2], 51
        %v2476 = vld [vmem:[%s2475] ss:$8 sm:$0x3]
        %v2478 = vlaneseq
        %v2479 = vshrl.u32 %v2478, 7
        %v2480 = vsub.s32 0, %v2479
        %v2481 = vrot.slane %v2476, %v2480
        %v2482 = vlaneseq
        %v2483 = vshrl.u32 %v2482, 7
        %v2484 = vsub.s32 1, %v2483
        %v2485 = vrot.slane %v2476, %v2484
        %v2488 = vmul.f32 %v2467, %v2481
        %v2489 = vmul.f32 %v2471, %v2485
        %v2490 = vmul.f32 %v2468, %v2481
        %v2491 = vmul.f32 %v2472, %v2485
        %v2492 = vmul.f32 %v2469, %v2481
        %v2493 = vmul.f32 %v2473, %v2485
        %v2494 = vmul.f32 %v2470, %v2481
        %v2495 = vmul.f32 %v2474, %v2485
        %2496 = vset.pattern.permute.xlu0 27
        %2497 = vperm.xlu0 %2496, %v381
        %v2498 = vpop.permute.xlu0 %2497
        %2500 = vset.pattern.permute.xlu0 27
        %2501 = vperm.xlu0 %2500, %v382
        %v2502 = vpop.permute.xlu0 %2501
        %2504 = vset.pattern.permute.xlu0 27
        %2505 = vperm.xlu0 %2504, %v383
        %v2506 = vpop.permute.xlu0 %2505
        %2508 = vset.pattern.permute.xlu0 27
        %2509 = vperm.xlu0 %2508, %v384
        %v2510 = vpop.permute.xlu0 %2509
        %v2512 = vmul.f32 %v2488, %v2498
        %v2513 = vmul.f32 %v2489, %v2498
        %v2514 = vmul.f32 %v2490, %v2502
        %v2515 = vmul.f32 %v2491, %v2502
        %v2516 = vmul.f32 %v2492, %v2506
        %v2517 = vmul.f32 %v2493, %v2506
        %v2518 = vmul.f32 %v2494, %v2510
        %v2519 = vmul.f32 %v2495, %v2510
        %v2520 = vadd.f32 %v2442, %v2512
        %v2521 = vadd.f32 %v2443, %v2513
        %v2522 = vadd.f32 %v2444, %v2514
        %v2523 = vadd.f32 %v2445, %v2515
        %v2524 = vadd.f32 %v2446, %v2516
        %v2525 = vadd.f32 %v2447, %v2517
        %v2526 = vadd.f32 %v2448, %v2518
        %v2527 = vadd.f32 %v2449, %v2519
        %2528 = vrot.lane.b32.xlu0 %v373, 115
        %v2529 = vpop.permute.xlu0 %2528
        %2530 = vrot.lane.b32.xlu0 %v375, 115
        %v2531 = vpop.permute.xlu0 %2530
        %2532 = vrot.lane.b32.xlu0 %v377, 115
        %v2533 = vpop.permute.xlu0 %2532
        %2534 = vrot.lane.b32.xlu0 %v379, 115
        %v2535 = vpop.permute.xlu0 %2534
        %2536 = vrot.lane.b32.xlu0 %v374, 115
        %v2537 = vpop.permute.xlu0 %2536
        %2538 = vrot.lane.b32.xlu0 %v376, 115
        %v2539 = vpop.permute.xlu0 %2538
        %2540 = vrot.lane.b32.xlu0 %v378, 115
        %v2541 = vpop.permute.xlu0 %2540
        %2542 = vrot.lane.b32.xlu0 %v380, 115
        %v2543 = vpop.permute.xlu0 %2542
        %vm2544 = vcmp.lt.s32.totalorder %v402, 115
        %v2545 = vsel %vm2544, %v2529, %v2537
        %v2546 = vsel %vm2544, %v2531, %v2539
        %v2547 = vsel %vm2544, %v2533, %v2541
        %v2548 = vsel %vm2544, %v2535, %v2543
        %v2549 = vsel %vm2544, %v2537, %v2529
        %v2550 = vsel %vm2544, %v2539, %v2531
        %v2551 = vsel %vm2544, %v2541, %v2533
        %v2552 = vsel %vm2544, %v2543, %v2535
        %s2553 = scalar_lea.vmem [#allocation2], 52
        %v2554 = vld [vmem:[%s2553] ss:$8 sm:$0x3]
        %v2556 = vlaneseq
        %v2557 = vshrl.u32 %v2556, 7
        %v2558 = vsub.s32 0, %v2557
        %v2559 = vrot.slane %v2554, %v2558
        %v2560 = vlaneseq
        %v2561 = vshrl.u32 %v2560, 7
        %v2562 = vsub.s32 1, %v2561
        %v2563 = vrot.slane %v2554, %v2562
        %v2566 = vmul.f32 %v2545, %v2559
        %v2567 = vmul.f32 %v2549, %v2563
        %v2568 = vmul.f32 %v2546, %v2559
        %v2569 = vmul.f32 %v2550, %v2563
        %v2570 = vmul.f32 %v2547, %v2559
        %v2571 = vmul.f32 %v2551, %v2563
        %v2572 = vmul.f32 %v2548, %v2559
        %v2573 = vmul.f32 %v2552, %v2563
        %2574 = vset.pattern.permute.xlu0 28
        %2575 = vperm.xlu0 %2574, %v381
        %v2576 = vpop.permute.xlu0 %2575
        %2578 = vset.pattern.permute.xlu0 28
        %2579 = vperm.xlu0 %2578, %v382
        %v2580 = vpop.permute.xlu0 %2579
        %2582 = vset.pattern.permute.xlu0 28
        %2583 = vperm.xlu0 %2582, %v383
        %v2584 = vpop.permute.xlu0 %2583
        %2586 = vset.pattern.permute.xlu0 28
        %2587 = vperm.xlu0 %2586, %v384
        %v2588 = vpop.permute.xlu0 %2587
        %v2590 = vmul.f32 %v2566, %v2576
        %v2591 = vmul.f32 %v2567, %v2576
        %v2592 = vmul.f32 %v2568, %v2580
        %v2593 = vmul.f32 %v2569, %v2580
        %v2594 = vmul.f32 %v2570, %v2584
        %v2595 = vmul.f32 %v2571, %v2584
        %v2596 = vmul.f32 %v2572, %v2588
        %v2597 = vmul.f32 %v2573, %v2588
        %v2598 = vadd.f32 %v2520, %v2590
        %v2599 = vadd.f32 %v2521, %v2591
        %v2600 = vadd.f32 %v2522, %v2592
        %v2601 = vadd.f32 %v2523, %v2593
        %v2602 = vadd.f32 %v2524, %v2594
        %v2603 = vadd.f32 %v2525, %v2595
        %v2604 = vadd.f32 %v2526, %v2596
        %v2605 = vadd.f32 %v2527, %v2597
        %2606 = vrot.lane.b32.xlu0 %v373, 114
        %v2607 = vpop.permute.xlu0 %2606
        %2608 = vrot.lane.b32.xlu0 %v375, 114
        %v2609 = vpop.permute.xlu0 %2608
        %2610 = vrot.lane.b32.xlu0 %v377, 114
        %v2611 = vpop.permute.xlu0 %2610
        %2612 = vrot.lane.b32.xlu0 %v379, 114
        %v2613 = vpop.permute.xlu0 %2612
        %2614 = vrot.lane.b32.xlu0 %v374, 114
        %v2615 = vpop.permute.xlu0 %2614
        %2616 = vrot.lane.b32.xlu0 %v376, 114
        %v2617 = vpop.permute.xlu0 %2616
        %2618 = vrot.lane.b32.xlu0 %v378, 114
        %v2619 = vpop.permute.xlu0 %2618
        %2620 = vrot.lane.b32.xlu0 %v380, 114
        %v2621 = vpop.permute.xlu0 %2620
        %vm2622 = vcmp.lt.s32.totalorder %v402, 114
        %v2623 = vsel %vm2622, %v2607, %v2615
        %v2624 = vsel %vm2622, %v2609, %v2617
        %v2625 = vsel %vm2622, %v2611, %v2619
        %v2626 = vsel %vm2622, %v2613, %v2621
        %v2627 = vsel %vm2622, %v2615, %v2607
        %v2628 = vsel %vm2622, %v2617, %v2609
        %v2629 = vsel %vm2622, %v2619, %v2611
        %v2630 = vsel %vm2622, %v2621, %v2613
        %s2631 = scalar_lea.vmem [#allocation2], 53
        %v2632 = vld [vmem:[%s2631] ss:$8 sm:$0x3]
        %v2634 = vlaneseq
        %v2635 = vshrl.u32 %v2634, 7
        %v2636 = vsub.s32 0, %v2635
        %v2637 = vrot.slane %v2632, %v2636
        %v2638 = vlaneseq
        %v2639 = vshrl.u32 %v2638, 7
        %v2640 = vsub.s32 1, %v2639
        %v2641 = vrot.slane %v2632, %v2640
        %v2644 = vmul.f32 %v2623, %v2637
        %v2645 = vmul.f32 %v2627, %v2641
        %v2646 = vmul.f32 %v2624, %v2637
        %v2647 = vmul.f32 %v2628, %v2641
        %v2648 = vmul.f32 %v2625, %v2637
        %v2649 = vmul.f32 %v2629, %v2641
        %v2650 = vmul.f32 %v2626, %v2637
        %v2651 = vmul.f32 %v2630, %v2641
        %2652 = vset.pattern.permute.xlu0 29
        %2653 = vperm.xlu0 %2652, %v381
        %v2654 = vpop.permute.xlu0 %2653
        %2656 = vset.pattern.permute.xlu0 29
        %2657 = vperm.xlu0 %2656, %v382
        %v2658 = vpop.permute.xlu0 %2657
        %2660 = vset.pattern.permute.xlu0 29
        %2661 = vperm.xlu0 %2660, %v383
        %v2662 = vpop.permute.xlu0 %2661
        %2664 = vset.pattern.permute.xlu0 29
        %2665 = vperm.xlu0 %2664, %v384
        %v2666 = vpop.permute.xlu0 %2665
        %v2668 = vmul.f32 %v2644, %v2654
        %v2669 = vmul.f32 %v2645, %v2654
        %v2670 = vmul.f32 %v2646, %v2658
        %v2671 = vmul.f32 %v2647, %v2658
        %v2672 = vmul.f32 %v2648, %v2662
        %v2673 = vmul.f32 %v2649, %v2662
        %v2674 = vmul.f32 %v2650, %v2666
        %v2675 = vmul.f32 %v2651, %v2666
        %v2676 = vadd.f32 %v2598, %v2668
        %v2677 = vadd.f32 %v2599, %v2669
        %v2678 = vadd.f32 %v2600, %v2670
        %v2679 = vadd.f32 %v2601, %v2671
        %v2680 = vadd.f32 %v2602, %v2672
        %v2681 = vadd.f32 %v2603, %v2673
        %v2682 = vadd.f32 %v2604, %v2674
        %v2683 = vadd.f32 %v2605, %v2675
        %2684 = vrot.lane.b32.xlu0 %v373, 113
        %v2685 = vpop.permute.xlu0 %2684
        %2686 = vrot.lane.b32.xlu0 %v375, 113
        %v2687 = vpop.permute.xlu0 %2686
        %2688 = vrot.lane.b32.xlu0 %v377, 113
        %v2689 = vpop.permute.xlu0 %2688
        %2690 = vrot.lane.b32.xlu0 %v379, 113
        %v2691 = vpop.permute.xlu0 %2690
        %2692 = vrot.lane.b32.xlu0 %v374, 113
        %v2693 = vpop.permute.xlu0 %2692
        %2694 = vrot.lane.b32.xlu0 %v376, 113
        %v2695 = vpop.permute.xlu0 %2694
        %2696 = vrot.lane.b32.xlu0 %v378, 113
        %v2697 = vpop.permute.xlu0 %2696
        %2698 = vrot.lane.b32.xlu0 %v380, 113
        %v2699 = vpop.permute.xlu0 %2698
        %vm2700 = vcmp.lt.s32.totalorder %v402, 113
        %v2701 = vsel %vm2700, %v2685, %v2693
        %v2702 = vsel %vm2700, %v2687, %v2695
        %v2703 = vsel %vm2700, %v2689, %v2697
        %v2704 = vsel %vm2700, %v2691, %v2699
        %v2705 = vsel %vm2700, %v2693, %v2685
        %v2706 = vsel %vm2700, %v2695, %v2687
        %v2707 = vsel %vm2700, %v2697, %v2689
        %v2708 = vsel %vm2700, %v2699, %v2691
        %s2709 = scalar_lea.vmem [#allocation2], 54
        %v2710 = vld [vmem:[%s2709] ss:$8 sm:$0x3]
        %v2712 = vlaneseq
        %v2713 = vshrl.u32 %v2712, 7
        %v2714 = vsub.s32 0, %v2713
        %v2715 = vrot.slane %v2710, %v2714
        %v2716 = vlaneseq
        %v2717 = vshrl.u32 %v2716, 7
        %v2718 = vsub.s32 1, %v2717
        %v2719 = vrot.slane %v2710, %v2718
        %v2722 = vmul.f32 %v2701, %v2715
        %v2723 = vmul.f32 %v2705, %v2719
        %v2724 = vmul.f32 %v2702, %v2715
        %v2725 = vmul.f32 %v2706, %v2719
        %v2726 = vmul.f32 %v2703, %v2715
        %v2727 = vmul.f32 %v2707, %v2719
        %v2728 = vmul.f32 %v2704, %v2715
        %v2729 = vmul.f32 %v2708, %v2719
        %2730 = vset.pattern.permute.xlu0 30
        %2731 = vperm.xlu0 %2730, %v381
        %v2732 = vpop.permute.xlu0 %2731
        %2734 = vset.pattern.permute.xlu0 30
        %2735 = vperm.xlu0 %2734, %v382
        %v2736 = vpop.permute.xlu0 %2735
        %2738 = vset.pattern.permute.xlu0 30
        %2739 = vperm.xlu0 %2738, %v383
        %v2740 = vpop.permute.xlu0 %2739
        %2742 = vset.pattern.permute.xlu0 30
        %2743 = vperm.xlu0 %2742, %v384
        %v2744 = vpop.permute.xlu0 %2743
        %v2746 = vmul.f32 %v2722, %v2732
        %v2747 = vmul.f32 %v2723, %v2732
        %v2748 = vmul.f32 %v2724, %v2736
        %v2749 = vmul.f32 %v2725, %v2736
        %v2750 = vmul.f32 %v2726, %v2740
        %v2751 = vmul.f32 %v2727, %v2740
        %v2752 = vmul.f32 %v2728, %v2744
        %v2753 = vmul.f32 %v2729, %v2744
        %v2754 = vadd.f32 %v2676, %v2746
        %v2755 = vadd.f32 %v2677, %v2747
        %v2756 = vadd.f32 %v2678, %v2748
        %v2757 = vadd.f32 %v2679, %v2749
        %v2758 = vadd.f32 %v2680, %v2750
        %v2759 = vadd.f32 %v2681, %v2751
        %v2760 = vadd.f32 %v2682, %v2752
        %v2761 = vadd.f32 %v2683, %v2753
        %2762 = vrot.lane.b32.xlu0 %v373, 112
        %v2763 = vpop.permute.xlu0 %2762
        %2764 = vrot.lane.b32.xlu0 %v375, 112
        %v2765 = vpop.permute.xlu0 %2764
        %2766 = vrot.lane.b32.xlu0 %v377, 112
        %v2767 = vpop.permute.xlu0 %2766
        %2768 = vrot.lane.b32.xlu0 %v379, 112
        %v2769 = vpop.permute.xlu0 %2768
        %2770 = vrot.lane.b32.xlu0 %v374, 112
        %v2771 = vpop.permute.xlu0 %2770
        %2772 = vrot.lane.b32.xlu0 %v376, 112
        %v2773 = vpop.permute.xlu0 %2772
        %2774 = vrot.lane.b32.xlu0 %v378, 112
        %v2775 = vpop.permute.xlu0 %2774
        %2776 = vrot.lane.b32.xlu0 %v380, 112
        %v2777 = vpop.permute.xlu0 %2776
        %vm2778 = vcmp.lt.s32.totalorder %v402, 112
        %v2779 = vsel %vm2778, %v2763, %v2771
        %v2780 = vsel %vm2778, %v2765, %v2773
        %v2781 = vsel %vm2778, %v2767, %v2775
        %v2782 = vsel %vm2778, %v2769, %v2777
        %v2783 = vsel %vm2778, %v2771, %v2763
        %v2784 = vsel %vm2778, %v2773, %v2765
        %v2785 = vsel %vm2778, %v2775, %v2767
        %v2786 = vsel %vm2778, %v2777, %v2769
        %s2787 = scalar_lea.vmem [#allocation2], 55
        %v2788 = vld [vmem:[%s2787] ss:$8 sm:$0x3]
        %v2790 = vlaneseq
        %v2791 = vshrl.u32 %v2790, 7
        %v2792 = vsub.s32 0, %v2791
        %v2793 = vrot.slane %v2788, %v2792
        %v2794 = vlaneseq
        %v2795 = vshrl.u32 %v2794, 7
        %v2796 = vsub.s32 1, %v2795
        %v2797 = vrot.slane %v2788, %v2796
        %v2800 = vmul.f32 %v2779, %v2793
        %v2801 = vmul.f32 %v2783, %v2797
        %v2802 = vmul.f32 %v2780, %v2793
        %v2803 = vmul.f32 %v2784, %v2797
        %v2804 = vmul.f32 %v2781, %v2793
        %v2805 = vmul.f32 %v2785, %v2797
        %v2806 = vmul.f32 %v2782, %v2793
        %v2807 = vmul.f32 %v2786, %v2797
        %2808 = vset.pattern.permute.xlu0 31
        %2809 = vperm.xlu0 %2808, %v381
        %v2810 = vpop.permute.xlu0 %2809
        %2812 = vset.pattern.permute.xlu0 31
        %2813 = vperm.xlu0 %2812, %v382
        %v2814 = vpop.permute.xlu0 %2813
        %2816 = vset.pattern.permute.xlu0 31
        %2817 = vperm.xlu0 %2816, %v383
        %v2818 = vpop.permute.xlu0 %2817
        %2820 = vset.pattern.permute.xlu0 31
        %2821 = vperm.xlu0 %2820, %v384
        %v2822 = vpop.permute.xlu0 %2821
        %v2824 = vmul.f32 %v2800, %v2810
        %v2825 = vmul.f32 %v2801, %v2810
        %v2826 = vmul.f32 %v2802, %v2814
        %v2827 = vmul.f32 %v2803, %v2814
        %v2828 = vmul.f32 %v2804, %v2818
        %v2829 = vmul.f32 %v2805, %v2818
        %v2830 = vmul.f32 %v2806, %v2822
        %v2831 = vmul.f32 %v2807, %v2822
        %v2832 = vadd.f32 %v2754, %v2824
        %v2833 = vadd.f32 %v2755, %v2825
        %v2834 = vadd.f32 %v2756, %v2826
        %v2835 = vadd.f32 %v2757, %v2827
        %v2836 = vadd.f32 %v2758, %v2828
        %v2837 = vadd.f32 %v2759, %v2829
        %v2838 = vadd.f32 %v2760, %v2830
        %v2839 = vadd.f32 %v2761, %v2831
        %2840 = vrot.lane.b32.xlu0 %v373, 111
        %v2841 = vpop.permute.xlu0 %2840
        %2842 = vrot.lane.b32.xlu0 %v375, 111
        %v2843 = vpop.permute.xlu0 %2842
        %2844 = vrot.lane.b32.xlu0 %v377, 111
        %v2845 = vpop.permute.xlu0 %2844
        %2846 = vrot.lane.b32.xlu0 %v379, 111
        %v2847 = vpop.permute.xlu0 %2846
        %2848 = vrot.lane.b32.xlu0 %v374, 111
        %v2849 = vpop.permute.xlu0 %2848
        %2850 = vrot.lane.b32.xlu0 %v376, 111
        %v2851 = vpop.permute.xlu0 %2850
        %2852 = vrot.lane.b32.xlu0 %v378, 111
        %v2853 = vpop.permute.xlu0 %2852
        %2854 = vrot.lane.b32.xlu0 %v380, 111
        %v2855 = vpop.permute.xlu0 %2854
        %vm2856 = vcmp.lt.s32.totalorder %v402, 111
        %v2857 = vsel %vm2856, %v2841, %v2849
        %v2858 = vsel %vm2856, %v2843, %v2851
        %v2859 = vsel %vm2856, %v2845, %v2853
        %v2860 = vsel %vm2856, %v2847, %v2855
        %v2861 = vsel %vm2856, %v2849, %v2841
        %v2862 = vsel %vm2856, %v2851, %v2843
        %v2863 = vsel %vm2856, %v2853, %v2845
        %v2864 = vsel %vm2856, %v2855, %v2847
        %s2865 = scalar_lea.vmem [#allocation2], 64
        %v2866 = vld [vmem:[%s2865] ss:$8 sm:$0x3]
        %v2868 = vlaneseq
        %v2869 = vshrl.u32 %v2868, 7
        %v2870 = vsub.s32 0, %v2869
        %v2871 = vrot.slane %v2866, %v2870
        %v2872 = vlaneseq
        %v2873 = vshrl.u32 %v2872, 7
        %v2874 = vsub.s32 1, %v2873
        %v2875 = vrot.slane %v2866, %v2874
        %v2878 = vmul.f32 %v2857, %v2871
        %v2879 = vmul.f32 %v2861, %v2875
        %v2880 = vmul.f32 %v2858, %v2871
        %v2881 = vmul.f32 %v2862, %v2875
        %v2882 = vmul.f32 %v2859, %v2871
        %v2883 = vmul.f32 %v2863, %v2875
        %v2884 = vmul.f32 %v2860, %v2871
        %v2885 = vmul.f32 %v2864, %v2875
        %2886 = vset.pattern.permute.xlu0 32
        %2887 = vperm.xlu0 %2886, %v381
        %v2888 = vpop.permute.xlu0 %2887
        %2890 = vset.pattern.permute.xlu0 32
        %2891 = vperm.xlu0 %2890, %v382
        %v2892 = vpop.permute.xlu0 %2891
        %2894 = vset.pattern.permute.xlu0 32
        %2895 = vperm.xlu0 %2894, %v383
        %v2896 = vpop.permute.xlu0 %2895
        %2898 = vset.pattern.permute.xlu0 32
        %2899 = vperm.xlu0 %2898, %v384
        %v2900 = vpop.permute.xlu0 %2899
        %v2902 = vmul.f32 %v2878, %v2888
        %v2903 = vmul.f32 %v2879, %v2888
        %v2904 = vmul.f32 %v2880, %v2892
        %v2905 = vmul.f32 %v2881, %v2892
        %v2906 = vmul.f32 %v2882, %v2896
        %v2907 = vmul.f32 %v2883, %v2896
        %v2908 = vmul.f32 %v2884, %v2900
        %v2909 = vmul.f32 %v2885, %v2900
        %v2910 = vadd.f32 %v2832, %v2902
        %v2911 = vadd.f32 %v2833, %v2903
        %v2912 = vadd.f32 %v2834, %v2904
        %v2913 = vadd.f32 %v2835, %v2905
        %v2914 = vadd.f32 %v2836, %v2906
        %v2915 = vadd.f32 %v2837, %v2907
        %v2916 = vadd.f32 %v2838, %v2908
        %v2917 = vadd.f32 %v2839, %v2909
        %2918 = vrot.lane.b32.xlu0 %v373, 110
        %v2919 = vpop.permute.xlu0 %2918
        %2920 = vrot.lane.b32.xlu0 %v375, 110
        %v2921 = vpop.permute.xlu0 %2920
        %2922 = vrot.lane.b32.xlu0 %v377, 110
        %v2923 = vpop.permute.xlu0 %2922
        %2924 = vrot.lane.b32.xlu0 %v379, 110
        %v2925 = vpop.permute.xlu0 %2924
        %2926 = vrot.lane.b32.xlu0 %v374, 110
        %v2927 = vpop.permute.xlu0 %2926
        %2928 = vrot.lane.b32.xlu0 %v376, 110
        %v2929 = vpop.permute.xlu0 %2928
        %2930 = vrot.lane.b32.xlu0 %v378, 110
        %v2931 = vpop.permute.xlu0 %2930
        %2932 = vrot.lane.b32.xlu0 %v380, 110
        %v2933 = vpop.permute.xlu0 %2932
        %vm2934 = vcmp.lt.s32.totalorder %v402, 110
        %v2935 = vsel %vm2934, %v2919, %v2927
        %v2936 = vsel %vm2934, %v2921, %v2929
        %v2937 = vsel %vm2934, %v2923, %v2931
        %v2938 = vsel %vm2934, %v2925, %v2933
        %v2939 = vsel %vm2934, %v2927, %v2919
        %v2940 = vsel %vm2934, %v2929, %v2921
        %v2941 = vsel %vm2934, %v2931, %v2923
        %v2942 = vsel %vm2934, %v2933, %v2925
        %s2943 = scalar_lea.vmem [#allocation2], 65
        %v2944 = vld [vmem:[%s2943] ss:$8 sm:$0x3]
        %v2946 = vlaneseq
        %v2947 = vshrl.u32 %v2946, 7
        %v2948 = vsub.s32 0, %v2947
        %v2949 = vrot.slane %v2944, %v2948
        %v2950 = vlaneseq
        %v2951 = vshrl.u32 %v2950, 7
        %v2952 = vsub.s32 1, %v2951
        %v2953 = vrot.slane %v2944, %v2952
        %v2956 = vmul.f32 %v2935, %v2949
        %v2957 = vmul.f32 %v2939, %v2953
        %v2958 = vmul.f32 %v2936, %v2949
        %v2959 = vmul.f32 %v2940, %v2953
        %v2960 = vmul.f32 %v2937, %v2949
        %v2961 = vmul.f32 %v2941, %v2953
        %v2962 = vmul.f32 %v2938, %v2949
        %v2963 = vmul.f32 %v2942, %v2953
        %2964 = vset.pattern.permute.xlu0 33
        %2965 = vperm.xlu0 %2964, %v381
        %v2966 = vpop.permute.xlu0 %2965
        %2968 = vset.pattern.permute.xlu0 33
        %2969 = vperm.xlu0 %2968, %v382
        %v2970 = vpop.permute.xlu0 %2969
        %2972 = vset.pattern.permute.xlu0 33
        %2973 = vperm.xlu0 %2972, %v383
        %v2974 = vpop.permute.xlu0 %2973
        %2976 = vset.pattern.permute.xlu0 33
        %2977 = vperm.xlu0 %2976, %v384
        %v2978 = vpop.permute.xlu0 %2977
        %v2980 = vmul.f32 %v2956, %v2966
        %v2981 = vmul.f32 %v2957, %v2966
        %v2982 = vmul.f32 %v2958, %v2970
        %v2983 = vmul.f32 %v2959, %v2970
        %v2984 = vmul.f32 %v2960, %v2974
        %v2985 = vmul.f32 %v2961, %v2974
        %v2986 = vmul.f32 %v2962, %v2978
        %v2987 = vmul.f32 %v2963, %v2978
        %v2988 = vadd.f32 %v2910, %v2980
        %v2989 = vadd.f32 %v2911, %v2981
        %v2990 = vadd.f32 %v2912, %v2982
        %v2991 = vadd.f32 %v2913, %v2983
        %v2992 = vadd.f32 %v2914, %v2984
        %v2993 = vadd.f32 %v2915, %v2985
        %v2994 = vadd.f32 %v2916, %v2986
        %v2995 = vadd.f32 %v2917, %v2987
        %2996 = vrot.lane.b32.xlu0 %v373, 109
        %v2997 = vpop.permute.xlu0 %2996
        %2998 = vrot.lane.b32.xlu0 %v375, 109
        %v2999 = vpop.permute.xlu0 %2998
        %3000 = vrot.lane.b32.xlu0 %v377, 109
        %v3001 = vpop.permute.xlu0 %3000
        %3002 = vrot.lane.b32.xlu0 %v379, 109
        %v3003 = vpop.permute.xlu0 %3002
        %3004 = vrot.lane.b32.xlu0 %v374, 109
        %v3005 = vpop.permute.xlu0 %3004
        %3006 = vrot.lane.b32.xlu0 %v376, 109
        %v3007 = vpop.permute.xlu0 %3006
        %3008 = vrot.lane.b32.xlu0 %v378, 109
        %v3009 = vpop.permute.xlu0 %3008
        %3010 = vrot.lane.b32.xlu0 %v380, 109
        %v3011 = vpop.permute.xlu0 %3010
        %vm3012 = vcmp.lt.s32.totalorder %v402, 109
        %v3013 = vsel %vm3012, %v2997, %v3005
        %v3014 = vsel %vm3012, %v2999, %v3007
        %v3015 = vsel %vm3012, %v3001, %v3009
        %v3016 = vsel %vm3012, %v3003, %v3011
        %v3017 = vsel %vm3012, %v3005, %v2997
        %v3018 = vsel %vm3012, %v3007, %v2999
        %v3019 = vsel %vm3012, %v3009, %v3001
        %v3020 = vsel %vm3012, %v3011, %v3003
        %s3021 = scalar_lea.vmem [#allocation2], 66
        %v3022 = vld [vmem:[%s3021] ss:$8 sm:$0x3]
        %v3024 = vlaneseq
        %v3025 = vshrl.u32 %v3024, 7
        %v3026 = vsub.s32 0, %v3025
        %v3027 = vrot.slane %v3022, %v3026
        %v3028 = vlaneseq
        %v3029 = vshrl.u32 %v3028, 7
        %v3030 = vsub.s32 1, %v3029
        %v3031 = vrot.slane %v3022, %v3030
        %v3034 = vmul.f32 %v3013, %v3027
        %v3035 = vmul.f32 %v3017, %v3031
        %v3036 = vmul.f32 %v3014, %v3027
        %v3037 = vmul.f32 %v3018, %v3031
        %v3038 = vmul.f32 %v3015, %v3027
        %v3039 = vmul.f32 %v3019, %v3031
        %v3040 = vmul.f32 %v3016, %v3027
        %v3041 = vmul.f32 %v3020, %v3031
        %3042 = vset.pattern.permute.xlu0 34
        %3043 = vperm.xlu0 %3042, %v381
        %v3044 = vpop.permute.xlu0 %3043
        %3046 = vset.pattern.permute.xlu0 34
        %3047 = vperm.xlu0 %3046, %v382
        %v3048 = vpop.permute.xlu0 %3047
        %3050 = vset.pattern.permute.xlu0 34
        %3051 = vperm.xlu0 %3050, %v383
        %v3052 = vpop.permute.xlu0 %3051
        %3054 = vset.pattern.permute.xlu0 34
        %3055 = vperm.xlu0 %3054, %v384
        %v3056 = vpop.permute.xlu0 %3055
        %v3058 = vmul.f32 %v3034, %v3044
        %v3059 = vmul.f32 %v3035, %v3044
        %v3060 = vmul.f32 %v3036, %v3048
        %v3061 = vmul.f32 %v3037, %v3048
        %v3062 = vmul.f32 %v3038, %v3052
        %v3063 = vmul.f32 %v3039, %v3052
        %v3064 = vmul.f32 %v3040, %v3056
        %v3065 = vmul.f32 %v3041, %v3056
        %v3066 = vadd.f32 %v2988, %v3058
        %v3067 = vadd.f32 %v2989, %v3059
        %v3068 = vadd.f32 %v2990, %v3060
        %v3069 = vadd.f32 %v2991, %v3061
        %v3070 = vadd.f32 %v2992, %v3062
        %v3071 = vadd.f32 %v2993, %v3063
        %v3072 = vadd.f32 %v2994, %v3064
        %v3073 = vadd.f32 %v2995, %v3065
        %3074 = vrot.lane.b32.xlu0 %v373, 99
        %v3075 = vpop.permute.xlu0 %3074
        %3076 = vrot.lane.b32.xlu0 %v375, 99
        %v3077 = vpop.permute.xlu0 %3076
        %3078 = vrot.lane.b32.xlu0 %v377, 99
        %v3079 = vpop.permute.xlu0 %3078
        %3080 = vrot.lane.b32.xlu0 %v379, 99
        %v3081 = vpop.permute.xlu0 %3080
        %3082 = vrot.lane.b32.xlu0 %v374, 99
        %v3083 = vpop.permute.xlu0 %3082
        %3084 = vrot.lane.b32.xlu0 %v376, 99
        %v3085 = vpop.permute.xlu0 %3084
        %3086 = vrot.lane.b32.xlu0 %v378, 99
        %v3087 = vpop.permute.xlu0 %3086
        %3088 = vrot.lane.b32.xlu0 %v380, 99
        %v3089 = vpop.permute.xlu0 %3088
        %vm3090 = vcmp.lt.s32.totalorder %v402, 99
        %v3091 = vsel %vm3090, %v3075, %v3083
        %v3092 = vsel %vm3090, %v3077, %v3085
        %v3093 = vsel %vm3090, %v3079, %v3087
        %v3094 = vsel %vm3090, %v3081, %v3089
        %v3095 = vsel %vm3090, %v3083, %v3075
        %v3096 = vsel %vm3090, %v3085, %v3077
        %v3097 = vsel %vm3090, %v3087, %v3079
        %v3098 = vsel %vm3090, %v3089, %v3081
        %s3099 = scalar_lea.vmem [#allocation2], 67
        %v3100 = vld [vmem:[%s3099] ss:$8 sm:$0x3]
        %v3102 = vlaneseq
        %v3103 = vshrl.u32 %v3102, 7
        %v3104 = vsub.s32 0, %v3103
        %v3105 = vrot.slane %v3100, %v3104
        %v3106 = vlaneseq
        %v3107 = vshrl.u32 %v3106, 7
        %v3108 = vsub.s32 1, %v3107
        %v3109 = vrot.slane %v3100, %v3108
        %v3112 = vmul.f32 %v3091, %v3105
        %v3113 = vmul.f32 %v3095, %v3109
        %v3114 = vmul.f32 %v3092, %v3105
        %v3115 = vmul.f32 %v3096, %v3109
        %v3116 = vmul.f32 %v3093, %v3105
        %v3117 = vmul.f32 %v3097, %v3109
        %v3118 = vmul.f32 %v3094, %v3105
        %v3119 = vmul.f32 %v3098, %v3109
        %3120 = vset.pattern.permute.xlu0 35
        %3121 = vperm.xlu0 %3120, %v381
        %v3122 = vpop.permute.xlu0 %3121
        %3124 = vset.pattern.permute.xlu0 35
        %3125 = vperm.xlu0 %3124, %v382
        %v3126 = vpop.permute.xlu0 %3125
        %3128 = vset.pattern.permute.xlu0 35
        %3129 = vperm.xlu0 %3128, %v383
        %v3130 = vpop.permute.xlu0 %3129
        %3132 = vset.pattern.permute.xlu0 35
        %3133 = vperm.xlu0 %3132, %v384
        %v3134 = vpop.permute.xlu0 %3133
        %v3136 = vmul.f32 %v3112, %v3122
        %v3137 = vmul.f32 %v3113, %v3122
        %v3138 = vmul.f32 %v3114, %v3126
        %v3139 = vmul.f32 %v3115, %v3126
        %v3140 = vmul.f32 %v3116, %v3130
        %v3141 = vmul.f32 %v3117, %v3130
        %v3142 = vmul.f32 %v3118, %v3134
        %v3143 = vmul.f32 %v3119, %v3134
        %v3144 = vadd.f32 %v3066, %v3136
        %v3145 = vadd.f32 %v3067, %v3137
        %v3146 = vadd.f32 %v3068, %v3138
        %v3147 = vadd.f32 %v3069, %v3139
        %v3148 = vadd.f32 %v3070, %v3140
        %v3149 = vadd.f32 %v3071, %v3141
        %v3150 = vadd.f32 %v3072, %v3142
        %v3151 = vadd.f32 %v3073, %v3143
        %3152 = vrot.lane.b32.xlu0 %v373, 98
        %v3153 = vpop.permute.xlu0 %3152
        %3154 = vrot.lane.b32.xlu0 %v375, 98
        %v3155 = vpop.permute.xlu0 %3154
        %3156 = vrot.lane.b32.xlu0 %v377, 98
        %v3157 = vpop.permute.xlu0 %3156
        %3158 = vrot.lane.b32.xlu0 %v379, 98
        %v3159 = vpop.permute.xlu0 %3158
        %3160 = vrot.lane.b32.xlu0 %v374, 98
        %v3161 = vpop.permute.xlu0 %3160
        %3162 = vrot.lane.b32.xlu0 %v376, 98
        %v3163 = vpop.permute.xlu0 %3162
        %3164 = vrot.lane.b32.xlu0 %v378, 98
        %v3165 = vpop.permute.xlu0 %3164
        %3166 = vrot.lane.b32.xlu0 %v380, 98
        %v3167 = vpop.permute.xlu0 %3166
        %vm3168 = vcmp.lt.s32.totalorder %v402, 98
        %v3169 = vsel %vm3168, %v3153, %v3161
        %v3170 = vsel %vm3168, %v3155, %v3163
        %v3171 = vsel %vm3168, %v3157, %v3165
        %v3172 = vsel %vm3168, %v3159, %v3167
        %v3173 = vsel %vm3168, %v3161, %v3153
        %v3174 = vsel %vm3168, %v3163, %v3155
        %v3175 = vsel %vm3168, %v3165, %v3157
        %v3176 = vsel %vm3168, %v3167, %v3159
        %s3177 = scalar_lea.vmem [#allocation2], 68
        %v3178 = vld [vmem:[%s3177] ss:$8 sm:$0x3]
        %v3180 = vlaneseq
        %v3181 = vshrl.u32 %v3180, 7
        %v3182 = vsub.s32 0, %v3181
        %v3183 = vrot.slane %v3178, %v3182
        %v3184 = vlaneseq
        %v3185 = vshrl.u32 %v3184, 7
        %v3186 = vsub.s32 1, %v3185
        %v3187 = vrot.slane %v3178, %v3186
        %v3190 = vmul.f32 %v3169, %v3183
        %v3191 = vmul.f32 %v3173, %v3187
        %v3192 = vmul.f32 %v3170, %v3183
        %v3193 = vmul.f32 %v3174, %v3187
        %v3194 = vmul.f32 %v3171, %v3183
        %v3195 = vmul.f32 %v3175, %v3187
        %v3196 = vmul.f32 %v3172, %v3183
        %v3197 = vmul.f32 %v3176, %v3187
        %3198 = vset.pattern.permute.xlu0 36
        %3199 = vperm.xlu0 %3198, %v381
        %v3200 = vpop.permute.xlu0 %3199
        %3202 = vset.pattern.permute.xlu0 36
        %3203 = vperm.xlu0 %3202, %v382
        %v3204 = vpop.permute.xlu0 %3203
        %3206 = vset.pattern.permute.xlu0 36
        %3207 = vperm.xlu0 %3206, %v383
        %v3208 = vpop.permute.xlu0 %3207
        %3210 = vset.pattern.permute.xlu0 36
        %3211 = vperm.xlu0 %3210, %v384
        %v3212 = vpop.permute.xlu0 %3211
        %v3214 = vmul.f32 %v3190, %v3200
        %v3215 = vmul.f32 %v3191, %v3200
        %v3216 = vmul.f32 %v3192, %v3204
        %v3217 = vmul.f32 %v3193, %v3204
        %v3218 = vmul.f32 %v3194, %v3208
        %v3219 = vmul.f32 %v3195, %v3208
        %v3220 = vmul.f32 %v3196, %v3212
        %v3221 = vmul.f32 %v3197, %v3212
        %v3222 = vadd.f32 %v3144, %v3214
        %v3223 = vadd.f32 %v3145, %v3215
        %v3224 = vadd.f32 %v3146, %v3216
        %v3225 = vadd.f32 %v3147, %v3217
        %v3226 = vadd.f32 %v3148, %v3218
        %v3227 = vadd.f32 %v3149, %v3219
        %v3228 = vadd.f32 %v3150, %v3220
        %v3229 = vadd.f32 %v3151, %v3221
        %3230 = vrot.lane.b32.xlu0 %v373, 97
        %v3231 = vpop.permute.xlu0 %3230
        %3232 = vrot.lane.b32.xlu0 %v375, 97
        %v3233 = vpop.permute.xlu0 %3232
        %3234 = vrot.lane.b32.xlu0 %v377, 97
        %v3235 = vpop.permute.xlu0 %3234
        %3236 = vrot.lane.b32.xlu0 %v379, 97
        %v3237 = vpop.permute.xlu0 %3236
        %3238 = vrot.lane.b32.xlu0 %v374, 97
        %v3239 = vpop.permute.xlu0 %3238
        %3240 = vrot.lane.b32.xlu0 %v376, 97
        %v3241 = vpop.permute.xlu0 %3240
        %3242 = vrot.lane.b32.xlu0 %v378, 97
        %v3243 = vpop.permute.xlu0 %3242
        %3244 = vrot.lane.b32.xlu0 %v380, 97
        %v3245 = vpop.permute.xlu0 %3244
        %vm3246 = vcmp.lt.s32.totalorder %v402, 97
        %v3247 = vsel %vm3246, %v3231, %v3239
        %v3248 = vsel %vm3246, %v3233, %v3241
        %v3249 = vsel %vm3246, %v3235, %v3243
        %v3250 = vsel %vm3246, %v3237, %v3245
        %v3251 = vsel %vm3246, %v3239, %v3231
        %v3252 = vsel %vm3246, %v3241, %v3233
        %v3253 = vsel %vm3246, %v3243, %v3235
        %v3254 = vsel %vm3246, %v3245, %v3237
        %s3255 = scalar_lea.vmem [#allocation2], 69
        %v3256 = vld [vmem:[%s3255] ss:$8 sm:$0x3]
        %v3258 = vlaneseq
        %v3259 = vshrl.u32 %v3258, 7
        %v3260 = vsub.s32 0, %v3259
        %v3261 = vrot.slane %v3256, %v3260
        %v3262 = vlaneseq
        %v3263 = vshrl.u32 %v3262, 7
        %v3264 = vsub.s32 1, %v3263
        %v3265 = vrot.slane %v3256, %v3264
        %v3268 = vmul.f32 %v3247, %v3261
        %v3269 = vmul.f32 %v3251, %v3265
        %v3270 = vmul.f32 %v3248, %v3261
        %v3271 = vmul.f32 %v3252, %v3265
        %v3272 = vmul.f32 %v3249, %v3261
        %v3273 = vmul.f32 %v3253, %v3265
        %v3274 = vmul.f32 %v3250, %v3261
        %v3275 = vmul.f32 %v3254, %v3265
        %3276 = vset.pattern.permute.xlu0 37
        %3277 = vperm.xlu0 %3276, %v381
        %v3278 = vpop.permute.xlu0 %3277
        %3280 = vset.pattern.permute.xlu0 37
        %3281 = vperm.xlu0 %3280, %v382
        %v3282 = vpop.permute.xlu0 %3281
        %3284 = vset.pattern.permute.xlu0 37
        %3285 = vperm.xlu0 %3284, %v383
        %v3286 = vpop.permute.xlu0 %3285
        %3288 = vset.pattern.permute.xlu0 37
        %3289 = vperm.xlu0 %3288, %v384
        %v3290 = vpop.permute.xlu0 %3289
        %v3292 = vmul.f32 %v3268, %v3278
        %v3293 = vmul.f32 %v3269, %v3278
        %v3294 = vmul.f32 %v3270, %v3282
        %v3295 = vmul.f32 %v3271, %v3282
        %v3296 = vmul.f32 %v3272, %v3286
        %v3297 = vmul.f32 %v3273, %v3286
        %v3298 = vmul.f32 %v3274, %v3290
        %v3299 = vmul.f32 %v3275, %v3290
        %v3300 = vadd.f32 %v3222, %v3292
        %v3301 = vadd.f32 %v3223, %v3293
        %v3302 = vadd.f32 %v3224, %v3294
        %v3303 = vadd.f32 %v3225, %v3295
        %v3304 = vadd.f32 %v3226, %v3296
        %v3305 = vadd.f32 %v3227, %v3297
        %v3306 = vadd.f32 %v3228, %v3298
        %v3307 = vadd.f32 %v3229, %v3299
        %3308 = vrot.lane.b32.xlu0 %v373, 96
        %v3309 = vpop.permute.xlu0 %3308
        %3310 = vrot.lane.b32.xlu0 %v375, 96
        %v3311 = vpop.permute.xlu0 %3310
        %3312 = vrot.lane.b32.xlu0 %v377, 96
        %v3313 = vpop.permute.xlu0 %3312
        %3314 = vrot.lane.b32.xlu0 %v379, 96
        %v3315 = vpop.permute.xlu0 %3314
        %3316 = vrot.lane.b32.xlu0 %v374, 96
        %v3317 = vpop.permute.xlu0 %3316
        %3318 = vrot.lane.b32.xlu0 %v376, 96
        %v3319 = vpop.permute.xlu0 %3318
        %3320 = vrot.lane.b32.xlu0 %v378, 96
        %v3321 = vpop.permute.xlu0 %3320
        %3322 = vrot.lane.b32.xlu0 %v380, 96
        %v3323 = vpop.permute.xlu0 %3322
        %vm3324 = vcmp.lt.s32.totalorder %v402, 96
        %v3325 = vsel %vm3324, %v3309, %v3317
        %v3326 = vsel %vm3324, %v3311, %v3319
        %v3327 = vsel %vm3324, %v3313, %v3321
        %v3328 = vsel %vm3324, %v3315, %v3323
        %v3329 = vsel %vm3324, %v3317, %v3309
        %v3330 = vsel %vm3324, %v3319, %v3311
        %v3331 = vsel %vm3324, %v3321, %v3313
        %v3332 = vsel %vm3324, %v3323, %v3315
        %s3333 = scalar_lea.vmem [#allocation2], 70
        %v3334 = vld [vmem:[%s3333] ss:$8 sm:$0x3]
        %v3336 = vlaneseq
        %v3337 = vshrl.u32 %v3336, 7
        %v3338 = vsub.s32 0, %v3337
        %v3339 = vrot.slane %v3334, %v3338
        %v3340 = vlaneseq
        %v3341 = vshrl.u32 %v3340, 7
        %v3342 = vsub.s32 1, %v3341
        %v3343 = vrot.slane %v3334, %v3342
        %v3346 = vmul.f32 %v3325, %v3339
        %v3347 = vmul.f32 %v3329, %v3343
        %v3348 = vmul.f32 %v3326, %v3339
        %v3349 = vmul.f32 %v3330, %v3343
        %v3350 = vmul.f32 %v3327, %v3339
        %v3351 = vmul.f32 %v3331, %v3343
        %v3352 = vmul.f32 %v3328, %v3339
        %v3353 = vmul.f32 %v3332, %v3343
        %3354 = vset.pattern.permute.xlu0 38
        %3355 = vperm.xlu0 %3354, %v381
        %v3356 = vpop.permute.xlu0 %3355
        %3358 = vset.pattern.permute.xlu0 38
        %3359 = vperm.xlu0 %3358, %v382
        %v3360 = vpop.permute.xlu0 %3359
        %3362 = vset.pattern.permute.xlu0 38
        %3363 = vperm.xlu0 %3362, %v383
        %v3364 = vpop.permute.xlu0 %3363
        %3366 = vset.pattern.permute.xlu0 38
        %3367 = vperm.xlu0 %3366, %v384
        %v3368 = vpop.permute.xlu0 %3367
        %v3370 = vmul.f32 %v3346, %v3356
        %v3371 = vmul.f32 %v3347, %v3356
        %v3372 = vmul.f32 %v3348, %v3360
        %v3373 = vmul.f32 %v3349, %v3360
        %v3374 = vmul.f32 %v3350, %v3364
        %v3375 = vmul.f32 %v3351, %v3364
        %v3376 = vmul.f32 %v3352, %v3368
        %v3377 = vmul.f32 %v3353, %v3368
        %v3378 = vadd.f32 %v3300, %v3370
        %v3379 = vadd.f32 %v3301, %v3371
        %v3380 = vadd.f32 %v3302, %v3372
        %v3381 = vadd.f32 %v3303, %v3373
        %v3382 = vadd.f32 %v3304, %v3374
        %v3383 = vadd.f32 %v3305, %v3375
        %v3384 = vadd.f32 %v3306, %v3376
        %v3385 = vadd.f32 %v3307, %v3377
        %3386 = vrot.lane.b32.xlu0 %v373, 95
        %v3387 = vpop.permute.xlu0 %3386
        %3388 = vrot.lane.b32.xlu0 %v375, 95
        %v3389 = vpop.permute.xlu0 %3388
        %3390 = vrot.lane.b32.xlu0 %v377, 95
        %v3391 = vpop.permute.xlu0 %3390
        %3392 = vrot.lane.b32.xlu0 %v379, 95
        %v3393 = vpop.permute.xlu0 %3392
        %3394 = vrot.lane.b32.xlu0 %v374, 95
        %v3395 = vpop.permute.xlu0 %3394
        %3396 = vrot.lane.b32.xlu0 %v376, 95
        %v3397 = vpop.permute.xlu0 %3396
        %3398 = vrot.lane.b32.xlu0 %v378, 95
        %v3399 = vpop.permute.xlu0 %3398
        %3400 = vrot.lane.b32.xlu0 %v380, 95
        %v3401 = vpop.permute.xlu0 %3400
        %vm3402 = vcmp.lt.s32.totalorder %v402, 95
        %v3403 = vsel %vm3402, %v3387, %v3395
        %v3404 = vsel %vm3402, %v3389, %v3397
        %v3405 = vsel %vm3402, %v3391, %v3399
        %v3406 = vsel %vm3402, %v3393, %v3401
        %v3407 = vsel %vm3402, %v3395, %v3387
        %v3408 = vsel %vm3402, %v3397, %v3389
        %v3409 = vsel %vm3402, %v3399, %v3391
        %v3410 = vsel %vm3402, %v3401, %v3393
        %s3411 = scalar_lea.vmem [#allocation2], 71
        %v3412 = vld [vmem:[%s3411] ss:$8 sm:$0x3]
        %v3414 = vlaneseq
        %v3415 = vshrl.u32 %v3414, 7
        %v3416 = vsub.s32 0, %v3415
        %v3417 = vrot.slane %v3412, %v3416
        %v3418 = vlaneseq
        %v3419 = vshrl.u32 %v3418, 7
        %v3420 = vsub.s32 1, %v3419
        %v3421 = vrot.slane %v3412, %v3420
        %v3424 = vmul.f32 %v3403, %v3417
        %v3425 = vmul.f32 %v3407, %v3421
        %v3426 = vmul.f32 %v3404, %v3417
        %v3427 = vmul.f32 %v3408, %v3421
        %v3428 = vmul.f32 %v3405, %v3417
        %v3429 = vmul.f32 %v3409, %v3421
        %v3430 = vmul.f32 %v3406, %v3417
        %v3431 = vmul.f32 %v3410, %v3421
        %3432 = vset.pattern.permute.xlu0 39
        %3433 = vperm.xlu0 %3432, %v381
        %v3434 = vpop.permute.xlu0 %3433
        %3436 = vset.pattern.permute.xlu0 39
        %3437 = vperm.xlu0 %3436, %v382
        %v3438 = vpop.permute.xlu0 %3437
        %3440 = vset.pattern.permute.xlu0 39
        %3441 = vperm.xlu0 %3440, %v383
        %v3442 = vpop.permute.xlu0 %3441
        %3444 = vset.pattern.permute.xlu0 39
        %3445 = vperm.xlu0 %3444, %v384
        %v3446 = vpop.permute.xlu0 %3445
        %v3448 = vmul.f32 %v3424, %v3434
        %v3449 = vmul.f32 %v3425, %v3434
        %v3450 = vmul.f32 %v3426, %v3438
        %v3451 = vmul.f32 %v3427, %v3438
        %v3452 = vmul.f32 %v3428, %v3442
        %v3453 = vmul.f32 %v3429, %v3442
        %v3454 = vmul.f32 %v3430, %v3446
        %v3455 = vmul.f32 %v3431, %v3446
        %v3456 = vadd.f32 %v3378, %v3448
        %v3457 = vadd.f32 %v3379, %v3449
        %v3458 = vadd.f32 %v3380, %v3450
        %v3459 = vadd.f32 %v3381, %v3451
        %v3460 = vadd.f32 %v3382, %v3452
        %v3461 = vadd.f32 %v3383, %v3453
        %v3462 = vadd.f32 %v3384, %v3454
        %v3463 = vadd.f32 %v3385, %v3455
        %3464 = vrot.lane.b32.xlu0 %v373, 94
        %v3465 = vpop.permute.xlu0 %3464
        %3466 = vrot.lane.b32.xlu0 %v375, 94
        %v3467 = vpop.permute.xlu0 %3466
        %3468 = vrot.lane.b32.xlu0 %v377, 94
        %v3469 = vpop.permute.xlu0 %3468
        %3470 = vrot.lane.b32.xlu0 %v379, 94
        %v3471 = vpop.permute.xlu0 %3470
        %3472 = vrot.lane.b32.xlu0 %v374, 94
        %v3473 = vpop.permute.xlu0 %3472
        %3474 = vrot.lane.b32.xlu0 %v376, 94
        %v3475 = vpop.permute.xlu0 %3474
        %3476 = vrot.lane.b32.xlu0 %v378, 94
        %v3477 = vpop.permute.xlu0 %3476
        %3478 = vrot.lane.b32.xlu0 %v380, 94
        %v3479 = vpop.permute.xlu0 %3478
        %vm3480 = vcmp.lt.s32.totalorder %v402, 94
        %v3481 = vsel %vm3480, %v3465, %v3473
        %v3482 = vsel %vm3480, %v3467, %v3475
        %v3483 = vsel %vm3480, %v3469, %v3477
        %v3484 = vsel %vm3480, %v3471, %v3479
        %v3485 = vsel %vm3480, %v3473, %v3465
        %v3486 = vsel %vm3480, %v3475, %v3467
        %v3487 = vsel %vm3480, %v3477, %v3469
        %v3488 = vsel %vm3480, %v3479, %v3471
        %s3489 = scalar_lea.vmem [#allocation2], 80
        %v3490 = vld [vmem:[%s3489] ss:$8 sm:$0x3]
        %v3492 = vlaneseq
        %v3493 = vshrl.u32 %v3492, 7
        %v3494 = vsub.s32 0, %v3493
        %v3495 = vrot.slane %v3490, %v3494
        %v3496 = vlaneseq
        %v3497 = vshrl.u32 %v3496, 7
        %v3498 = vsub.s32 1, %v3497
        %v3499 = vrot.slane %v3490, %v3498
        %v3502 = vmul.f32 %v3481, %v3495
        %v3503 = vmul.f32 %v3485, %v3499
        %v3504 = vmul.f32 %v3482, %v3495
        %v3505 = vmul.f32 %v3486, %v3499
        %v3506 = vmul.f32 %v3483, %v3495
        %v3507 = vmul.f32 %v3487, %v3499
        %v3508 = vmul.f32 %v3484, %v3495
        %v3509 = vmul.f32 %v3488, %v3499
        %3510 = vset.pattern.permute.xlu0 40
        %3511 = vperm.xlu0 %3510, %v381
        %v3512 = vpop.permute.xlu0 %3511
        %3514 = vset.pattern.permute.xlu0 40
        %3515 = vperm.xlu0 %3514, %v382
        %v3516 = vpop.permute.xlu0 %3515
        %3518 = vset.pattern.permute.xlu0 40
        %3519 = vperm.xlu0 %3518, %v383
        %v3520 = vpop.permute.xlu0 %3519
        %3522 = vset.pattern.permute.xlu0 40
        %3523 = vperm.xlu0 %3522, %v384
        %v3524 = vpop.permute.xlu0 %3523
        %v3526 = vmul.f32 %v3502, %v3512
        %v3527 = vmul.f32 %v3503, %v3512
        %v3528 = vmul.f32 %v3504, %v3516
        %v3529 = vmul.f32 %v3505, %v3516
        %v3530 = vmul.f32 %v3506, %v3520
        %v3531 = vmul.f32 %v3507, %v3520
        %v3532 = vmul.f32 %v3508, %v3524
        %v3533 = vmul.f32 %v3509, %v3524
        %v3534 = vadd.f32 %v3456, %v3526
        %v3535 = vadd.f32 %v3457, %v3527
        %v3536 = vadd.f32 %v3458, %v3528
        %v3537 = vadd.f32 %v3459, %v3529
        %v3538 = vadd.f32 %v3460, %v3530
        %v3539 = vadd.f32 %v3461, %v3531
        %v3540 = vadd.f32 %v3462, %v3532
        %v3541 = vadd.f32 %v3463, %v3533
        %3542 = vrot.lane.b32.xlu0 %v373, 93
        %v3543 = vpop.permute.xlu0 %3542
        %3544 = vrot.lane.b32.xlu0 %v375, 93
        %v3545 = vpop.permute.xlu0 %3544
        %3546 = vrot.lane.b32.xlu0 %v377, 93
        %v3547 = vpop.permute.xlu0 %3546
        %3548 = vrot.lane.b32.xlu0 %v379, 93
        %v3549 = vpop.permute.xlu0 %3548
        %3550 = vrot.lane.b32.xlu0 %v374, 93
        %v3551 = vpop.permute.xlu0 %3550
        %3552 = vrot.lane.b32.xlu0 %v376, 93
        %v3553 = vpop.permute.xlu0 %3552
        %3554 = vrot.lane.b32.xlu0 %v378, 93
        %v3555 = vpop.permute.xlu0 %3554
        %3556 = vrot.lane.b32.xlu0 %v380, 93
        %v3557 = vpop.permute.xlu0 %3556
        %vm3558 = vcmp.lt.s32.totalorder %v402, 93
        %v3559 = vsel %vm3558, %v3543, %v3551
        %v3560 = vsel %vm3558, %v3545, %v3553
        %v3561 = vsel %vm3558, %v3547, %v3555
        %v3562 = vsel %vm3558, %v3549, %v3557
        %v3563 = vsel %vm3558, %v3551, %v3543
        %v3564 = vsel %vm3558, %v3553, %v3545
        %v3565 = vsel %vm3558, %v3555, %v3547
        %v3566 = vsel %vm3558, %v3557, %v3549
        %s3567 = scalar_lea.vmem [#allocation2], 81
        %v3568 = vld [vmem:[%s3567] ss:$8 sm:$0x3]
        %v3570 = vlaneseq
        %v3571 = vshrl.u32 %v3570, 7
        %v3572 = vsub.s32 0, %v3571
        %v3573 = vrot.slane %v3568, %v3572
        %v3574 = vlaneseq
        %v3575 = vshrl.u32 %v3574, 7
        %v3576 = vsub.s32 1, %v3575
        %v3577 = vrot.slane %v3568, %v3576
        %v3580 = vmul.f32 %v3559, %v3573
        %v3581 = vmul.f32 %v3563, %v3577
        %v3582 = vmul.f32 %v3560, %v3573
        %v3583 = vmul.f32 %v3564, %v3577
        %v3584 = vmul.f32 %v3561, %v3573
        %v3585 = vmul.f32 %v3565, %v3577
        %v3586 = vmul.f32 %v3562, %v3573
        %v3587 = vmul.f32 %v3566, %v3577
        %3588 = vset.pattern.permute.xlu0 41
        %3589 = vperm.xlu0 %3588, %v381
        %v3590 = vpop.permute.xlu0 %3589
        %3592 = vset.pattern.permute.xlu0 41
        %3593 = vperm.xlu0 %3592, %v382
        %v3594 = vpop.permute.xlu0 %3593
        %3596 = vset.pattern.permute.xlu0 41
        %3597 = vperm.xlu0 %3596, %v383
        %v3598 = vpop.permute.xlu0 %3597
        %3600 = vset.pattern.permute.xlu0 41
        %3601 = vperm.xlu0 %3600, %v384
        %v3602 = vpop.permute.xlu0 %3601
        %v3604 = vmul.f32 %v3580, %v3590
        %v3605 = vmul.f32 %v3581, %v3590
        %v3606 = vmul.f32 %v3582, %v3594
        %v3607 = vmul.f32 %v3583, %v3594
        %v3608 = vmul.f32 %v3584, %v3598
        %v3609 = vmul.f32 %v3585, %v3598
        %v3610 = vmul.f32 %v3586, %v3602
        %v3611 = vmul.f32 %v3587, %v3602
        %v3612 = vadd.f32 %v3534, %v3604
        %v3613 = vadd.f32 %v3535, %v3605
        %v3614 = vadd.f32 %v3536, %v3606
        %v3615 = vadd.f32 %v3537, %v3607
        %v3616 = vadd.f32 %v3538, %v3608
        %v3617 = vadd.f32 %v3539, %v3609
        %v3618 = vadd.f32 %v3540, %v3610
        %v3619 = vadd.f32 %v3541, %v3611
        %3620 = vrot.lane.b32.xlu0 %v373, 83
        %v3621 = vpop.permute.xlu0 %3620
        %3622 = vrot.lane.b32.xlu0 %v375, 83
        %v3623 = vpop.permute.xlu0 %3622
        %3624 = vrot.lane.b32.xlu0 %v377, 83
        %v3625 = vpop.permute.xlu0 %3624
        %3626 = vrot.lane.b32.xlu0 %v379, 83
        %v3627 = vpop.permute.xlu0 %3626
        %3628 = vrot.lane.b32.xlu0 %v374, 83
        %v3629 = vpop.permute.xlu0 %3628
        %3630 = vrot.lane.b32.xlu0 %v376, 83
        %v3631 = vpop.permute.xlu0 %3630
        %3632 = vrot.lane.b32.xlu0 %v378, 83
        %v3633 = vpop.permute.xlu0 %3632
        %3634 = vrot.lane.b32.xlu0 %v380, 83
        %v3635 = vpop.permute.xlu0 %3634
        %vm3636 = vcmp.lt.s32.totalorder %v402, 83
        %v3637 = vsel %vm3636, %v3621, %v3629
        %v3638 = vsel %vm3636, %v3623, %v3631
        %v3639 = vsel %vm3636, %v3625, %v3633
        %v3640 = vsel %vm3636, %v3627, %v3635
        %v3641 = vsel %vm3636, %v3629, %v3621
        %v3642 = vsel %vm3636, %v3631, %v3623
        %v3643 = vsel %vm3636, %v3633, %v3625
        %v3644 = vsel %vm3636, %v3635, %v3627
        %s3645 = scalar_lea.vmem [#allocation2], 82
        %v3646 = vld [vmem:[%s3645] ss:$8 sm:$0x3]
        %v3648 = vlaneseq
        %v3649 = vshrl.u32 %v3648, 7
        %v3650 = vsub.s32 0, %v3649
        %v3651 = vrot.slane %v3646, %v3650
        %v3652 = vlaneseq
        %v3653 = vshrl.u32 %v3652, 7
        %v3654 = vsub.s32 1, %v3653
        %v3655 = vrot.slane %v3646, %v3654
        %v3658 = vmul.f32 %v3637, %v3651
        %v3659 = vmul.f32 %v3641, %v3655
        %v3660 = vmul.f32 %v3638, %v3651
        %v3661 = vmul.f32 %v3642, %v3655
        %v3662 = vmul.f32 %v3639, %v3651
        %v3663 = vmul.f32 %v3643, %v3655
        %v3664 = vmul.f32 %v3640, %v3651
        %v3665 = vmul.f32 %v3644, %v3655
        %3666 = vset.pattern.permute.xlu0 42
        %3667 = vperm.xlu0 %3666, %v381
        %v3668 = vpop.permute.xlu0 %3667
        %3670 = vset.pattern.permute.xlu0 42
        %3671 = vperm.xlu0 %3670, %v382
        %v3672 = vpop.permute.xlu0 %3671
        %3674 = vset.pattern.permute.xlu0 42
        %3675 = vperm.xlu0 %3674, %v383
        %v3676 = vpop.permute.xlu0 %3675
        %3678 = vset.pattern.permute.xlu0 42
        %3679 = vperm.xlu0 %3678, %v384
        %v3680 = vpop.permute.xlu0 %3679
        %v3682 = vmul.f32 %v3658, %v3668
        %v3683 = vmul.f32 %v3659, %v3668
        %v3684 = vmul.f32 %v3660, %v3672
        %v3685 = vmul.f32 %v3661, %v3672
        %v3686 = vmul.f32 %v3662, %v3676
        %v3687 = vmul.f32 %v3663, %v3676
        %v3688 = vmul.f32 %v3664, %v3680
        %v3689 = vmul.f32 %v3665, %v3680
        %v3690 = vadd.f32 %v3612, %v3682
        %v3691 = vadd.f32 %v3613, %v3683
        %v3692 = vadd.f32 %v3614, %v3684
        %v3693 = vadd.f32 %v3615, %v3685
        %v3694 = vadd.f32 %v3616, %v3686
        %v3695 = vadd.f32 %v3617, %v3687
        %v3696 = vadd.f32 %v3618, %v3688
        %v3697 = vadd.f32 %v3619, %v3689
        %3698 = vrot.lane.b32.xlu0 %v373, 82
        %v3699 = vpop.permute.xlu0 %3698
        %3700 = vrot.lane.b32.xlu0 %v375, 82
        %v3701 = vpop.permute.xlu0 %3700
        %3702 = vrot.lane.b32.xlu0 %v377, 82
        %v3703 = vpop.permute.xlu0 %3702
        %3704 = vrot.lane.b32.xlu0 %v379, 82
        %v3705 = vpop.permute.xlu0 %3704
        %3706 = vrot.lane.b32.xlu0 %v374, 82
        %v3707 = vpop.permute.xlu0 %3706
        %3708 = vrot.lane.b32.xlu0 %v376, 82
        %v3709 = vpop.permute.xlu0 %3708
        %3710 = vrot.lane.b32.xlu0 %v378, 82
        %v3711 = vpop.permute.xlu0 %3710
        %3712 = vrot.lane.b32.xlu0 %v380, 82
        %v3713 = vpop.permute.xlu0 %3712
        %vm3714 = vcmp.lt.s32.totalorder %v402, 82
        %v3715 = vsel %vm3714, %v3699, %v3707
        %v3716 = vsel %vm3714, %v3701, %v3709
        %v3717 = vsel %vm3714, %v3703, %v3711
        %v3718 = vsel %vm3714, %v3705, %v3713
        %v3719 = vsel %vm3714, %v3707, %v3699
        %v3720 = vsel %vm3714, %v3709, %v3701
        %v3721 = vsel %vm3714, %v3711, %v3703
        %v3722 = vsel %vm3714, %v3713, %v3705
        %s3723 = scalar_lea.vmem [#allocation2], 83
        %v3724 = vld [vmem:[%s3723] ss:$8 sm:$0x3]
        %v3726 = vlaneseq
        %v3727 = vshrl.u32 %v3726, 7
        %v3728 = vsub.s32 0, %v3727
        %v3729 = vrot.slane %v3724, %v3728
        %v3730 = vlaneseq
        %v3731 = vshrl.u32 %v3730, 7
        %v3732 = vsub.s32 1, %v3731
        %v3733 = vrot.slane %v3724, %v3732
        %v3736 = vmul.f32 %v3715, %v3729
        %v3737 = vmul.f32 %v3719, %v3733
        %v3738 = vmul.f32 %v3716, %v3729
        %v3739 = vmul.f32 %v3720, %v3733
        %v3740 = vmul.f32 %v3717, %v3729
        %v3741 = vmul.f32 %v3721, %v3733
        %v3742 = vmul.f32 %v3718, %v3729
        %v3743 = vmul.f32 %v3722, %v3733
        %3744 = vset.pattern.permute.xlu0 43
        %3745 = vperm.xlu0 %3744, %v381
        %v3746 = vpop.permute.xlu0 %3745
        %3748 = vset.pattern.permute.xlu0 43
        %3749 = vperm.xlu0 %3748, %v382
        %v3750 = vpop.permute.xlu0 %3749
        %3752 = vset.pattern.permute.xlu0 43
        %3753 = vperm.xlu0 %3752, %v383
        %v3754 = vpop.permute.xlu0 %3753
        %3756 = vset.pattern.permute.xlu0 43
        %3757 = vperm.xlu0 %3756, %v384
        %v3758 = vpop.permute.xlu0 %3757
        %v3760 = vmul.f32 %v3736, %v3746
        %v3761 = vmul.f32 %v3737, %v3746
        %v3762 = vmul.f32 %v3738, %v3750
        %v3763 = vmul.f32 %v3739, %v3750
        %v3764 = vmul.f32 %v3740, %v3754
        %v3765 = vmul.f32 %v3741, %v3754
        %v3766 = vmul.f32 %v3742, %v3758
        %v3767 = vmul.f32 %v3743, %v3758
        %v3768 = vadd.f32 %v3690, %v3760
        %v3769 = vadd.f32 %v3691, %v3761
        %v3770 = vadd.f32 %v3692, %v3762
        %v3771 = vadd.f32 %v3693, %v3763
        %v3772 = vadd.f32 %v3694, %v3764
        %v3773 = vadd.f32 %v3695, %v3765
        %v3774 = vadd.f32 %v3696, %v3766
        %v3775 = vadd.f32 %v3697, %v3767
        %3776 = vrot.lane.b32.xlu0 %v373, 81
        %v3777 = vpop.permute.xlu0 %3776
        %3778 = vrot.lane.b32.xlu0 %v375, 81
        %v3779 = vpop.permute.xlu0 %3778
        %3780 = vrot.lane.b32.xlu0 %v377, 81
        %v3781 = vpop.permute.xlu0 %3780
        %3782 = vrot.lane.b32.xlu0 %v379, 81
        %v3783 = vpop.permute.xlu0 %3782
        %3784 = vrot.lane.b32.xlu0 %v374, 81
        %v3785 = vpop.permute.xlu0 %3784
        %3786 = vrot.lane.b32.xlu0 %v376, 81
        %v3787 = vpop.permute.xlu0 %3786
        %3788 = vrot.lane.b32.xlu0 %v378, 81
        %v3789 = vpop.permute.xlu0 %3788
        %3790 = vrot.lane.b32.xlu0 %v380, 81
        %v3791 = vpop.permute.xlu0 %3790
        %vm3792 = vcmp.lt.s32.totalorder %v402, 81
        %v3793 = vsel %vm3792, %v3777, %v3785
        %v3794 = vsel %vm3792, %v3779, %v3787
        %v3795 = vsel %vm3792, %v3781, %v3789
        %v3796 = vsel %vm3792, %v3783, %v3791
        %v3797 = vsel %vm3792, %v3785, %v3777
        %v3798 = vsel %vm3792, %v3787, %v3779
        %v3799 = vsel %vm3792, %v3789, %v3781
        %v3800 = vsel %vm3792, %v3791, %v3783
        %s3801 = scalar_lea.vmem [#allocation2], 84
        %v3802 = vld [vmem:[%s3801] ss:$8 sm:$0x3]
        %v3804 = vlaneseq
        %v3805 = vshrl.u32 %v3804, 7
        %v3806 = vsub.s32 0, %v3805
        %v3807 = vrot.slane %v3802, %v3806
        %v3808 = vlaneseq
        %v3809 = vshrl.u32 %v3808, 7
        %v3810 = vsub.s32 1, %v3809
        %v3811 = vrot.slane %v3802, %v3810
        %v3814 = vmul.f32 %v3793, %v3807
        %v3815 = vmul.f32 %v3797, %v3811
        %v3816 = vmul.f32 %v3794, %v3807
        %v3817 = vmul.f32 %v3798, %v3811
        %v3818 = vmul.f32 %v3795, %v3807
        %v3819 = vmul.f32 %v3799, %v3811
        %v3820 = vmul.f32 %v3796, %v3807
        %v3821 = vmul.f32 %v3800, %v3811
        %3822 = vset.pattern.permute.xlu0 44
        %3823 = vperm.xlu0 %3822, %v381
        %v3824 = vpop.permute.xlu0 %3823
        %3826 = vset.pattern.permute.xlu0 44
        %3827 = vperm.xlu0 %3826, %v382
        %v3828 = vpop.permute.xlu0 %3827
        %3830 = vset.pattern.permute.xlu0 44
        %3831 = vperm.xlu0 %3830, %v383
        %v3832 = vpop.permute.xlu0 %3831
        %3834 = vset.pattern.permute.xlu0 44
        %3835 = vperm.xlu0 %3834, %v384
        %v3836 = vpop.permute.xlu0 %3835
        %v3838 = vmul.f32 %v3814, %v3824
        %v3839 = vmul.f32 %v3815, %v3824
        %v3840 = vmul.f32 %v3816, %v3828
        %v3841 = vmul.f32 %v3817, %v3828
        %v3842 = vmul.f32 %v3818, %v3832
        %v3843 = vmul.f32 %v3819, %v3832
        %v3844 = vmul.f32 %v3820, %v3836
        %v3845 = vmul.f32 %v3821, %v3836
        %v3846 = vadd.f32 %v3768, %v3838
        %v3847 = vadd.f32 %v3769, %v3839
        %v3848 = vadd.f32 %v3770, %v3840
        %v3849 = vadd.f32 %v3771, %v3841
        %v3850 = vadd.f32 %v3772, %v3842
        %v3851 = vadd.f32 %v3773, %v3843
        %v3852 = vadd.f32 %v3774, %v3844
        %v3853 = vadd.f32 %v3775, %v3845
        %3854 = vrot.lane.b32.xlu0 %v373, 80
        %v3855 = vpop.permute.xlu0 %3854
        %3856 = vrot.lane.b32.xlu0 %v375, 80
        %v3857 = vpop.permute.xlu0 %3856
        %3858 = vrot.lane.b32.xlu0 %v377, 80
        %v3859 = vpop.permute.xlu0 %3858
        %3860 = vrot.lane.b32.xlu0 %v379, 80
        %v3861 = vpop.permute.xlu0 %3860
        %3862 = vrot.lane.b32.xlu0 %v374, 80
        %v3863 = vpop.permute.xlu0 %3862
        %3864 = vrot.lane.b32.xlu0 %v376, 80
        %v3865 = vpop.permute.xlu0 %3864
        %3866 = vrot.lane.b32.xlu0 %v378, 80
        %v3867 = vpop.permute.xlu0 %3866
        %3868 = vrot.lane.b32.xlu0 %v380, 80
        %v3869 = vpop.permute.xlu0 %3868
        %vm3870 = vcmp.lt.s32.totalorder %v402, 80
        %v3871 = vsel %vm3870, %v3855, %v3863
        %v3872 = vsel %vm3870, %v3857, %v3865
        %v3873 = vsel %vm3870, %v3859, %v3867
        %v3874 = vsel %vm3870, %v3861, %v3869
        %v3875 = vsel %vm3870, %v3863, %v3855
        %v3876 = vsel %vm3870, %v3865, %v3857
        %v3877 = vsel %vm3870, %v3867, %v3859
        %v3878 = vsel %vm3870, %v3869, %v3861
        %s3879 = scalar_lea.vmem [#allocation2], 85
        %v3880 = vld [vmem:[%s3879] ss:$8 sm:$0x3]
        %v3882 = vlaneseq
        %v3883 = vshrl.u32 %v3882, 7
        %v3884 = vsub.s32 0, %v3883
        %v3885 = vrot.slane %v3880, %v3884
        %v3886 = vlaneseq
        %v3887 = vshrl.u32 %v3886, 7
        %v3888 = vsub.s32 1, %v3887
        %v3889 = vrot.slane %v3880, %v3888
        %v3892 = vmul.f32 %v3871, %v3885
        %v3893 = vmul.f32 %v3875, %v3889
        %v3894 = vmul.f32 %v3872, %v3885
        %v3895 = vmul.f32 %v3876, %v3889
        %v3896 = vmul.f32 %v3873, %v3885
        %v3897 = vmul.f32 %v3877, %v3889
        %v3898 = vmul.f32 %v3874, %v3885
        %v3899 = vmul.f32 %v3878, %v3889
        %3900 = vset.pattern.permute.xlu0 45
        %3901 = vperm.xlu0 %3900, %v381
        %v3902 = vpop.permute.xlu0 %3901
        %3904 = vset.pattern.permute.xlu0 45
        %3905 = vperm.xlu0 %3904, %v382
        %v3906 = vpop.permute.xlu0 %3905
        %3908 = vset.pattern.permute.xlu0 45
        %3909 = vperm.xlu0 %3908, %v383
        %v3910 = vpop.permute.xlu0 %3909
        %3912 = vset.pattern.permute.xlu0 45
        %3913 = vperm.xlu0 %3912, %v384
        %v3914 = vpop.permute.xlu0 %3913
        %v3916 = vmul.f32 %v3892, %v3902
        %v3917 = vmul.f32 %v3893, %v3902
        %v3918 = vmul.f32 %v3894, %v3906
        %v3919 = vmul.f32 %v3895, %v3906
        %v3920 = vmul.f32 %v3896, %v3910
        %v3921 = vmul.f32 %v3897, %v3910
        %v3922 = vmul.f32 %v3898, %v3914
        %v3923 = vmul.f32 %v3899, %v3914
        %v3924 = vadd.f32 %v3846, %v3916
        %v3925 = vadd.f32 %v3847, %v3917
        %v3926 = vadd.f32 %v3848, %v3918
        %v3927 = vadd.f32 %v3849, %v3919
        %v3928 = vadd.f32 %v3850, %v3920
        %v3929 = vadd.f32 %v3851, %v3921
        %v3930 = vadd.f32 %v3852, %v3922
        %v3931 = vadd.f32 %v3853, %v3923
        %3932 = vrot.lane.b32.xlu0 %v373, 79
        %v3933 = vpop.permute.xlu0 %3932
        %3934 = vrot.lane.b32.xlu0 %v375, 79
        %v3935 = vpop.permute.xlu0 %3934
        %3936 = vrot.lane.b32.xlu0 %v377, 79
        %v3937 = vpop.permute.xlu0 %3936
        %3938 = vrot.lane.b32.xlu0 %v379, 79
        %v3939 = vpop.permute.xlu0 %3938
        %3940 = vrot.lane.b32.xlu0 %v374, 79
        %v3941 = vpop.permute.xlu0 %3940
        %3942 = vrot.lane.b32.xlu0 %v376, 79
        %v3943 = vpop.permute.xlu0 %3942
        %3944 = vrot.lane.b32.xlu0 %v378, 79
        %v3945 = vpop.permute.xlu0 %3944
        %3946 = vrot.lane.b32.xlu0 %v380, 79
        %v3947 = vpop.permute.xlu0 %3946
        %vm3948 = vcmp.lt.s32.totalorder %v402, 79
        %v3949 = vsel %vm3948, %v3933, %v3941
        %v3950 = vsel %vm3948, %v3935, %v3943
        %v3951 = vsel %vm3948, %v3937, %v3945
        %v3952 = vsel %vm3948, %v3939, %v3947
        %v3953 = vsel %vm3948, %v3941, %v3933
        %v3954 = vsel %vm3948, %v3943, %v3935
        %v3955 = vsel %vm3948, %v3945, %v3937
        %v3956 = vsel %vm3948, %v3947, %v3939
        %s3957 = scalar_lea.vmem [#allocation2], 86
        %v3958 = vld [vmem:[%s3957] ss:$8 sm:$0x3]
        %v3960 = vlaneseq
        %v3961 = vshrl.u32 %v3960, 7
        %v3962 = vsub.s32 0, %v3961
        %v3963 = vrot.slane %v3958, %v3962
        %v3964 = vlaneseq
        %v3965 = vshrl.u32 %v3964, 7
        %v3966 = vsub.s32 1, %v3965
        %v3967 = vrot.slane %v3958, %v3966
        %v3970 = vmul.f32 %v3949, %v3963
        %v3971 = vmul.f32 %v3953, %v3967
        %v3972 = vmul.f32 %v3950, %v3963
        %v3973 = vmul.f32 %v3954, %v3967
        %v3974 = vmul.f32 %v3951, %v3963
        %v3975 = vmul.f32 %v3955, %v3967
        %v3976 = vmul.f32 %v3952, %v3963
        %v3977 = vmul.f32 %v3956, %v3967
        %3978 = vset.pattern.permute.xlu0 46
        %3979 = vperm.xlu0 %3978, %v381
        %v3980 = vpop.permute.xlu0 %3979
        %3982 = vset.pattern.permute.xlu0 46
        %3983 = vperm.xlu0 %3982, %v382
        %v3984 = vpop.permute.xlu0 %3983
        %3986 = vset.pattern.permute.xlu0 46
        %3987 = vperm.xlu0 %3986, %v383
        %v3988 = vpop.permute.xlu0 %3987
        %3990 = vset.pattern.permute.xlu0 46
        %3991 = vperm.xlu0 %3990, %v384
        %v3992 = vpop.permute.xlu0 %3991
        %v3994 = vmul.f32 %v3970, %v3980
        %v3995 = vmul.f32 %v3971, %v3980
        %v3996 = vmul.f32 %v3972, %v3984
        %v3997 = vmul.f32 %v3973, %v3984
        %v3998 = vmul.f32 %v3974, %v3988
        %v3999 = vmul.f32 %v3975, %v3988
        %v4000 = vmul.f32 %v3976, %v3992
        %v4001 = vmul.f32 %v3977, %v3992
        %v4002 = vadd.f32 %v3924, %v3994
        %v4003 = vadd.f32 %v3925, %v3995
        %v4004 = vadd.f32 %v3926, %v3996
        %v4005 = vadd.f32 %v3927, %v3997
        %v4006 = vadd.f32 %v3928, %v3998
        %v4007 = vadd.f32 %v3929, %v3999
        %v4008 = vadd.f32 %v3930, %v4000
        %v4009 = vadd.f32 %v3931, %v4001
        %4010 = vrot.lane.b32.xlu0 %v373, 78
        %v4011 = vpop.permute.xlu0 %4010
        %4012 = vrot.lane.b32.xlu0 %v375, 78
        %v4013 = vpop.permute.xlu0 %4012
        %4014 = vrot.lane.b32.xlu0 %v377, 78
        %v4015 = vpop.permute.xlu0 %4014
        %4016 = vrot.lane.b32.xlu0 %v379, 78
        %v4017 = vpop.permute.xlu0 %4016
        %4018 = vrot.lane.b32.xlu0 %v374, 78
        %v4019 = vpop.permute.xlu0 %4018
        %4020 = vrot.lane.b32.xlu0 %v376, 78
        %v4021 = vpop.permute.xlu0 %4020
        %4022 = vrot.lane.b32.xlu0 %v378, 78
        %v4023 = vpop.permute.xlu0 %4022
        %4024 = vrot.lane.b32.xlu0 %v380, 78
        %v4025 = vpop.permute.xlu0 %4024
        %vm4026 = vcmp.lt.s32.totalorder %v402, 78
        %v4027 = vsel %vm4026, %v4011, %v4019
        %v4028 = vsel %vm4026, %v4013, %v4021
        %v4029 = vsel %vm4026, %v4015, %v4023
        %v4030 = vsel %vm4026, %v4017, %v4025
        %v4031 = vsel %vm4026, %v4019, %v4011
        %v4032 = vsel %vm4026, %v4021, %v4013
        %v4033 = vsel %vm4026, %v4023, %v4015
        %v4034 = vsel %vm4026, %v4025, %v4017
        %s4035 = scalar_lea.vmem [#allocation2], 87
        %v4036 = vld [vmem:[%s4035] ss:$8 sm:$0x3]
        %v4038 = vlaneseq
        %v4039 = vshrl.u32 %v4038, 7
        %v4040 = vsub.s32 0, %v4039
        %v4041 = vrot.slane %v4036, %v4040
        %v4042 = vlaneseq
        %v4043 = vshrl.u32 %v4042, 7
        %v4044 = vsub.s32 1, %v4043
        %v4045 = vrot.slane %v4036, %v4044
        %v4048 = vmul.f32 %v4027, %v4041
        %v4049 = vmul.f32 %v4031, %v4045
        %v4050 = vmul.f32 %v4028, %v4041
        %v4051 = vmul.f32 %v4032, %v4045
        %v4052 = vmul.f32 %v4029, %v4041
        %v4053 = vmul.f32 %v4033, %v4045
        %v4054 = vmul.f32 %v4030, %v4041
        %v4055 = vmul.f32 %v4034, %v4045
        %4056 = vset.pattern.permute.xlu0 47
        %4057 = vperm.xlu0 %4056, %v381
        %v4058 = vpop.permute.xlu0 %4057
        %4060 = vset.pattern.permute.xlu0 47
        %4061 = vperm.xlu0 %4060, %v382
        %v4062 = vpop.permute.xlu0 %4061
        %4064 = vset.pattern.permute.xlu0 47
        %4065 = vperm.xlu0 %4064, %v383
        %v4066 = vpop.permute.xlu0 %4065
        %4068 = vset.pattern.permute.xlu0 47
        %4069 = vperm.xlu0 %4068, %v384
        %v4070 = vpop.permute.xlu0 %4069
        %v4072 = vmul.f32 %v4048, %v4058
        %v4073 = vmul.f32 %v4049, %v4058
        %v4074 = vmul.f32 %v4050, %v4062
        %v4075 = vmul.f32 %v4051, %v4062
        %v4076 = vmul.f32 %v4052, %v4066
        %v4077 = vmul.f32 %v4053, %v4066
        %v4078 = vmul.f32 %v4054, %v4070
        %v4079 = vmul.f32 %v4055, %v4070
        %v4080 = vadd.f32 %v4002, %v4072
        %v4081 = vadd.f32 %v4003, %v4073
        %v4082 = vadd.f32 %v4004, %v4074
        %v4083 = vadd.f32 %v4005, %v4075
        %v4084 = vadd.f32 %v4006, %v4076
        %v4085 = vadd.f32 %v4007, %v4077
        %v4086 = vadd.f32 %v4008, %v4078
        %v4087 = vadd.f32 %v4009, %v4079
        %4088 = vrot.lane.b32.xlu0 %v373, 77
        %v4089 = vpop.permute.xlu0 %4088
        %4090 = vrot.lane.b32.xlu0 %v375, 77
        %v4091 = vpop.permute.xlu0 %4090
        %4092 = vrot.lane.b32.xlu0 %v377, 77
        %v4093 = vpop.permute.xlu0 %4092
        %4094 = vrot.lane.b32.xlu0 %v379, 77
        %v4095 = vpop.permute.xlu0 %4094
        %4096 = vrot.lane.b32.xlu0 %v374, 77
        %v4097 = vpop.permute.xlu0 %4096
        %4098 = vrot.lane.b32.xlu0 %v376, 77
        %v4099 = vpop.permute.xlu0 %4098
        %4100 = vrot.lane.b32.xlu0 %v378, 77
        %v4101 = vpop.permute.xlu0 %4100
        %4102 = vrot.lane.b32.xlu0 %v380, 77
        %v4103 = vpop.permute.xlu0 %4102
        %vm4104 = vcmp.lt.s32.totalorder %v402, 77
        %v4105 = vsel %vm4104, %v4089, %v4097
        %v4106 = vsel %vm4104, %v4091, %v4099
        %v4107 = vsel %vm4104, %v4093, %v4101
        %v4108 = vsel %vm4104, %v4095, %v4103
        %v4109 = vsel %vm4104, %v4097, %v4089
        %v4110 = vsel %vm4104, %v4099, %v4091
        %v4111 = vsel %vm4104, %v4101, %v4093
        %v4112 = vsel %vm4104, %v4103, %v4095
        %s4113 = scalar_lea.vmem [#allocation2], 96
        %v4114 = vld [vmem:[%s4113] ss:$8 sm:$0x3]
        %v4116 = vlaneseq
        %v4117 = vshrl.u32 %v4116, 7
        %v4118 = vsub.s32 0, %v4117
        %v4119 = vrot.slane %v4114, %v4118
        %v4120 = vlaneseq
        %v4121 = vshrl.u32 %v4120, 7
        %v4122 = vsub.s32 1, %v4121
        %v4123 = vrot.slane %v4114, %v4122
        %v4126 = vmul.f32 %v4105, %v4119
        %v4127 = vmul.f32 %v4109, %v4123
        %v4128 = vmul.f32 %v4106, %v4119
        %v4129 = vmul.f32 %v4110, %v4123
        %v4130 = vmul.f32 %v4107, %v4119
        %v4131 = vmul.f32 %v4111, %v4123
        %v4132 = vmul.f32 %v4108, %v4119
        %v4133 = vmul.f32 %v4112, %v4123
        %4134 = vset.pattern.permute.xlu0 48
        %4135 = vperm.xlu0 %4134, %v381
        %v4136 = vpop.permute.xlu0 %4135
        %4138 = vset.pattern.permute.xlu0 48
        %4139 = vperm.xlu0 %4138, %v382
        %v4140 = vpop.permute.xlu0 %4139
        %4142 = vset.pattern.permute.xlu0 48
        %4143 = vperm.xlu0 %4142, %v383
        %v4144 = vpop.permute.xlu0 %4143
        %4146 = vset.pattern.permute.xlu0 48
        %4147 = vperm.xlu0 %4146, %v384
        %v4148 = vpop.permute.xlu0 %4147
        %v4150 = vmul.f32 %v4126, %v4136
        %v4151 = vmul.f32 %v4127, %v4136
        %v4152 = vmul.f32 %v4128, %v4140
        %v4153 = vmul.f32 %v4129, %v4140
        %v4154 = vmul.f32 %v4130, %v4144
        %v4155 = vmul.f32 %v4131, %v4144
        %v4156 = vmul.f32 %v4132, %v4148
        %v4157 = vmul.f32 %v4133, %v4148
        %v4158 = vadd.f32 %v4080, %v4150
        %v4159 = vadd.f32 %v4081, %v4151
        %v4160 = vadd.f32 %v4082, %v4152
        %v4161 = vadd.f32 %v4083, %v4153
        %v4162 = vadd.f32 %v4084, %v4154
        %v4163 = vadd.f32 %v4085, %v4155
        %v4164 = vadd.f32 %v4086, %v4156
        %v4165 = vadd.f32 %v4087, %v4157
        %v4166 = vld [vmem:[%s3] sm:$0xff]
        %v4167 = vld [vmem:[%s3 + $0x8] sm:$0xff]
        %v4168 = vld [vmem:[%s3 + $0x10] sm:$0xff]
        %v4169 = vld [vmem:[%s3 + $0x18] sm:$0xff]
        %4171 = vset.pattern.permute.xlu0 0
        %4172 = vperm.xlu0 %4171, %v4166
        %v4173 = vpop.permute.xlu0 %4172
        %4176 = vset.pattern.permute.xlu0 0
        %4177 = vperm.xlu0 %4176, %v4167
        %v4178 = vpop.permute.xlu0 %4177
        %4181 = vset.pattern.permute.xlu0 0
        %4182 = vperm.xlu0 %4181, %v4168
        %v4183 = vpop.permute.xlu0 %4182
        %4186 = vset.pattern.permute.xlu0 0
        %4187 = vperm.xlu0 %4186, %v4169
        %v4188 = vpop.permute.xlu0 %4187
        %v4190 = vadd.f32 %v4158, %v4173
        %v4191 = vadd.f32 %v4159, %v4173
        %v4192 = vadd.f32 %v4160, %v4178
        %v4193 = vadd.f32 %v4161, %v4178
        %v4194 = vadd.f32 %v4162, %v4183
        %v4195 = vadd.f32 %v4163, %v4183
        %v4196 = vadd.f32 %v4164, %v4188
        %v4197 = vadd.f32 %v4165, %v4188
        %v4198 = vadd.f32 %v4190, %v4192
        %v4199 = vadd.f32 %v4198, %v4194
        %v4200 = vadd.f32 %v4199, %v4196
        %v4201 = vrot.slane %v4200, 4
        %v4202 = vadd.f32 %v4200, %v4201
        %v4203 = vrot.slane %v4202, 2
        %v4204 = vadd.f32 %v4202, %v4203
        %v4205 = vrot.slane %v4204, 1
        %v4206 = vadd.f32 %v4204, %v4205
        %v4207 = vadd.f32 %v4191, %v4193
        %v4208 = vadd.f32 %v4207, %v4195
        %v4209 = vadd.f32 %v4208, %v4197
        %v4210 = vrot.slane %v4209, 4
        %v4211 = vadd.f32 %v4209, %v4210
        %v4212 = vrot.slane %v4211, 2
        %v4213 = vadd.f32 %v4211, %v4212
        %v4214 = vrot.slane %v4213, 1
        %v4215 = vadd.f32 %v4213, %v4214
        %v4216 = vmul.f32 %v4206, 0.03125
        %v4217 = vmul.f32 %v4215, 0.03125
        %v4218 = vmul.f32 %v4190, %v4190
        %v4219 = vmul.f32 %v4191, %v4191
        %v4220 = vmul.f32 %v4192, %v4192
        %v4221 = vmul.f32 %v4193, %v4193
        %v4222 = vmul.f32 %v4194, %v4194
        %v4223 = vmul.f32 %v4195, %v4195
        %v4224 = vmul.f32 %v4196, %v4196
        %v4225 = vmul.f32 %v4197, %v4197
        %v4226 = vadd.f32 %v4218, %v4220
        %v4227 = vadd.f32 %v4226, %v4222
        %v4228 = vadd.f32 %v4227, %v4224
        %v4229 = vrot.slane %v4228, 4
        %v4230 = vadd.f32 %v4228, %v4229
        %v4231 = vrot.slane %v4230, 2
        %v4232 = vadd.f32 %v4230, %v4231
        %v4233 = vrot.slane %v4232, 1
        %v4234 = vadd.f32 %v4232, %v4233
        %v4235 = vadd.f32 %v4219, %v4221
        %v4236 = vadd.f32 %v4235, %v4223
        %v4237 = vadd.f32 %v4236, %v4225
        %v4238 = vrot.slane %v4237, 4
        %v4239 = vadd.f32 %v4237, %v4238
        %v4240 = vrot.slane %v4239, 2
        %v4241 = vadd.f32 %v4239, %v4240
        %v4242 = vrot.slane %v4241, 1
        %v4243 = vadd.f32 %v4241, %v4242
        %v4244 = vmul.f32 %v4234, 0.03125
        %v4245 = vmul.f32 %v4243, 0.03125
        %v4246 = vmul.f32 %v4216, %v4216
        %v4247 = vmul.f32 %v4217, %v4217
        %v4248 = vsub.f32 %v4244, %v4246
        %v4249 = vsub.f32 %v4245, %v4247
        %v4250 = vmax.f32 %v4248, 0.0
        %v4251 = vmax.f32 %v4249, 0.0
        %v4252 = vsub.f32 %v4190, %v4216
        %v4253 = vsub.f32 %v4191, %v4217
        %v4254 = vsub.f32 %v4192, %v4216
        %v4255 = vsub.f32 %v4193, %v4217
        %v4256 = vsub.f32 %v4194, %v4216
        %v4257 = vsub.f32 %v4195, %v4217
        %v4258 = vsub.f32 %v4196, %v4216
        %v4259 = vsub.f32 %v4197, %v4217
        %v4260 = vadd.f32 %v4250, 1e-06
        %v4261 = vadd.f32 %v4251, 1e-06
        %v4262 = vrsqrt.pop %v4260
        %v4263 = vrsqrt.pop %v4261
        %v4264 = vmul.f32 %v4252, %v4262
        %v4265 = vmul.f32 %v4253, %v4263
        %v4266 = vmul.f32 %v4254, %v4262
        %v4267 = vmul.f32 %v4255, %v4263
        %v4268 = vmul.f32 %v4256, %v4262
        %v4269 = vmul.f32 %v4257, %v4263
        %v4270 = vmul.f32 %v4258, %v4262
        %v4271 = vmul.f32 %v4259, %v4263
        %v4272 = vld [vmem:[%s4] sm:$0xff]
        %v4273 = vld [vmem:[%s4 + $0x8] sm:$0xff]
        %v4274 = vld [vmem:[%s4 + $0x10] sm:$0xff]
        %v4275 = vld [vmem:[%s4 + $0x18] sm:$0xff]
        %4277 = vset.pattern.permute.xlu0 0
        %4278 = vperm.xlu0 %4277, %v4272
        %v4279 = vpop.permute.xlu0 %4278
        %4282 = vset.pattern.permute.xlu0 0
        %4283 = vperm.xlu0 %4282, %v4273
        %v4284 = vpop.permute.xlu0 %4283
        %4287 = vset.pattern.permute.xlu0 0
        %4288 = vperm.xlu0 %4287, %v4274
        %v4289 = vpop.permute.xlu0 %4288
        %4292 = vset.pattern.permute.xlu0 0
        %4293 = vperm.xlu0 %4292, %v4275
        %v4294 = vpop.permute.xlu0 %4293
        %v4296 = vmul.f32 %v4264, %v4279
        %v4297 = vmul.f32 %v4265, %v4279
        %v4298 = vmul.f32 %v4266, %v4284
        %v4299 = vmul.f32 %v4267, %v4284
        %v4300 = vmul.f32 %v4268, %v4289
        %v4301 = vmul.f32 %v4269, %v4289
        %v4302 = vmul.f32 %v4270, %v4294
        %v4303 = vmul.f32 %v4271, %v4294
        %v4304 = vld [vmem:[%s5] sm:$0xff]
        %v4305 = vld [vmem:[%s5 + $0x8] sm:$0xff]
        %v4306 = vld [vmem:[%s5 + $0x10] sm:$0xff]
        %v4307 = vld [vmem:[%s5 + $0x18] sm:$0xff]
        %4309 = vset.pattern.permute.xlu0 0
        %4310 = vperm.xlu0 %4309, %v4304
        %v4311 = vpop.permute.xlu0 %4310
        %4314 = vset.pattern.permute.xlu0 0
        %4315 = vperm.xlu0 %4314, %v4305
        %v4316 = vpop.permute.xlu0 %4315
        %4319 = vset.pattern.permute.xlu0 0
        %4320 = vperm.xlu0 %4319, %v4306
        %v4321 = vpop.permute.xlu0 %4320
        %4324 = vset.pattern.permute.xlu0 0
        %4325 = vperm.xlu0 %4324, %v4307
        %v4326 = vpop.permute.xlu0 %4325
        %v4328 = vadd.f32 %v4296, %v4311
        %v4329 = vadd.f32 %v4297, %v4311
        %v4330 = vadd.f32 %v4298, %v4316
        %v4331 = vadd.f32 %v4299, %v4316
        %v4332 = vadd.f32 %v4300, %v4321
        %v4333 = vadd.f32 %v4301, %v4321
        %v4334 = vadd.f32 %v4302, %v4326
        %v4335 = vadd.f32 %v4303, %v4326
        %v4336 = vld [vmem:[%s6] sm:$0xff]
        %v4337 = vld [vmem:[%s6 + $0x8] sm:$0xff]
        %v4338 = vld [vmem:[%s7] sm:$0xff]
        %v4339 = vld [vmem:[%s7 + $0x8] sm:$0xff]
        %4341 = vset.pattern.permute.xlu0 0
        %4342 = vperm.xlu0 %4341, %v4338
        %v4343 = vpop.permute.xlu0 %4342
        %4346 = vset.pattern.permute.xlu0 0
        %4347 = vperm.xlu0 %4346, %v4339
        %v4348 = vpop.permute.xlu0 %4347
        %vm4350 = vcmask 261120
        %v4352 = vsel %vm4350, %v4336, 0
        %v4355 = vsel %vm4350, %v4337, 0
        %4357 = vmatprep.subr.mxu0 %v4329
        %4358 = vmatpush1.msra.mxu0 %v4328
        %4359 = vmatprep.subr.mxu0 %v4331
        %4360 = vmatpush1.msra.mxu0 %v4330
        %4361 = vmatprep.subr.mxu0 %v4333
        %4362 = vmatpush1.msra.mxu0 %v4332
        %4363 = vmatprep.subr.mxu0 %v4335
        %4364 = vmatpush1.msra.mxu0 %v4334
        %4365 = vmatprep.subr.mxu0 0.0
        %4366 = vmatpush1.msra.mxu0 0.0
        %4367 = vmatprep.subr.mxu0 0.0
        %4368 = vmatpush1.msra.mxu0 0.0
        %4369 = vmatprep.subr.mxu0 0.0
        %4370 = vmatpush1.msra.mxu0 0.0
        %4371 = vmatprep.subr.mxu0 0.0
        %4372 = vmatpush1.msra.mxu0 0.0
        %4373 = vmatprep.subr.mxu0 0.0
        %4374 = vmatpush1.msra.mxu0 0.0
        %4375 = vmatprep.subr.mxu0 0.0
        %4376 = vmatpush1.msra.mxu0 0.0
        %4377 = vmatprep.subr.mxu0 0.0
        %4378 = vmatpush1.msra.mxu0 0.0
        %4379 = vmatprep.subr.mxu0 0.0
        %4380 = vmatpush1.msra.mxu0 0.0
        %4381 = vmatprep.subr.mxu0 0.0
        %4382 = vmatpush1.msra.mxu0 0.0
        %4383 = vmatprep.subr.mxu0 0.0
        %4384 = vmatpush1.msra.mxu0 0.0
        %4385 = vmatprep.subr.mxu0 0.0
        %4386 = vmatpush1.msra.mxu0 0.0
        %4387 = vmatprep.subr.mxu0 0.0
        %4388 = vmatpush1.msra.mxu0 0.0
        %4389 = vmatprep.subr.mxu0 0.0
        %4390 = vmatpush1.msra.mxu0 0.0
        %4391 = vmatprep.subr.mxu0 0.0
        %4392 = vmatpush1.msra.mxu0 0.0
        %4393 = vmatprep.subr.mxu0 0.0
        %4394 = vmatpush1.msra.mxu0 0.0
        %4395 = vmatprep.subr.mxu0 0.0
        %4396 = vmatpush1.msra.mxu0 0.0
        %4397 = vmatprep.subr.mxu0 0.0
        %4398 = vmatpush1.msra.mxu0 0.0
        %4399 = vmatprep.subr.mxu0 0.0
        %4400 = vmatpush1.msra.mxu0 0.0
        %4401 = vmatprep.subr.mxu0 0.0
        %4402 = vmatpush1.msra.mxu0 0.0
        %4403 = vmatprep.subr.mxu0 0.0
        %4404 = vmatpush1.msra.mxu0 0.0
        %4405 = vmatprep.subr.mxu0 0.0
        %4406 = vmatpush1.msra.mxu0 0.0
        %4407 = vmatprep.subr.mxu0 0.0
        %4408 = vmatpush1.msra.mxu0 0.0
        %4409 = vmatprep.subr.mxu0 0.0
        %4410 = vmatpush1.msra.mxu0 0.0
        %4411 = vmatprep.subr.mxu0 0.0
        %4412 = vmatpush1.msra.mxu0 0.0
        %4413 = vmatprep.subr.mxu0 0.0
        %4414 = vmatpush1.msra.mxu0 0.0
        %4415 = vmatprep.subr.mxu0 0.0
        %4416 = vmatpush1.msra.mxu0 0.0
        %4417 = vmatprep.subr.mxu0 0.0
        %4418 = vmatpush1.msra.mxu0 0.0
        %4419 = vmatprep.subr.mxu0 0.0
        %4420 = vmatpush1.msra.mxu0 0.0
        %4421 = vmatprep.mubr.f32.mxu0 0.0
        %4422 = vmatmul.mubr.f32.gmra.mrb[0].mxu0 %v4352
        %v4423 = vpop.f32.mrb[0].mxu0
        %v4424 = vadd.f32 %v4343, %v4423
        %v4425 = vpop.f32.mrb[0].mxu0
        %v4426 = vadd.f32 %v4343, %v4425
        %4427 = vmatprep.mubr.f32.mxu0 0.0
        %4428 = vmatmul.mubr.f32.gmra.mrb[0].mxu0 %v4355
        %v4429 = vpop.f32.mrb[0].mxu0
        %v4430 = vadd.f32 %v4348, %v4429
        %v4431 = vpop.f32.mrb[0].mxu0
        %v4432 = vadd.f32 %v4348, %v4431
        %4433 = vdwg.mxu0
        %v4434 = vmul.f32 %v4424, 0.5
        %v4435 = vmul.f32 %v4426, 0.5
        %v4436 = vmul.f32 %v4430, 0.5
        %v4437 = vmul.f32 %v4432, 0.5
        %v4438 = vmul.f32 %v4424, 0.70710677
        %v4439 = vmul.f32 %v4426, 0.70710677
        %v4440 = vmul.f32 %v4430, 0.70710677
        %v4441 = vmul.f32 %v4432, 0.70710677
        %v4442 = verf.f32.pop %v4438
        %v4443 = verf.f32.pop %v4439
        %v4444 = verf.f32.pop %v4440
        %v4445 = verf.f32.pop %v4441
        %v4446 = vadd.f32 %v4442, 1.0
        %v4447 = vadd.f32 %v4443, 1.0
        %v4448 = vadd.f32 %v4444, 1.0
        %v4449 = vadd.f32 %v4445, 1.0
        %v4450 = vmul.f32 %v4434, %v4446
        %v4451 = vmul.f32 %v4435, %v4447
        %v4452 = vmul.f32 %v4436, %v4448
        %v4453 = vmul.f32 %v4437, %v4449
        %v4454 = vld [vmem:[%s8] sm:$0xff]
        %v4455 = vld [vmem:[%s8 + $0x8] sm:$0xff]
        %v4456 = vld [vmem:[%s8 + $0x10] sm:$0xff]
        %v4457 = vld [vmem:[%s8 + $0x18] sm:$0xff]
        %v4458 = vld [vmem:[%s9] sm:$0xff]
        %v4459 = vld [vmem:[%s9 + $0x8] sm:$0xff]
        %v4460 = vld [vmem:[%s9 + $0x10] sm:$0xff]
        %v4461 = vld [vmem:[%s9 + $0x18] sm:$0xff]
        %4463 = vset.pattern.permute.xlu0 0
        %4464 = vperm.xlu0 %4463, %v4458
        %v4465 = vpop.permute.xlu0 %4464
        %4468 = vset.pattern.permute.xlu0 0
        %4469 = vperm.xlu0 %4468, %v4459
        %v4470 = vpop.permute.xlu0 %4469
        %4473 = vset.pattern.permute.xlu0 0
        %4474 = vperm.xlu0 %4473, %v4460
        %v4475 = vpop.permute.xlu0 %4474
        %4478 = vset.pattern.permute.xlu0 0
        %4479 = vperm.xlu0 %4478, %v4461
        %v4480 = vpop.permute.xlu0 %4479
        %vm4482 = vcmask 130048
        %v4484 = vsel %vm4482, %v4454, 0
        %v4487 = vsel %vm4482, %v4455, 0
        %v4490 = vsel %vm4482, %v4456, 0
        %v4493 = vsel %vm4482, %v4457, 0
        %4495 = vmatprep.subr.mxu0 %v4451
        %4496 = vmatpush1.msra.mxu0 %v4450
        %4497 = vmatprep.subr.mxu0 %v4453
        %4498 = vmatpush1.msra.mxu0 %v4452
        %4499 = vmatprep.subr.mxu0 0.0
        %4500 = vmatpush1.msra.mxu0 0.0
        %4501 = vmatprep.subr.mxu0 0.0
        %4502 = vmatpush1.msra.mxu0 0.0
        %4503 = vmatprep.subr.mxu0 0.0
        %4504 = vmatpush1.msra.mxu0 0.0
        %4505 = vmatprep.subr.mxu0 0.0
        %4506 = vmatpush1.msra.mxu0 0.0
        %4507 = vmatprep.subr.mxu0 0.0
        %4508 = vmatpush1.msra.mxu0 0.0
        %4509 = vmatprep.subr.mxu0 0.0
        %4510 = vmatpush1.msra.mxu0 0.0
        %4511 = vmatprep.subr.mxu0 0.0
        %4512 = vmatpush1.msra.mxu0 0.0
        %4513 = vmatprep.subr.mxu0 0.0
        %4514 = vmatpush1.msra.mxu0 0.0
        %4515 = vmatprep.subr.mxu0 0.0
        %4516 = vmatpush1.msra.mxu0 0.0
        %4517 = vmatprep.subr.mxu0 0.0
        %4518 = vmatpush1.msra.mxu0 0.0
        %4519 = vmatprep.subr.mxu0 0.0
        %4520 = vmatpush1.msra.mxu0 0.0
        %4521 = vmatprep.subr.mxu0 0.0
        %4522 = vmatpush1.msra.mxu0 0.0
        %4523 = vmatprep.subr.mxu0 0.0
        %4524 = vmatpush1.msra.mxu0 0.0
        %4525 = vmatprep.subr.mxu0 0.0
        %4526 = vmatpush1.msra.mxu0 0.0
        %4527 = vmatprep.subr.mxu0 0.0
        %4528 = vmatpush1.msra.mxu0 0.0
        %4529 = vmatprep.subr.mxu0 0.0
        %4530 = vmatpush1.msra.mxu0 0.0
        %4531 = vmatprep.subr.mxu0 0.0
        %4532 = vmatpush1.msra.mxu0 0.0
        %4533 = vmatprep.subr.mxu0 0.0
        %4534 = vmatpush1.msra.mxu0 0.0
        %4535 = vmatprep.subr.mxu0 0.0
        %4536 = vmatpush1.msra.mxu0 0.0
        %4537 = vmatprep.subr.mxu0 0.0
        %4538 = vmatpush1.msra.mxu0 0.0
        %4539 = vmatprep.subr.mxu0 0.0
        %4540 = vmatpush1.msra.mxu0 0.0
        %4541 = vmatprep.subr.mxu0 0.0
        %4542 = vmatpush1.msra.mxu0 0.0
        %4543 = vmatprep.subr.mxu0 0.0
        %4544 = vmatpush1.msra.mxu0 0.0
        %4545 = vmatprep.subr.mxu0 0.0
        %4546 = vmatpush1.msra.mxu0 0.0
        %4547 = vmatprep.subr.mxu0 0.0
        %4548 = vmatpush1.msra.mxu0 0.0
        %4549 = vmatprep.subr.mxu0 0.0
        %4550 = vmatpush1.msra.mxu0 0.0
        %4551 = vmatprep.subr.mxu0 0.0
        %4552 = vmatpush1.msra.mxu0 0.0
        %4553 = vmatprep.subr.mxu0 0.0
        %4554 = vmatpush1.msra.mxu0 0.0
        %4555 = vmatprep.subr.mxu0 0.0
        %4556 = vmatpush1.msra.mxu0 0.0
        %4557 = vmatprep.subr.mxu0 0.0
        %4558 = vmatpush1.msra.mxu0 0.0
        %4559 = vmatprep.mubr.f32.mxu0 0.0
        %4560 = vmatmul.mubr.f32.gmra.mrb[0].mxu0 %v4484
        %v4561 = vpop.f32.mrb[0].mxu0
        %v4562 = vadd.f32 %v4465, %v4561
        %v4563 = vpop.f32.mrb[0].mxu0
        %v4564 = vadd.f32 %v4465, %v4563
        %4565 = vmatprep.mubr.f32.mxu0 0.0
        %4566 = vmatmul.mubr.f32.gmra.mrb[0].mxu0 %v4487
        %v4567 = vpop.f32.mrb[0].mxu0
        %v4568 = vadd.f32 %v4470, %v4567
        %v4569 = vpop.f32.mrb[0].mxu0
        %v4570 = vadd.f32 %v4470, %v4569
        %4571 = vmatprep.mubr.f32.mxu0 0.0
        %4572 = vmatmul.mubr.f32.gmra.mrb[0].mxu0 %v4490
        %v4573 = vpop.f32.mrb[0].mxu0
        %v4574 = vadd.f32 %v4475, %v4573
        %v4575 = vpop.f32.mrb[0].mxu0
        %v4576 = vadd.f32 %v4475, %v4575
        %4577 = vmatprep.mubr.f32.mxu0 0.0
        %4578 = vmatmul.mubr.f32.gmra.mrb[0].mxu0 %v4493
        %v4579 = vpop.f32.mrb[0].mxu0
        %v4580 = vadd.f32 %v4480, %v4579
        %v4581 = vpop.f32.mrb[0].mxu0
        %v4582 = vadd.f32 %v4480, %v4581
        %4583 = vdwg.mxu0
        %4584 = vst [vmem:[%s367] sm:$0xff] %v4562
        %4585 = vst [vmem:[%s367 + $0x8] sm:$0xff] %v4564
        %4586 = vst [vmem:[%s367 + $0x10] sm:$0xff] %v4568
        %4587 = vst [vmem:[%s367 + $0x18] sm:$0xff] %v4570
        %4588 = vst [vmem:[%s367 + $0x20] sm:$0xff] %v4574
        %4589 = vst [vmem:[%s367 + $0x28] sm:$0xff] %v4576
        %4590 = vst [vmem:[%s367 + $0x30] sm:$0xff] %v4580
        %4591 = vst [vmem:[%s367 + $0x38] sm:$0xff] %v4582
        %s4592 = sand.u32 %s248, 1
        %s4593 = scalar_lea.sflag [#allocation4], %s4592
        %s4594 = sand.u32 %s248, 1
        %s4595 = smul.addr %s4594, 64
        %s4596 = scalar_lea.vmem [#allocation5], %s4595
        // Predicated region
        $region65: #{tpu_custom_call.1} parent=59 // pred_check
          %p4597 = pneg %p258
        $region66: #{tpu_custom_call.1} parent=59 // pred_check_branch
          %4599 = sbr.rel (%p4597) target = $region68
        $region67: #{tpu_custom_call.1} parent=59 // pred_region
          %s4601 = ssub.s32 1024, 1024
          %4602 = vsyncadd %s4593, %s4601
          %s4603 = smul.addr %s25, 8
          %s4604 = smul.addr %s4603, 128
          %s4605 = scalar_lea.hbm %s10, %s4604
          %s4606 = sshll.u32 %s4596, 4
          %s4607 = int_to_ptr.vmem [resolvable:$true] %s4606
          %4612 = dma.vmem_to_hbm [thread:$0]  %s4607, 1024, %s4605, %s4593, 256, 256, 16
        $region68: #{tpu_custom_call.1} parent=59 // pred_fallthru
          _
      $region60: #{tpu_custom_call.1} parent=5 // pred_fallthru
        _
      %p4613 = scmp.le.s32.totalorder 2, %s20
      // Predicated region
      $region69: #{tpu_custom_call.1} parent=5 // pred_check
        %p4614 = pneg %p4613
      $region70: #{tpu_custom_call.1} parent=5 // pred_check_branch
        %4616 = sbr.rel (%p4614) target = $region72
      $region71: #{tpu_custom_call.1} parent=5 // pred_region
        %s4617 = ssub.s32 %s20, 2
        // Predicated region
        $region73: #{tpu_custom_call.1} parent=71 // pred_check
          %p4618 = pneg %p264
        $region74: #{tpu_custom_call.1} parent=71 // pred_check_branch
          %4620 = sbr.rel (%p4618) target = $region76
        $region75: #{tpu_custom_call.1} parent=71 // pred_region
          %s4621 = sand.u32 %s249, 1
          %s4622 = scalar_lea.sflag [#allocation4], %s4621
          %s4623 = sand.u32 %s249, 1
          %s4624 = smul.addr %s4623, 64
          %s4625 = scalar_lea.vmem [#allocation5], %s4624
          %4626 = dma.done %s4622, 1024
        $region76: #{tpu_custom_call.1} parent=71 // pred_fallthru
          _
      $region72: #{tpu_custom_call.1} parent=5 // pred_fallthru
        _
    $region6: #{tpu_custom_call.1} parent=1 // loop_footer
      %s24 = sadd.s32 1, %s20
    $region7: #{tpu_custom_call.1} parent=1 // loop_footer_branch
      %19 = sbr.rel target = $region3
    $region8: #{tpu_custom_call.1} parent=1 // loop_exit
      _
    %4627 = vsyncpa [#allocation3], 1
    %s4628 = scalar_lea.sflag [#allocation3], 1
    %4629 = vsyncpa %s4628, 1
    %4630 = vsyncpa [#allocation4], 1
    %s4631 = scalar_lea.sflag [#allocation4], 1
    %4632 = vsyncpa %s4631, 1

</llo_original>
